<compile_context>
chip_gen: v7x
topology: tpu7x:2x2x1
jax: 0.10.0
libtpu: 0.0.40
codegen_flags: <defaults>
</compile_context>

<pallas_src>
import jax
import jax.numpy as jnp
from jax.experimental import pallas as pl
from jax.experimental.pallas import tpu as pltpu

NOISE_DIM = 100
NOISE_PAD = 128          # 100 -> 128 (lane-aligned K for fc1)
HIDDEN = 1024
OUT_FLAT = 28 * 28       # 784 (kernel writes this width directly)

_TB_TARGET = 512         # batch-tile target (per review: halves/quarters step overhead)
_ALIGN = 16              # row alignment (safe for bf16 sublane packing)


def _cdiv(a, b):
    return (a + b - 1) // b


def _round_up(x, m):
    return _cdiv(x, m) * m


def _plan_batch(B):
    """Pick (TB, Bp) minimizing padding while keeping >=2 grid steps when possible."""
    b_aligned = _round_up(B, _ALIGN)
    # >=2 steps so v7x's second TensorCore has work (unless the batch is tiny).
    min_steps = 2 if b_aligned >= 2 * _ALIGN else 1
    steps = max(_cdiv(b_aligned, _TB_TARGET), min_steps)
    TB = _round_up(_cdiv(b_aligned, steps), _ALIGN)
    steps = _cdiv(b_aligned, TB)
    Bp = steps * TB
    return TB, Bp


def _generator_kernel(noise_ref, w1_ref, b1_ref, w2_ref, b2_ref, w3_ref, b3_ref,
                      out_ref):
    # One batch tile per grid step; all three matmuls + activations fused.
    x = noise_ref[...]                                                   # (TB, 128) bf16

    h1 = jnp.dot(x, w1_ref[...], preferred_element_type=jnp.float32)     # (TB, 1024) f32
    h1 = jnp.maximum(h1 + b1_ref[...], 0.0)                              # ReLU (f32)

    h2 = jnp.dot(h1.astype(jnp.bfloat16), w2_ref[...],
                 preferred_element_type=jnp.float32)                     # (TB, 1024) f32
    h2 = jnp.maximum(h2 + b2_ref[...], 0.0)                              # ReLU (f32)

    h3 = jnp.dot(h2.astype(jnp.bfloat16), w3_ref[...],
                 preferred_element_type=jnp.float32)                     # (TB, 784) f32
    out_ref[...] = jnp.tanh(h3 + b3_ref[...])                            # tanh (f32)


def generator_forward(noise, params):
    """noise: (B, 100) f32 (or bf16).  Returns (B, 1, 28, 28) f32."""
    w1, b1, w2, b2, w3, b3 = params        # bf16 weights (in,out); f32 biases (1,out)
    B = noise.shape[0]

    TB, Bp = _plan_batch(B)
    grid = (Bp // TB,)

    # Cast to bf16 and zero-pad: batch -> Bp, features 100 -> 128.
    noise_p = jnp.pad(noise.astype(jnp.bfloat16),
                      ((0, Bp - B), (0, NOISE_PAD - NOISE_DIM)))

    # Constant-index residents: single-buffered, stay in VMEM across the grid.
    def resident(arr):
        return pl.BlockSpec(arr.shape, lambda i: (0, 0),
                            pipeline_mode=pl.Buffered(1))

    out_flat = pl.pallas_call(
        _generator_kernel,
        out_shape=jax.ShapeDtypeStruct((Bp, OUT_FLAT), jnp.float32),
        grid=grid,
        in_specs=[
            pl.BlockSpec((TB, NOISE_PAD), lambda i: (i, 0)),   # noise: batch-tiled
            resident(w1), resident(b1),
            resident(w2), resident(b2),
            resident(w3), resident(b3),
        ],
        out_specs=pl.BlockSpec((TB, OUT_FLAT), lambda i: (i, 0)),
        compiler_params=pltpu.CompilerParams(
            dimension_semantics=("parallel",),
            vmem_limit_bytes=32 << 20,
        ),
    )(noise_p, w1, b1, w2, b2, w3, b3)

    if Bp != B:
        out_flat = out_flat[:B]
    return out_flat.reshape(B, 1, 28, 28)


def init_params(key):
    """nn.Linear-style init (U(-1/sqrt(fan_in), +bound)).  Weights are stored
    pre-transposed as (in, out), K-padded where needed, cast to bf16; biases f32."""
    ks = jax.random.split(key, 6)

    def linear(kw, kb, fan_in, fan_out, pad_in=0):
        bound = 1.0 / jnp.sqrt(jnp.float32(fan_in))
        w = jax.random.uniform(kw, (fan_in, fan_out), jnp.float32, -bound, bound)
        b = jax.random.uniform(kb, (1, fan_out), jnp.float32, -bound, bound)
        w = jnp.pad(w, ((0, pad_in), (0, 0)))
        return w.astype(jnp.bfloat16), b

    w1, b1 = linear(ks[0], ks[1], NOISE_DIM, HIDDEN, pad_in=NOISE_PAD - NOISE_DIM)
    w2, b2 = linear(ks[2], ks[3], HIDDEN, HIDDEN)
    w3, b3 = linear(ks[4], ks[5], HIDDEN, OUT_FLAT)
    return (w1, b1, w2, b2, w3, b3)


if __name__ == "__main__":
    key = jax.random.PRNGKey(0)
    pkey, nkey = jax.random.split(key)

    params = init_params(pkey)
    B = 2
    noise = jax.random.normal(nkey, (B, NOISE_DIM), jnp.float32)

    out = generator_forward(noise, params)
    out = jax.block_until_ready(out)

    # Pure-JAX reference mirroring the kernel's bf16-weight/bf16-activation math.
    w1, b1, w2, b2, w3, b3 = params
    nb = noise.astype(jnp.bfloat16)
    h1 = jnp.maximum(
        jnp.dot(nb, w1[:NOISE_DIM], preferred_element_type=jnp.float32) + b1, 0.0)
    h2 = jnp.maximum(
        jnp.dot(h1.astype(jnp.bfloat16), w2,
                preferred_element_type=jnp.float32) + b2, 0.0)
    h3 = jnp.dot(h2.astype(jnp.bfloat16), w3,
                 preferred_element_type=jnp.float32) + b3
    ref = jnp.tanh(h3).reshape(B, 1, 28, 28)

    assert out.shape == (B, 1, 28, 28)
    assert jnp.allclose(out, ref, atol=2e-2), "mismatch vs reference"

    print("KERNEL_OK")
</pallas_src>

<mosaic_0001>
module attributes {stable_mosaic.version = 11 : i64} {
  func.func @_generator_kernel(%arg0: i32, %arg1: memref<16x128xbf16, #tpu.memory_space<vmem>>, %arg2: memref<128x1024xbf16, #tpu.memory_space<vmem>>, %arg3: memref<1x1024xf32, #tpu.memory_space<vmem>>, %arg4: memref<1024x1024xbf16, #tpu.memory_space<vmem>>, %arg5: memref<1x1024xf32, #tpu.memory_space<vmem>>, %arg6: memref<1024x784xbf16, #tpu.memory_space<vmem>>, %arg7: memref<1x784xf32, #tpu.memory_space<vmem>>, %arg8: memref<16x784xf32, #tpu.memory_space<vmem>>) attributes {dimension_semantics = [#tpu.dimension_semantics<parallel>], iteration_bounds = array<i64: 1>, scalar_prefetch = 0 : i64, scratch_operands = 0 : i64, tpu.core_type = #tpu.core_type<tc>, window_params = [{transform_indices = @transform_0, window_bounds = array<i64: 16, 128>}, {pipeline_mode = #tpu.pipeline_mode<synchronous>, transform_indices = @transform_1, window_bounds = array<i64: 128, 1024>}, {pipeline_mode = #tpu.pipeline_mode<synchronous>, transform_indices = @transform_2, window_bounds = array<i64: 1, 1024>}, {pipeline_mode = #tpu.pipeline_mode<synchronous>, transform_indices = @transform_3, window_bounds = array<i64: 1024, 1024>}, {pipeline_mode = #tpu.pipeline_mode<synchronous>, transform_indices = @transform_4, window_bounds = array<i64: 1, 1024>}, {pipeline_mode = #tpu.pipeline_mode<synchronous>, transform_indices = @transform_5, window_bounds = array<i64: 1024, 784>}, {pipeline_mode = #tpu.pipeline_mode<synchronous>, transform_indices = @transform_6, window_bounds = array<i64: 1, 784>}, {transform_indices = @transform_7, window_bounds = array<i64: 16, 784>}]} {
    %c0 = arith.constant 0 : index
    %c0_0 = arith.constant 0 : index
    %0 = vector.load %arg1[%c0, %c0_0] : memref<16x128xbf16, #tpu.memory_space<vmem>>, vector<16x128xbf16>
    %c0_1 = arith.constant 0 : index
    %c0_2 = arith.constant 0 : index
    %1 = vector.load %arg2[%c0_1, %c0_2] : memref<128x1024xbf16, #tpu.memory_space<vmem>>, vector<128x1024xbf16>
    %cst = arith.constant dense<0.000000e+00> : vector<16x1024xf32>
    %2 = tpu.matmul %0, %1, %cst {dimension_numbers = #tpu.dot_dimension_numbers<[1], [0], [0], [1], [0, 0, 1, 1], [], []>} : vector<16x128xbf16>, vector<128x1024xbf16>, vector<16x1024xf32> -> vector<16x1024xf32>
    %c0_3 = arith.constant 0 : index
    %c0_4 = arith.constant 0 : index
    %3 = vector.load %arg3[%c0_3, %c0_4] : memref<1x1024xf32, #tpu.memory_space<vmem>>, vector<1x1024xf32>
    %4 = vector.broadcast %3 : vector<1x1024xf32> to vector<16x1024xf32>
    %5 = arith.addf %2, %4 : vector<16x1024xf32>
    %cst_5 = arith.constant 0.000000e+00 : f32
    %6 = vector.broadcast %cst_5 : f32 to vector<16x1024xf32>
    %7 = arith.maximumf %5, %6 : vector<16x1024xf32>
    %8 = arith.truncf %7 : vector<16x1024xf32> to vector<16x1024xbf16>
    %c0_6 = arith.constant 0 : index
    %c0_7 = arith.constant 0 : index
    %9 = vector.load %arg4[%c0_6, %c0_7] : memref<1024x1024xbf16, #tpu.memory_space<vmem>>, vector<1024x1024xbf16>
    %cst_8 = arith.constant dense<0.000000e+00> : vector<16x1024xf32>
    %10 = tpu.matmul %8, %9, %cst_8 {dimension_numbers = #tpu.dot_dimension_numbers<[1], [0], [0], [1], [0, 0, 1, 1], [], []>} : vector<16x1024xbf16>, vector<1024x1024xbf16>, vector<16x1024xf32> -> vector<16x1024xf32>
    %c0_9 = arith.constant 0 : index
    %c0_10 = arith.constant 0 : index
    %11 = vector.load %arg5[%c0_9, %c0_10] : memref<1x1024xf32, #tpu.memory_space<vmem>>, vector<1x1024xf32>
    %12 = vector.broadcast %11 : vector<1x1024xf32> to vector<16x1024xf32>
    %13 = arith.addf %10, %12 : vector<16x1024xf32>
    %cst_11 = arith.constant 0.000000e+00 : f32
    %14 = vector.broadcast %cst_11 : f32 to vector<16x1024xf32>
    %15 = arith.maximumf %13, %14 : vector<16x1024xf32>
    %16 = arith.truncf %15 : vector<16x1024xf32> to vector<16x1024xbf16>
    %c0_12 = arith.constant 0 : index
    %c0_13 = arith.constant 0 : index
    %17 = vector.load %arg6[%c0_12, %c0_13] : memref<1024x784xbf16, #tpu.memory_space<vmem>>, vector<1024x784xbf16>
    %cst_14 = arith.constant dense<0.000000e+00> : vector<16x784xf32>
    %18 = tpu.matmul %16, %17, %cst_14 {dimension_numbers = #tpu.dot_dimension_numbers<[1], [0], [0], [1], [0, 0, 1, 1], [], []>} : vector<16x1024xbf16>, vector<1024x784xbf16>, vector<16x784xf32> -> vector<16x784xf32>
    %c0_15 = arith.constant 0 : index
    %c0_16 = arith.constant 0 : index
    %19 = vector.load %arg7[%c0_15, %c0_16] : memref<1x784xf32, #tpu.memory_space<vmem>>, vector<1x784xf32>
    %20 = vector.broadcast %19 : vector<1x784xf32> to vector<16x784xf32>
    %21 = arith.addf %18, %20 : vector<16x784xf32>
    %22 = math.tanh %21 : vector<16x784xf32>
    %c0_17 = arith.constant 0 : index
    %c0_18 = arith.constant 0 : index
    %23 = vector.load %arg8[%c0_17, %c0_18] : memref<16x784xf32, #tpu.memory_space<vmem>>, vector<16x784xf32>
    tpu.vector_store %arg8[%c0_17, %c0_18], %22 {strides = array<i32>} : memref<16x784xf32, #tpu.memory_space<vmem>>, vector<16x784xf32>,
    return
  }
  func.func @transform_0(%arg0: i32) -> (i32, i32) {
    %c0_i32 = arith.constant 0 : i32
    %c0_i32_0 = arith.constant 0 : i32
    return %arg0, %c0_i32 : i32, i32
  }
  func.func @transform_1(%arg0: i32) -> (i32, i32) {
    %c0_i32 = arith.constant 0 : i32
    %c0_i32_0 = arith.constant 0 : i32
    %c0_i32_1 = arith.constant 0 : i32
    return %c0_i32, %c0_i32_0 : i32, i32
  }
  func.func @transform_2(%arg0: i32) -> (i32, i32) {
    %c0_i32 = arith.constant 0 : i32
    %c0_i32_0 = arith.constant 0 : i32
    %c0_i32_1 = arith.constant 0 : i32
    return %c0_i32, %c0_i32_0 : i32, i32
  }
  func.func @transform_3(%arg0: i32) -> (i32, i32) {
    %c0_i32 = arith.constant 0 : i32
    %c0_i32_0 = arith.constant 0 : i32
    %c0_i32_1 = arith.constant 0 : i32
    return %c0_i32, %c0_i32_0 : i32, i32
  }
  func.func @transform_4(%arg0: i32) -> (i32, i32) {
    %c0_i32 = arith.constant 0 : i32
    %c0_i32_0 = arith.constant 0 : i32
    %c0_i32_1 = arith.constant 0 : i32
    return %c0_i32, %c0_i32_0 : i32, i32
  }
  func.func @transform_5(%arg0: i32) -> (i32, i32) {
    %c0_i32 = arith.constant 0 : i32
    %c0_i32_0 = arith.constant 0 : i32
    %c0_i32_1 = arith.constant 0 : i32
    return %c0_i32, %c0_i32_0 : i32, i32
  }
  func.func @transform_6(%arg0: i32) -> (i32, i32) {
    %c0_i32 = arith.constant 0 : i32
    %c0_i32_0 = arith.constant 0 : i32
    %c0_i32_1 = arith.constant 0 : i32
    return %c0_i32, %c0_i32_0 : i32, i32
  }
  func.func @transform_7(%arg0: i32) -> (i32, i32) {
    %c0_i32 = arith.constant 0 : i32
    %c0_i32_0 = arith.constant 0 : i32
    return %arg0, %c0_i32 : i32, i32
  }
}

</mosaic_0001>

<llo_original>
// kernel: tpu_custom_call.1
$region0: #{tpu_custom_call.1}
  #allocation0 [shape = 'u32[]', space=smem, size = 0x4, offset = 0x4, fixed_abs, tag = 'smem constant byte address 0x4 - core index']
  #allocation1 [shape = 'u32[144,128]{1,0:T(1,128)}', space=vmem, size = 0x12000, scoped, tag = 'internal scratch']
  %s0 = inlined_call_operand.vmem [shape: bf16[16,128], index: 0, kind: input, shape index: {}]
  %s1 = inlined_call_operand.vmem [shape: bf16[128,1024], index: 1, kind: input, shape index: {}]
  %s2 = inlined_call_operand.vmem [shape: f32[1,1024], index: 2, kind: input, shape index: {}]
  %s3 = inlined_call_operand.vmem [shape: bf16[1024,1024], index: 3, kind: input, shape index: {}]
  %s4 = inlined_call_operand.vmem [shape: f32[1,1024], index: 4, kind: input, shape index: {}]
  %s5 = inlined_call_operand.vmem [shape: bf16[1024,784], index: 5, kind: input, shape index: {}]
  %s6 = inlined_call_operand.vmem [shape: f32[1,784], index: 6, kind: input, shape index: {}]
  %s7 = inlined_call_operand.hbm [shape: f32[16,784], index: 7, kind: output, shape index: {}]
  %s8 = sld [smem:[#allocation0]]
  $region38: #{tpu_custom_call.1} parent=0
    _
  %s10 = ssub.s32 1, %s8
  %s11 = scalar_select 0, %s10, %s8
  $region1: #{tpu_custom_call.1} parent=0
    #allocation2 [shape = 'u8[57344]{0}', space=vmem, size = 0xe000, scoped, tag = 'output window, operand 0, single buffered']
    #allocation3 [shape = 's32[1]{0}', space=sflag, size = 0x4, scoped, tag = 'scoped memory for tpu_custom_call.1']
    %12 = vsyncpa [#allocation3], 0
    // Predicated region
    $region2: #{tpu_custom_call.1} parent=1 // pred_check
      _
    $region3: #{tpu_custom_call.1} parent=1 // pred_check_branch
      %14 = sbr.rel (0) target = $region5
    $region4: #{tpu_custom_call.1} parent=1 // pred_region
      _
    $region5: #{tpu_custom_call.1} parent=1 // pred_fallthru
      _
    // Predicated region
    $region6: #{tpu_custom_call.1} parent=1 // pred_check
      _
    $region7: #{tpu_custom_call.1} parent=1 // pred_check_branch
      %16 = sbr.rel (0) target = $region9
    $region8: #{tpu_custom_call.1} parent=1 // pred_region
      _
    $region9: #{tpu_custom_call.1} parent=1 // pred_fallthru
      _
    // Predicated region
    $region10: #{tpu_custom_call.1} parent=1 // pred_check
      _
    $region11: #{tpu_custom_call.1} parent=1 // pred_check_branch
      %18 = sbr.rel (0) target = $region13
    $region12: #{tpu_custom_call.1} parent=1 // pred_region
      _
    $region13: #{tpu_custom_call.1} parent=1 // pred_fallthru
      _
    // Predicated region
    $region14: #{tpu_custom_call.1} parent=1 // pred_check
      _
    $region15: #{tpu_custom_call.1} parent=1 // pred_check_branch
      %20 = sbr.rel (0) target = $region17
    $region16: #{tpu_custom_call.1} parent=1 // pred_region
      _
    $region17: #{tpu_custom_call.1} parent=1 // pred_fallthru
      _
    // Predicated region
    $region18: #{tpu_custom_call.1} parent=1 // pred_check
      _
    $region19: #{tpu_custom_call.1} parent=1 // pred_check_branch
      %22 = sbr.rel (0) target = $region21
    $region20: #{tpu_custom_call.1} parent=1 // pred_region
      _
    $region21: #{tpu_custom_call.1} parent=1 // pred_fallthru
      _
    // Predicated region
    $region22: #{tpu_custom_call.1} parent=1 // pred_check
      _
    $region23: #{tpu_custom_call.1} parent=1 // pred_check_branch
      %24 = sbr.rel (0) target = $region25
    $region24: #{tpu_custom_call.1} parent=1 // pred_region
      _
    $region25: #{tpu_custom_call.1} parent=1 // pred_fallthru
      _
    // Predicated region
    $region26: #{tpu_custom_call.1} parent=1 // pred_check
      _
    $region27: #{tpu_custom_call.1} parent=1 // pred_check_branch
      %26 = sbr.rel (0) target = $region29
    $region28: #{tpu_custom_call.1} parent=1 // pred_region
      _
    $region29: #{tpu_custom_call.1} parent=1 // pred_fallthru
      _
    %v28 = vld [vmem:[%s0] sm:$0xf]
    %v29 = vld [vmem:[%s0 + $0x4] sm:$0xf]
    %v30 = vld [vmem:[%s1] sm:$0xff]
    %v31 = vld [vmem:[%s1 + $0x8] sm:$0xff]
    %v32 = vld [vmem:[%s1 + $0x10] sm:$0xff]
    %v33 = vld [vmem:[%s1 + $0x18] sm:$0xff]
    %v34 = vld [vmem:[%s1 + $0x20] sm:$0xff]
    %v35 = vld [vmem:[%s1 + $0x28] sm:$0xff]
    %v36 = vld [vmem:[%s1 + $0x30] sm:$0xff]
    %v37 = vld [vmem:[%s1 + $0x38] sm:$0xff]
    %v38 = vld [vmem:[%s1 + $0x40] sm:$0xff]
    %v39 = vld [vmem:[%s1 + $0x48] sm:$0xff]
    %v40 = vld [vmem:[%s1 + $0x50] sm:$0xff]
    %v41 = vld [vmem:[%s1 + $0x58] sm:$0xff]
    %v42 = vld [vmem:[%s1 + $0x60] sm:$0xff]
    %v43 = vld [vmem:[%s1 + $0x68] sm:$0xff]
    %v44 = vld [vmem:[%s1 + $0x70] sm:$0xff]
    %v45 = vld [vmem:[%s1 + $0x78] sm:$0xff]
    %v46 = vld [vmem:[%s1 + $0x80] sm:$0xff]
    %v47 = vld [vmem:[%s1 + $0x88] sm:$0xff]
    %v48 = vld [vmem:[%s1 + $0x90] sm:$0xff]
    %v49 = vld [vmem:[%s1 + $0x98] sm:$0xff]
    %v50 = vld [vmem:[%s1 + $0xa0] sm:$0xff]
    %v51 = vld [vmem:[%s1 + $0xa8] sm:$0xff]
    %v52 = vld [vmem:[%s1 + $0xb0] sm:$0xff]
    %v53 = vld [vmem:[%s1 + $0xb8] sm:$0xff]
    %v54 = vld [vmem:[%s1 + $0xc0] sm:$0xff]
    %v55 = vld [vmem:[%s1 + $0xc8] sm:$0xff]
    %v56 = vld [vmem:[%s1 + $0xd0] sm:$0xff]
    %v57 = vld [vmem:[%s1 + $0xd8] sm:$0xff]
    %v58 = vld [vmem:[%s1 + $0xe0] sm:$0xff]
    %v59 = vld [vmem:[%s1 + $0xe8] sm:$0xff]
    %v60 = vld [vmem:[%s1 + $0xf0] sm:$0xff]
    %v61 = vld [vmem:[%s1 + $0xf8] sm:$0xff]
    %v62 = vld [vmem:[%s1 + $0x100] sm:$0xff]
    %v63 = vld [vmem:[%s1 + $0x108] sm:$0xff]
    %v64 = vld [vmem:[%s1 + $0x110] sm:$0xff]
    %v65 = vld [vmem:[%s1 + $0x118] sm:$0xff]
    %v66 = vld [vmem:[%s1 + $0x120] sm:$0xff]
    %v67 = vld [vmem:[%s1 + $0x128] sm:$0xff]
    %v68 = vld [vmem:[%s1 + $0x130] sm:$0xff]
    %v69 = vld [vmem:[%s1 + $0x138] sm:$0xff]
    %v70 = vld [vmem:[%s1 + $0x140] sm:$0xff]
    %v71 = vld [vmem:[%s1 + $0x148] sm:$0xff]
    %v72 = vld [vmem:[%s1 + $0x150] sm:$0xff]
    %v73 = vld [vmem:[%s1 + $0x158] sm:$0xff]
    %v74 = vld [vmem:[%s1 + $0x160] sm:$0xff]
    %v75 = vld [vmem:[%s1 + $0x168] sm:$0xff]
    %v76 = vld [vmem:[%s1 + $0x170] sm:$0xff]
    %v77 = vld [vmem:[%s1 + $0x178] sm:$0xff]
    %v78 = vld [vmem:[%s1 + $0x180] sm:$0xff]
    %v79 = vld [vmem:[%s1 + $0x188] sm:$0xff]
    %v80 = vld [vmem:[%s1 + $0x190] sm:$0xff]
    %v81 = vld [vmem:[%s1 + $0x198] sm:$0xff]
    %v82 = vld [vmem:[%s1 + $0x1a0] sm:$0xff]
    %v83 = vld [vmem:[%s1 + $0x1a8] sm:$0xff]
    %v84 = vld [vmem:[%s1 + $0x1b0] sm:$0xff]
    %v85 = vld [vmem:[%s1 + $0x1b8] sm:$0xff]
    %v86 = vld [vmem:[%s1 + $0x1c0] sm:$0xff]
    %v87 = vld [vmem:[%s1 + $0x1c8] sm:$0xff]
    %v88 = vld [vmem:[%s1 + $0x1d0] sm:$0xff]
    %v89 = vld [vmem:[%s1 + $0x1d8] sm:$0xff]
    %v90 = vld [vmem:[%s1 + $0x1e0] sm:$0xff]
    %v91 = vld [vmem:[%s1 + $0x1e8] sm:$0xff]
    %v92 = vld [vmem:[%s1 + $0x1f0] sm:$0xff]
    %v93 = vld [vmem:[%s1 + $0x1f8] sm:$0xff]
    %v94 = vld [vmem:[%s2] sm:$0xff]
    %v96 = vlaneseq
    %v97 = vshrl.u32 %v96, 7
    %v98 = vsub.s32 0, %v97
    %v99 = vrot.slane %v94, %v98
    %v100 = vlaneseq
    %v101 = vshrl.u32 %v100, 7
    %v102 = vsub.s32 1, %v101
    %v103 = vrot.slane %v94, %v102
    %v104 = vlaneseq
    %v105 = vshrl.u32 %v104, 7
    %v106 = vsub.s32 2, %v105
    %v107 = vrot.slane %v94, %v106
    %v108 = vlaneseq
    %v109 = vshrl.u32 %v108, 7
    %v110 = vsub.s32 3, %v109
    %v111 = vrot.slane %v94, %v110
    %v112 = vlaneseq
    %v113 = vshrl.u32 %v112, 7
    %v114 = vsub.s32 4, %v113
    %v115 = vrot.slane %v94, %v114
    %v116 = vlaneseq
    %v117 = vshrl.u32 %v116, 7
    %v118 = vsub.s32 5, %v117
    %v119 = vrot.slane %v94, %v118
    %v120 = vlaneseq
    %v121 = vshrl.u32 %v120, 7
    %v122 = vsub.s32 6, %v121
    %v123 = vrot.slane %v94, %v122
    %v124 = vlaneseq
    %v125 = vshrl.u32 %v124, 7
    %v126 = vsub.s32 7, %v125
    %v127 = vrot.slane %v94, %v126
    %v138 = vunpack.c.l.b16 %v28
    %v139 = vunpack.c.l.b16 %v29
    %v140 = vpack.c.b16 %v139, %v138
    %v206 = vunpack.c.l.b16 %v30
    %v207 = vunpack.c.h.b16 %v30
    %v208 = vunpack.c.l.b16 %v31
    %v209 = vunpack.c.h.b16 %v31
    %v210 = vunpack.c.l.b16 %v32
    %v211 = vunpack.c.h.b16 %v32
    %v212 = vunpack.c.l.b16 %v33
    %v213 = vunpack.c.h.b16 %v33
    %v214 = vunpack.c.l.b16 %v34
    %v215 = vunpack.c.h.b16 %v34
    %v216 = vunpack.c.l.b16 %v35
    %v217 = vunpack.c.h.b16 %v35
    %v218 = vunpack.c.l.b16 %v36
    %v219 = vunpack.c.h.b16 %v36
    %v220 = vunpack.c.l.b16 %v37
    %v221 = vunpack.c.h.b16 %v37
    %v222 = vunpack.c.l.b16 %v38
    %v223 = vunpack.c.h.b16 %v38
    %v224 = vunpack.c.l.b16 %v39
    %v225 = vunpack.c.h.b16 %v39
    %v226 = vunpack.c.l.b16 %v40
    %v227 = vunpack.c.h.b16 %v40
    %v228 = vunpack.c.l.b16 %v41
    %v229 = vunpack.c.h.b16 %v41
    %v230 = vunpack.c.l.b16 %v42
    %v231 = vunpack.c.h.b16 %v42
    %v232 = vunpack.c.l.b16 %v43
    %v233 = vunpack.c.h.b16 %v43
    %v234 = vunpack.c.l.b16 %v44
    %v235 = vunpack.c.h.b16 %v44
    %v236 = vunpack.c.l.b16 %v45
    %v237 = vunpack.c.h.b16 %v45
    %v238 = vunpack.c.l.b16 %v46
    %v239 = vunpack.c.h.b16 %v46
    %v240 = vunpack.c.l.b16 %v47
    %v241 = vunpack.c.h.b16 %v47
    %v242 = vunpack.c.l.b16 %v48
    %v243 = vunpack.c.h.b16 %v48
    %v244 = vunpack.c.l.b16 %v49
    %v245 = vunpack.c.h.b16 %v49
    %v246 = vunpack.c.l.b16 %v50
    %v247 = vunpack.c.h.b16 %v50
    %v248 = vunpack.c.l.b16 %v51
    %v249 = vunpack.c.h.b16 %v51
    %v250 = vunpack.c.l.b16 %v52
    %v251 = vunpack.c.h.b16 %v52
    %v252 = vunpack.c.l.b16 %v53
    %v253 = vunpack.c.h.b16 %v53
    %v254 = vunpack.c.l.b16 %v54
    %v255 = vunpack.c.h.b16 %v54
    %v256 = vunpack.c.l.b16 %v55
    %v257 = vunpack.c.h.b16 %v55
    %v258 = vunpack.c.l.b16 %v56
    %v259 = vunpack.c.h.b16 %v56
    %v260 = vunpack.c.l.b16 %v57
    %v261 = vunpack.c.h.b16 %v57
    %v262 = vunpack.c.l.b16 %v58
    %v263 = vunpack.c.h.b16 %v58
    %v264 = vunpack.c.l.b16 %v59
    %v265 = vunpack.c.h.b16 %v59
    %v266 = vunpack.c.l.b16 %v60
    %v267 = vunpack.c.h.b16 %v60
    %v268 = vunpack.c.l.b16 %v61
    %v269 = vunpack.c.h.b16 %v61
    %v270 = vunpack.c.l.b16 %v62
    %v271 = vunpack.c.h.b16 %v62
    %v272 = vunpack.c.l.b16 %v63
    %v273 = vunpack.c.h.b16 %v63
    %v274 = vunpack.c.l.b16 %v64
    %v275 = vunpack.c.h.b16 %v64
    %v276 = vunpack.c.l.b16 %v65
    %v277 = vunpack.c.h.b16 %v65
    %v278 = vunpack.c.l.b16 %v66
    %v279 = vunpack.c.h.b16 %v66
    %v280 = vunpack.c.l.b16 %v67
    %v281 = vunpack.c.h.b16 %v67
    %v282 = vunpack.c.l.b16 %v68
    %v283 = vunpack.c.h.b16 %v68
    %v284 = vunpack.c.l.b16 %v69
    %v285 = vunpack.c.h.b16 %v69
    %v286 = vunpack.c.l.b16 %v70
    %v287 = vunpack.c.h.b16 %v70
    %v288 = vunpack.c.l.b16 %v71
    %v289 = vunpack.c.h.b16 %v71
    %v290 = vunpack.c.l.b16 %v72
    %v291 = vunpack.c.h.b16 %v72
    %v292 = vunpack.c.l.b16 %v73
    %v293 = vunpack.c.h.b16 %v73
    %v294 = vunpack.c.l.b16 %v74
    %v295 = vunpack.c.h.b16 %v74
    %v296 = vunpack.c.l.b16 %v75
    %v297 = vunpack.c.h.b16 %v75
    %v298 = vunpack.c.l.b16 %v76
    %v299 = vunpack.c.h.b16 %v76
    %v300 = vunpack.c.l.b16 %v77
    %v301 = vunpack.c.h.b16 %v77
    %v302 = vunpack.c.l.b16 %v78
    %v303 = vunpack.c.h.b16 %v78
    %v304 = vunpack.c.l.b16 %v79
    %v305 = vunpack.c.h.b16 %v79
    %v306 = vunpack.c.l.b16 %v80
    %v307 = vunpack.c.h.b16 %v80
    %v308 = vunpack.c.l.b16 %v81
    %v309 = vunpack.c.h.b16 %v81
    %v310 = vunpack.c.l.b16 %v82
    %v311 = vunpack.c.h.b16 %v82
    %v312 = vunpack.c.l.b16 %v83
    %v313 = vunpack.c.h.b16 %v83
    %v314 = vunpack.c.l.b16 %v84
    %v315 = vunpack.c.h.b16 %v84
    %v316 = vunpack.c.l.b16 %v85
    %v317 = vunpack.c.h.b16 %v85
    %v318 = vunpack.c.l.b16 %v86
    %v319 = vunpack.c.h.b16 %v86
    %v320 = vunpack.c.l.b16 %v87
    %v321 = vunpack.c.h.b16 %v87
    %v322 = vunpack.c.l.b16 %v88
    %v323 = vunpack.c.h.b16 %v88
    %v324 = vunpack.c.l.b16 %v89
    %v325 = vunpack.c.h.b16 %v89
    %v326 = vunpack.c.l.b16 %v90
    %v327 = vunpack.c.h.b16 %v90
    %v328 = vunpack.c.l.b16 %v91
    %v329 = vunpack.c.h.b16 %v91
    %v330 = vunpack.c.l.b16 %v92
    %v331 = vunpack.c.h.b16 %v92
    %v332 = vunpack.c.l.b16 %v93
    %v333 = vunpack.c.h.b16 %v93
    %v334 = vpack.c.b16 %v214, %v206
    %v335 = vpack.c.b16 %v215, %v207
    %v336 = vpack.c.b16 %v216, %v208
    %v337 = vpack.c.b16 %v217, %v209
    %v338 = vpack.c.b16 %v218, %v210
    %v339 = vpack.c.b16 %v219, %v211
    %v340 = vpack.c.b16 %v220, %v212
    %v341 = vpack.c.b16 %v221, %v213
    %v342 = vpack.c.b16 %v230, %v222
    %v343 = vpack.c.b16 %v231, %v223
    %v344 = vpack.c.b16 %v232, %v224
    %v345 = vpack.c.b16 %v233, %v225
    %v346 = vpack.c.b16 %v234, %v226
    %v347 = vpack.c.b16 %v235, %v227
    %v348 = vpack.c.b16 %v236, %v228
    %v349 = vpack.c.b16 %v237, %v229
    %v350 = vpack.c.b16 %v246, %v238
    %v351 = vpack.c.b16 %v247, %v239
    %v352 = vpack.c.b16 %v248, %v240
    %v353 = vpack.c.b16 %v249, %v241
    %v354 = vpack.c.b16 %v250, %v242
    %v355 = vpack.c.b16 %v251, %v243
    %v356 = vpack.c.b16 %v252, %v244
    %v357 = vpack.c.b16 %v253, %v245
    %v358 = vpack.c.b16 %v262, %v254
    %v359 = vpack.c.b16 %v263, %v255
    %v360 = vpack.c.b16 %v264, %v256
    %v361 = vpack.c.b16 %v265, %v257
    %v362 = vpack.c.b16 %v266, %v258
    %v363 = vpack.c.b16 %v267, %v259
    %v364 = vpack.c.b16 %v268, %v260
    %v365 = vpack.c.b16 %v269, %v261
    %v366 = vpack.c.b16 %v278, %v270
    %v367 = vpack.c.b16 %v279, %v271
    %v368 = vpack.c.b16 %v280, %v272
    %v369 = vpack.c.b16 %v281, %v273
    %v370 = vpack.c.b16 %v282, %v274
    %v371 = vpack.c.b16 %v283, %v275
    %v372 = vpack.c.b16 %v284, %v276
    %v373 = vpack.c.b16 %v285, %v277
    %v374 = vpack.c.b16 %v294, %v286
    %v375 = vpack.c.b16 %v295, %v287
    %v376 = vpack.c.b16 %v296, %v288
    %v377 = vpack.c.b16 %v297, %v289
    %v378 = vpack.c.b16 %v298, %v290
    %v379 = vpack.c.b16 %v299, %v291
    %v380 = vpack.c.b16 %v300, %v292
    %v381 = vpack.c.b16 %v301, %v293
    %v382 = vpack.c.b16 %v310, %v302
    %v383 = vpack.c.b16 %v311, %v303
    %v384 = vpack.c.b16 %v312, %v304
    %v385 = vpack.c.b16 %v313, %v305
    %v386 = vpack.c.b16 %v314, %v306
    %v387 = vpack.c.b16 %v315, %v307
    %v388 = vpack.c.b16 %v316, %v308
    %v389 = vpack.c.b16 %v317, %v309
    %v390 = vpack.c.b16 %v326, %v318
    %v391 = vpack.c.b16 %v327, %v319
    %v392 = vpack.c.b16 %v328, %v320
    %v393 = vpack.c.b16 %v329, %v321
    %v394 = vpack.c.b16 %v330, %v322
    %v395 = vpack.c.b16 %v331, %v323
    %v396 = vpack.c.b16 %v332, %v324
    %v397 = vpack.c.b16 %v333, %v325
    %462 = vmatprep.subr.bf16.mxu0 %v335
    %463 = vmatpush1.bf16.msra.mxu0 %v334
    %464 = vmatprep.subr.bf16.mxu0 %v343
    %465 = vmatpush1.bf16.msra.mxu0 %v342
    %466 = vmatprep.subr.bf16.mxu0 %v351
    %467 = vmatpush1.bf16.msra.mxu0 %v350
    %468 = vmatprep.subr.bf16.mxu0 %v359
    %469 = vmatpush1.bf16.msra.mxu0 %v358
    %470 = vmatprep.subr.bf16.mxu0 %v367
    %471 = vmatpush1.bf16.msra.mxu0 %v366
    %472 = vmatprep.subr.bf16.mxu0 %v375
    %473 = vmatpush1.bf16.msra.mxu0 %v374
    %474 = vmatprep.subr.bf16.mxu0 %v383
    %475 = vmatpush1.bf16.msra.mxu0 %v382
    %476 = vmatprep.subr.bf16.mxu0 %v391
    %477 = vmatpush1.bf16.msra.mxu0 %v390
    %478 = vmatprep.subr.bf16.mxu0 0
    %479 = vmatpush1.bf16.msra.mxu0 0
    %480 = vmatprep.subr.bf16.mxu0 0
    %481 = vmatpush1.bf16.msra.mxu0 0
    %482 = vmatprep.subr.bf16.mxu0 0
    %483 = vmatpush1.bf16.msra.mxu0 0
    %484 = vmatprep.subr.bf16.mxu0 0
    %485 = vmatpush1.bf16.msra.mxu0 0
    %486 = vmatprep.subr.bf16.mxu0 0
    %487 = vmatpush1.bf16.msra.mxu0 0
    %488 = vmatprep.subr.bf16.mxu0 0
    %489 = vmatpush1.bf16.msra.mxu0 0
    %490 = vmatprep.subr.bf16.mxu0 0
    %491 = vmatpush1.bf16.msra.mxu0 0
    %492 = vmatprep.subr.bf16.mxu0 0
    %493 = vmatpush1.bf16.msra.mxu0 0
    %494 = vmatprep.mubr.bf16.mxu0 0
    %495 = vmatmul.mubr.bf16.gmra.mrb[0].mxu0 %v140
    %v496 = vpop.f32.mrb[0].mxu0
    %v497 = vadd.f32 %v99, %v496
    %v498 = vpop.f32.mrb[0].mxu0
    %v499 = vadd.f32 %v103, %v498
    %v500 = vpop.f32.mrb[0].mxu0
    %v501 = vadd.f32 %v99, %v500
    %v502 = vpop.f32.mrb[0].mxu0
    %v503 = vadd.f32 %v103, %v502
    %504 = vdwg.mxu0
    %505 = vmatprep.subr.bf16.mxu0 %v337
    %506 = vmatpush1.bf16.msra.mxu0 %v336
    %507 = vmatprep.subr.bf16.mxu0 %v345
    %508 = vmatpush1.bf16.msra.mxu0 %v344
    %509 = vmatprep.subr.bf16.mxu0 %v353
    %510 = vmatpush1.bf16.msra.mxu0 %v352
    %511 = vmatprep.subr.bf16.mxu0 %v361
    %512 = vmatpush1.bf16.msra.mxu0 %v360
    %513 = vmatprep.subr.bf16.mxu0 %v369
    %514 = vmatpush1.bf16.msra.mxu0 %v368
    %515 = vmatprep.subr.bf16.mxu0 %v377
    %516 = vmatpush1.bf16.msra.mxu0 %v376
    %517 = vmatprep.subr.bf16.mxu0 %v385
    %518 = vmatpush1.bf16.msra.mxu0 %v384
    %519 = vmatprep.subr.bf16.mxu0 %v393
    %520 = vmatpush1.bf16.msra.mxu0 %v392
    %521 = vmatprep.subr.bf16.mxu0 0
    %522 = vmatpush1.bf16.msra.mxu0 0
    %523 = vmatprep.subr.bf16.mxu0 0
    %524 = vmatpush1.bf16.msra.mxu0 0
    %525 = vmatprep.subr.bf16.mxu0 0
    %526 = vmatpush1.bf16.msra.mxu0 0
    %527 = vmatprep.subr.bf16.mxu0 0
    %528 = vmatpush1.bf16.msra.mxu0 0
    %529 = vmatprep.subr.bf16.mxu0 0
    %530 = vmatpush1.bf16.msra.mxu0 0
    %531 = vmatprep.subr.bf16.mxu0 0
    %532 = vmatpush1.bf16.msra.mxu0 0
    %533 = vmatprep.subr.bf16.mxu0 0
    %534 = vmatpush1.bf16.msra.mxu0 0
    %535 = vmatprep.subr.bf16.mxu0 0
    %536 = vmatpush1.bf16.msra.mxu0 0
    %537 = vmatprep.mubr.bf16.mxu0 0
    %538 = vmatmul.mubr.bf16.gmra.mrb[0].mxu0 %v140
    %v539 = vpop.f32.mrb[0].mxu0
    %v540 = vadd.f32 %v107, %v539
    %v541 = vpop.f32.mrb[0].mxu0
    %v542 = vadd.f32 %v111, %v541
    %v543 = vpop.f32.mrb[0].mxu0
    %v544 = vadd.f32 %v107, %v543
    %v545 = vpop.f32.mrb[0].mxu0
    %v546 = vadd.f32 %v111, %v545
    %547 = vdwg.mxu0
    %548 = vmatprep.subr.bf16.mxu0 %v339
    %549 = vmatpush1.bf16.msra.mxu0 %v338
    %550 = vmatprep.subr.bf16.mxu0 %v347
    %551 = vmatpush1.bf16.msra.mxu0 %v346
    %552 = vmatprep.subr.bf16.mxu0 %v355
    %553 = vmatpush1.bf16.msra.mxu0 %v354
    %554 = vmatprep.subr.bf16.mxu0 %v363
    %555 = vmatpush1.bf16.msra.mxu0 %v362
    %556 = vmatprep.subr.bf16.mxu0 %v371
    %557 = vmatpush1.bf16.msra.mxu0 %v370
    %558 = vmatprep.subr.bf16.mxu0 %v379
    %559 = vmatpush1.bf16.msra.mxu0 %v378
    %560 = vmatprep.subr.bf16.mxu0 %v387
    %561 = vmatpush1.bf16.msra.mxu0 %v386
    %562 = vmatprep.subr.bf16.mxu0 %v395
    %563 = vmatpush1.bf16.msra.mxu0 %v394
    %564 = vmatprep.subr.bf16.mxu0 0
    %565 = vmatpush1.bf16.msra.mxu0 0
    %566 = vmatprep.subr.bf16.mxu0 0
    %567 = vmatpush1.bf16.msra.mxu0 0
    %568 = vmatprep.subr.bf16.mxu0 0
    %569 = vmatpush1.bf16.msra.mxu0 0
    %570 = vmatprep.subr.bf16.mxu0 0
    %571 = vmatpush1.bf16.msra.mxu0 0
    %572 = vmatprep.subr.bf16.mxu0 0
    %573 = vmatpush1.bf16.msra.mxu0 0
    %574 = vmatprep.subr.bf16.mxu0 0
    %575 = vmatpush1.bf16.msra.mxu0 0
    %576 = vmatprep.subr.bf16.mxu0 0
    %577 = vmatpush1.bf16.msra.mxu0 0
    %578 = vmatprep.subr.bf16.mxu0 0
    %579 = vmatpush1.bf16.msra.mxu0 0
    %580 = vmatprep.mubr.bf16.mxu0 0
    %581 = vmatmul.mubr.bf16.gmra.mrb[0].mxu0 %v140
    %v582 = vpop.f32.mrb[0].mxu0
    %v583 = vadd.f32 %v115, %v582
    %v584 = vpop.f32.mrb[0].mxu0
    %v585 = vadd.f32 %v119, %v584
    %v586 = vpop.f32.mrb[0].mxu0
    %v587 = vadd.f32 %v115, %v586
    %v588 = vpop.f32.mrb[0].mxu0
    %v589 = vadd.f32 %v119, %v588
    %590 = vdwg.mxu0
    %591 = vmatprep.subr.bf16.mxu0 %v341
    %592 = vmatpush1.bf16.msra.mxu0 %v340
    %593 = vmatprep.subr.bf16.mxu0 %v349
    %594 = vmatpush1.bf16.msra.mxu0 %v348
    %595 = vmatprep.subr.bf16.mxu0 %v357
    %596 = vmatpush1.bf16.msra.mxu0 %v356
    %597 = vmatprep.subr.bf16.mxu0 %v365
    %598 = vmatpush1.bf16.msra.mxu0 %v364
    %599 = vmatprep.subr.bf16.mxu0 %v373
    %600 = vmatpush1.bf16.msra.mxu0 %v372
    %601 = vmatprep.subr.bf16.mxu0 %v381
    %602 = vmatpush1.bf16.msra.mxu0 %v380
    %603 = vmatprep.subr.bf16.mxu0 %v389
    %604 = vmatpush1.bf16.msra.mxu0 %v388
    %605 = vmatprep.subr.bf16.mxu0 %v397
    %606 = vmatpush1.bf16.msra.mxu0 %v396
    %607 = vmatprep.subr.bf16.mxu0 0
    %608 = vmatpush1.bf16.msra.mxu0 0
    %609 = vmatprep.subr.bf16.mxu0 0
    %610 = vmatpush1.bf16.msra.mxu0 0
    %611 = vmatprep.subr.bf16.mxu0 0
    %612 = vmatpush1.bf16.msra.mxu0 0
    %613 = vmatprep.subr.bf16.mxu0 0
    %614 = vmatpush1.bf16.msra.mxu0 0
    %615 = vmatprep.subr.bf16.mxu0 0
    %616 = vmatpush1.bf16.msra.mxu0 0
    %617 = vmatprep.subr.bf16.mxu0 0
    %618 = vmatpush1.bf16.msra.mxu0 0
    %619 = vmatprep.subr.bf16.mxu0 0
    %620 = vmatpush1.bf16.msra.mxu0 0
    %621 = vmatprep.subr.bf16.mxu0 0
    %622 = vmatpush1.bf16.msra.mxu0 0
    %623 = vmatprep.mubr.bf16.mxu0 0
    %624 = vmatmul.mubr.bf16.gmra.mrb[0].mxu0 %v140
    %v625 = vpop.f32.mrb[0].mxu0
    %v626 = vadd.f32 %v123, %v625
    %v627 = vpop.f32.mrb[0].mxu0
    %v628 = vadd.f32 %v127, %v627
    %v629 = vpop.f32.mrb[0].mxu0
    %v630 = vadd.f32 %v123, %v629
    %v631 = vpop.f32.mrb[0].mxu0
    %v632 = vadd.f32 %v127, %v631
    %633 = vdwg.mxu0
    %v634 = vmax.f32 %v497, 0.0
    %v635 = vmax.f32 %v499, 0.0
    %v636 = vmax.f32 %v540, 0.0
    %v637 = vmax.f32 %v542, 0.0
    %v638 = vmax.f32 %v583, 0.0
    %v639 = vmax.f32 %v585, 0.0
    %v640 = vmax.f32 %v626, 0.0
    %v641 = vmax.f32 %v628, 0.0
    %v642 = vmax.f32 %v501, 0.0
    %v643 = vmax.f32 %v503, 0.0
    %v644 = vmax.f32 %v544, 0.0
    %v645 = vmax.f32 %v546, 0.0
    %v646 = vmax.f32 %v587, 0.0
    %v647 = vmax.f32 %v589, 0.0
    %v648 = vmax.f32 %v630, 0.0
    %v649 = vmax.f32 %v632, 0.0
    %v650 = vpack.c.bf16 %v642, %v634
    %v651 = vpack.c.bf16 %v643, %v635
    %v652 = vpack.c.bf16 %v644, %v636
    %v653 = vpack.c.bf16 %v645, %v637
    %v654 = vpack.c.bf16 %v646, %v638
    %v655 = vpack.c.bf16 %v647, %v639
    %v656 = vpack.c.bf16 %v648, %v640
    %v657 = vpack.c.bf16 %v649, %v641
    %v658 = vld [vmem:[%s3] sm:$0xff]
    %v659 = vld [vmem:[%s3 + $0x8] sm:$0xff]
    %v660 = vld [vmem:[%s3 + $0x10] sm:$0xff]
    %v661 = vld [vmem:[%s3 + $0x18] sm:$0xff]
    %v662 = vld [vmem:[%s3 + $0x20] sm:$0xff]
    %v663 = vld [vmem:[%s3 + $0x28] sm:$0xff]
    %v664 = vld [vmem:[%s3 + $0x30] sm:$0xff]
    %v665 = vld [vmem:[%s3 + $0x38] sm:$0xff]
    %v666 = vld [vmem:[%s3 + $0x40] sm:$0xff]
    %v667 = vld [vmem:[%s3 + $0x48] sm:$0xff]
    %v668 = vld [vmem:[%s3 + $0x50] sm:$0xff]
    %v669 = vld [vmem:[%s3 + $0x58] sm:$0xff]
    %v670 = vld [vmem:[%s3 + $0x60] sm:$0xff]
    %v671 = vld [vmem:[%s3 + $0x68] sm:$0xff]
    %v672 = vld [vmem:[%s3 + $0x70] sm:$0xff]
    %v673 = vld [vmem:[%s3 + $0x78] sm:$0xff]
    %v674 = vld [vmem:[%s3 + $0x80] sm:$0xff]
    %v675 = vld [vmem:[%s3 + $0x88] sm:$0xff]
    %v676 = vld [vmem:[%s3 + $0x90] sm:$0xff]
    %v677 = vld [vmem:[%s3 + $0x98] sm:$0xff]
    %v678 = vld [vmem:[%s3 + $0xa0] sm:$0xff]
    %v679 = vld [vmem:[%s3 + $0xa8] sm:$0xff]
    %v680 = vld [vmem:[%s3 + $0xb0] sm:$0xff]
    %v681 = vld [vmem:[%s3 + $0xb8] sm:$0xff]
    %v682 = vld [vmem:[%s3 + $0xc0] sm:$0xff]
    %v683 = vld [vmem:[%s3 + $0xc8] sm:$0xff]
    %v684 = vld [vmem:[%s3 + $0xd0] sm:$0xff]
    %v685 = vld [vmem:[%s3 + $0xd8] sm:$0xff]
    %v686 = vld [vmem:[%s3 + $0xe0] sm:$0xff]
    %v687 = vld [vmem:[%s3 + $0xe8] sm:$0xff]
    %v688 = vld [vmem:[%s3 + $0xf0] sm:$0xff]
    %v689 = vld [vmem:[%s3 + $0xf8] sm:$0xff]
    %v690 = vld [vmem:[%s3 + $0x100] sm:$0xff]
    %v691 = vld [vmem:[%s3 + $0x108] sm:$0xff]
    %v692 = vld [vmem:[%s3 + $0x110] sm:$0xff]
    %v693 = vld [vmem:[%s3 + $0x118] sm:$0xff]
    %v694 = vld [vmem:[%s3 + $0x120] sm:$0xff]
    %v695 = vld [vmem:[%s3 + $0x128] sm:$0xff]
    %v696 = vld [vmem:[%s3 + $0x130] sm:$0xff]
    %v697 = vld [vmem:[%s3 + $0x138] sm:$0xff]
    %v698 = vld [vmem:[%s3 + $0x140] sm:$0xff]
    %v699 = vld [vmem:[%s3 + $0x148] sm:$0xff]
    %v700 = vld [vmem:[%s3 + $0x150] sm:$0xff]
    %v701 = vld [vmem:[%s3 + $0x158] sm:$0xff]
    %v702 = vld [vmem:[%s3 + $0x160] sm:$0xff]
    %v703 = vld [vmem:[%s3 + $0x168] sm:$0xff]
    %v704 = vld [vmem:[%s3 + $0x170] sm:$0xff]
    %v705 = vld [vmem:[%s3 + $0x178] sm:$0xff]
    %v706 = vld [vmem:[%s3 + $0x180] sm:$0xff]
    %v707 = vld [vmem:[%s3 + $0x188] sm:$0xff]
    %v708 = vld [vmem:[%s3 + $0x190] sm:$0xff]
    %v709 = vld [vmem:[%s3 + $0x198] sm:$0xff]
    %v710 = vld [vmem:[%s3 + $0x1a0] sm:$0xff]
    %v711 = vld [vmem:[%s3 + $0x1a8] sm:$0xff]
    %v712 = vld [vmem:[%s3 + $0x1b0] sm:$0xff]
    %v713 = vld [vmem:[%s3 + $0x1b8] sm:$0xff]
    %v714 = vld [vmem:[%s3 + $0x1c0] sm:$0xff]
    %v715 = vld [vmem:[%s3 + $0x1c8] sm:$0xff]
    %v716 = vld [vmem:[%s3 + $0x1d0] sm:$0xff]
    %v717 = vld [vmem:[%s3 + $0x1d8] sm:$0xff]
    %v718 = vld [vmem:[%s3 + $0x1e0] sm:$0xff]
    %v719 = vld [vmem:[%s3 + $0x1e8] sm:$0xff]
    %v720 = vld [vmem:[%s3 + $0x1f0] sm:$0xff]
    %v721 = vld [vmem:[%s3 + $0x1f8] sm:$0xff]
    %v722 = vld [vmem:[%s3 + $0x200] sm:$0xff]
    %v723 = vld [vmem:[%s3 + $0x208] sm:$0xff]
    %v724 = vld [vmem:[%s3 + $0x210] sm:$0xff]
    %v725 = vld [vmem:[%s3 + $0x218] sm:$0xff]
    %v726 = vld [vmem:[%s3 + $0x220] sm:$0xff]
    %v727 = vld [vmem:[%s3 + $0x228] sm:$0xff]
    %v728 = vld [vmem:[%s3 + $0x230] sm:$0xff]
    %v729 = vld [vmem:[%s3 + $0x238] sm:$0xff]
    %v730 = vld [vmem:[%s3 + $0x240] sm:$0xff]
    %v731 = vld [vmem:[%s3 + $0x248] sm:$0xff]
    %v732 = vld [vmem:[%s3 + $0x250] sm:$0xff]
    %v733 = vld [vmem:[%s3 + $0x258] sm:$0xff]
    %v734 = vld [vmem:[%s3 + $0x260] sm:$0xff]
    %v735 = vld [vmem:[%s3 + $0x268] sm:$0xff]
    %v736 = vld [vmem:[%s3 + $0x270] sm:$0xff]
    %v737 = vld [vmem:[%s3 + $0x278] sm:$0xff]
    %v738 = vld [vmem:[%s3 + $0x280] sm:$0xff]
    %v739 = vld [vmem:[%s3 + $0x288] sm:$0xff]
    %v740 = vld [vmem:[%s3 + $0x290] sm:$0xff]
    %v741 = vld [vmem:[%s3 + $0x298] sm:$0xff]
    %v742 = vld [vmem:[%s3 + $0x2a0] sm:$0xff]
    %v743 = vld [vmem:[%s3 + $0x2a8] sm:$0xff]
    %v744 = vld [vmem:[%s3 + $0x2b0] sm:$0xff]
    %v745 = vld [vmem:[%s3 + $0x2b8] sm:$0xff]
    %v746 = vld [vmem:[%s3 + $0x2c0] sm:$0xff]
    %v747 = vld [vmem:[%s3 + $0x2c8] sm:$0xff]
    %v748 = vld [vmem:[%s3 + $0x2d0] sm:$0xff]
    %v749 = vld [vmem:[%s3 + $0x2d8] sm:$0xff]
    %v750 = vld [vmem:[%s3 + $0x2e0] sm:$0xff]
    %v751 = vld [vmem:[%s3 + $0x2e8] sm:$0xff]
    %v752 = vld [vmem:[%s3 + $0x2f0] sm:$0xff]
    %v753 = vld [vmem:[%s3 + $0x2f8] sm:$0xff]
    %v754 = vld [vmem:[%s3 + $0x300] sm:$0xff]
    %v755 = vld [vmem:[%s3 + $0x308] sm:$0xff]
    %v756 = vld [vmem:[%s3 + $0x310] sm:$0xff]
    %v757 = vld [vmem:[%s3 + $0x318] sm:$0xff]
    %v758 = vld [vmem:[%s3 + $0x320] sm:$0xff]
    %v759 = vld [vmem:[%s3 + $0x328] sm:$0xff]
    %v760 = vld [vmem:[%s3 + $0x330] sm:$0xff]
    %v761 = vld [vmem:[%s3 + $0x338] sm:$0xff]
    %v762 = vld [vmem:[%s3 + $0x340] sm:$0xff]
    %v763 = vld [vmem:[%s3 + $0x348] sm:$0xff]
    %v764 = vld [vmem:[%s3 + $0x350] sm:$0xff]
    %v765 = vld [vmem:[%s3 + $0x358] sm:$0xff]
    %v766 = vld [vmem:[%s3 + $0x360] sm:$0xff]
    %v767 = vld [vmem:[%s3 + $0x368] sm:$0xff]
    %v768 = vld [vmem:[%s3 + $0x370] sm:$0xff]
    %v769 = vld [vmem:[%s3 + $0x378] sm:$0xff]
    %v770 = vld [vmem:[%s3 + $0x380] sm:$0xff]
    %v771 = vld [vmem:[%s3 + $0x388] sm:$0xff]
    %v772 = vld [vmem:[%s3 + $0x390] sm:$0xff]
    %v773 = vld [vmem:[%s3 + $0x398] sm:$0xff]
    %v774 = vld [vmem:[%s3 + $0x3a0] sm:$0xff]
    %v775 = vld [vmem:[%s3 + $0x3a8] sm:$0xff]
    %v776 = vld [vmem:[%s3 + $0x3b0] sm:$0xff]
    %v777 = vld [vmem:[%s3 + $0x3b8] sm:$0xff]
    %v778 = vld [vmem:[%s3 + $0x3c0] sm:$0xff]
    %v779 = vld [vmem:[%s3 + $0x3c8] sm:$0xff]
    %v780 = vld [vmem:[%s3 + $0x3d0] sm:$0xff]
    %v781 = vld [vmem:[%s3 + $0x3d8] sm:$0xff]
    %v782 = vld [vmem:[%s3 + $0x3e0] sm:$0xff]
    %v783 = vld [vmem:[%s3 + $0x3e8] sm:$0xff]
    %v784 = vld [vmem:[%s3 + $0x3f0] sm:$0xff]
    %v785 = vld [vmem:[%s3 + $0x3f8] sm:$0xff]
    %v786 = vld [vmem:[%s3 + $0x400] sm:$0xff]
    %v787 = vld [vmem:[%s3 + $0x408] sm:$0xff]
    %v788 = vld [vmem:[%s3 + $0x410] sm:$0xff]
    %v789 = vld [vmem:[%s3 + $0x418] sm:$0xff]
    %v790 = vld [vmem:[%s3 + $0x420] sm:$0xff]
    %v791 = vld [vmem:[%s3 + $0x428] sm:$0xff]
    %v792 = vld [vmem:[%s3 + $0x430] sm:$0xff]
    %v793 = vld [vmem:[%s3 + $0x438] sm:$0xff]
    %v794 = vld [vmem:[%s3 + $0x440] sm:$0xff]
    %v795 = vld [vmem:[%s3 + $0x448] sm:$0xff]
    %v796 = vld [vmem:[%s3 + $0x450] sm:$0xff]
    %v797 = vld [vmem:[%s3 + $0x458] sm:$0xff]
    %v798 = vld [vmem:[%s3 + $0x460] sm:$0xff]
    %v799 = vld [vmem:[%s3 + $0x468] sm:$0xff]
    %v800 = vld [vmem:[%s3 + $0x470] sm:$0xff]
    %v801 = vld [vmem:[%s3 + $0x478] sm:$0xff]
    %v802 = vld [vmem:[%s3 + $0x480] sm:$0xff]
    %v803 = vld [vmem:[%s3 + $0x488] sm:$0xff]
    %v804 = vld [vmem:[%s3 + $0x490] sm:$0xff]
    %v805 = vld [vmem:[%s3 + $0x498] sm:$0xff]
    %v806 = vld [vmem:[%s3 + $0x4a0] sm:$0xff]
    %v807 = vld [vmem:[%s3 + $0x4a8] sm:$0xff]
    %v808 = vld [vmem:[%s3 + $0x4b0] sm:$0xff]
    %v809 = vld [vmem:[%s3 + $0x4b8] sm:$0xff]
    %v810 = vld [vmem:[%s3 + $0x4c0] sm:$0xff]
    %v811 = vld [vmem:[%s3 + $0x4c8] sm:$0xff]
    %v812 = vld [vmem:[%s3 + $0x4d0] sm:$0xff]
    %v813 = vld [vmem:[%s3 + $0x4d8] sm:$0xff]
    %v814 = vld [vmem:[%s3 + $0x4e0] sm:$0xff]
    %v815 = vld [vmem:[%s3 + $0x4e8] sm:$0xff]
    %v816 = vld [vmem:[%s3 + $0x4f0] sm:$0xff]
    %v817 = vld [vmem:[%s3 + $0x4f8] sm:$0xff]
    %v818 = vld [vmem:[%s3 + $0x500] sm:$0xff]
    %v819 = vld [vmem:[%s3 + $0x508] sm:$0xff]
    %v820 = vld [vmem:[%s3 + $0x510] sm:$0xff]
    %v821 = vld [vmem:[%s3 + $0x518] sm:$0xff]
    %v822 = vld [vmem:[%s3 + $0x520] sm:$0xff]
    %v823 = vld [vmem:[%s3 + $0x528] sm:$0xff]
    %v824 = vld [vmem:[%s3 + $0x530] sm:$0xff]
    %v825 = vld [vmem:[%s3 + $0x538] sm:$0xff]
    %v826 = vld [vmem:[%s3 + $0x540] sm:$0xff]
    %v827 = vld [vmem:[%s3 + $0x548] sm:$0xff]
    %v828 = vld [vmem:[%s3 + $0x550] sm:$0xff]
    %v829 = vld [vmem:[%s3 + $0x558] sm:$0xff]
    %v830 = vld [vmem:[%s3 + $0x560] sm:$0xff]
    %v831 = vld [vmem:[%s3 + $0x568] sm:$0xff]
    %v832 = vld [vmem:[%s3 + $0x570] sm:$0xff]
    %v833 = vld [vmem:[%s3 + $0x578] sm:$0xff]
    %v834 = vld [vmem:[%s3 + $0x580] sm:$0xff]
    %v835 = vld [vmem:[%s3 + $0x588] sm:$0xff]
    %v836 = vld [vmem:[%s3 + $0x590] sm:$0xff]
    %v837 = vld [vmem:[%s3 + $0x598] sm:$0xff]
    %v838 = vld [vmem:[%s3 + $0x5a0] sm:$0xff]
    %v839 = vld [vmem:[%s3 + $0x5a8] sm:$0xff]
    %v840 = vld [vmem:[%s3 + $0x5b0] sm:$0xff]
    %v841 = vld [vmem:[%s3 + $0x5b8] sm:$0xff]
    %v842 = vld [vmem:[%s3 + $0x5c0] sm:$0xff]
    %v843 = vld [vmem:[%s3 + $0x5c8] sm:$0xff]
    %v844 = vld [vmem:[%s3 + $0x5d0] sm:$0xff]
    %v845 = vld [vmem:[%s3 + $0x5d8] sm:$0xff]
    %v846 = vld [vmem:[%s3 + $0x5e0] sm:$0xff]
    %v847 = vld [vmem:[%s3 + $0x5e8] sm:$0xff]
    %v848 = vld [vmem:[%s3 + $0x5f0] sm:$0xff]
    %v849 = vld [vmem:[%s3 + $0x5f8] sm:$0xff]
    %v850 = vld [vmem:[%s3 + $0x600] sm:$0xff]
    %v851 = vld [vmem:[%s3 + $0x608] sm:$0xff]
    %v852 = vld [vmem:[%s3 + $0x610] sm:$0xff]
    %v853 = vld [vmem:[%s3 + $0x618] sm:$0xff]
    %v854 = vld [vmem:[%s3 + $0x620] sm:$0xff]
    %v855 = vld [vmem:[%s3 + $0x628] sm:$0xff]
    %v856 = vld [vmem:[%s3 + $0x630] sm:$0xff]
    %v857 = vld [vmem:[%s3 + $0x638] sm:$0xff]
    %v858 = vld [vmem:[%s3 + $0x640] sm:$0xff]
    %v859 = vld [vmem:[%s3 + $0x648] sm:$0xff]
    %v860 = vld [vmem:[%s3 + $0x650] sm:$0xff]
    %v861 = vld [vmem:[%s3 + $0x658] sm:$0xff]
    %v862 = vld [vmem:[%s3 + $0x660] sm:$0xff]
    %v863 = vld [vmem:[%s3 + $0x668] sm:$0xff]
    %v864 = vld [vmem:[%s3 + $0x670] sm:$0xff]
    %v865 = vld [vmem:[%s3 + $0x678] sm:$0xff]
    %v866 = vld [vmem:[%s3 + $0x680] sm:$0xff]
    %v867 = vld [vmem:[%s3 + $0x688] sm:$0xff]
    %v868 = vld [vmem:[%s3 + $0x690] sm:$0xff]
    %v869 = vld [vmem:[%s3 + $0x698] sm:$0xff]
    %v870 = vld [vmem:[%s3 + $0x6a0] sm:$0xff]
    %v871 = vld [vmem:[%s3 + $0x6a8] sm:$0xff]
    %v872 = vld [vmem:[%s3 + $0x6b0] sm:$0xff]
    %v873 = vld [vmem:[%s3 + $0x6b8] sm:$0xff]
    %v874 = vld [vmem:[%s3 + $0x6c0] sm:$0xff]
    %v875 = vld [vmem:[%s3 + $0x6c8] sm:$0xff]
    %v876 = vld [vmem:[%s3 + $0x6d0] sm:$0xff]
    %v877 = vld [vmem:[%s3 + $0x6d8] sm:$0xff]
    %v878 = vld [vmem:[%s3 + $0x6e0] sm:$0xff]
    %v879 = vld [vmem:[%s3 + $0x6e8] sm:$0xff]
    %v880 = vld [vmem:[%s3 + $0x6f0] sm:$0xff]
    %v881 = vld [vmem:[%s3 + $0x6f8] sm:$0xff]
    %v882 = vld [vmem:[%s3 + $0x700] sm:$0xff]
    %v883 = vld [vmem:[%s3 + $0x708] sm:$0xff]
    %v884 = vld [vmem:[%s3 + $0x710] sm:$0xff]
    %v885 = vld [vmem:[%s3 + $0x718] sm:$0xff]
    %v886 = vld [vmem:[%s3 + $0x720] sm:$0xff]
    %v887 = vld [vmem:[%s3 + $0x728] sm:$0xff]
    %v888 = vld [vmem:[%s3 + $0x730] sm:$0xff]
    %v889 = vld [vmem:[%s3 + $0x738] sm:$0xff]
    %v890 = vld [vmem:[%s3 + $0x740] sm:$0xff]
    %v891 = vld [vmem:[%s3 + $0x748] sm:$0xff]
    %v892 = vld [vmem:[%s3 + $0x750] sm:$0xff]
    %v893 = vld [vmem:[%s3 + $0x758] sm:$0xff]
    %v894 = vld [vmem:[%s3 + $0x760] sm:$0xff]
    %v895 = vld [vmem:[%s3 + $0x768] sm:$0xff]
    %v896 = vld [vmem:[%s3 + $0x770] sm:$0xff]
    %v897 = vld [vmem:[%s3 + $0x778] sm:$0xff]
    %v898 = vld [vmem:[%s3 + $0x780] sm:$0xff]
    %v899 = vld [vmem:[%s3 + $0x788] sm:$0xff]
    %v900 = vld [vmem:[%s3 + $0x790] sm:$0xff]
    %v901 = vld [vmem:[%s3 + $0x798] sm:$0xff]
    %v902 = vld [vmem:[%s3 + $0x7a0] sm:$0xff]
    %v903 = vld [vmem:[%s3 + $0x7a8] sm:$0xff]
    %v904 = vld [vmem:[%s3 + $0x7b0] sm:$0xff]
    %v905 = vld [vmem:[%s3 + $0x7b8] sm:$0xff]
    %v906 = vld [vmem:[%s3 + $0x7c0] sm:$0xff]
    %v907 = vld [vmem:[%s3 + $0x7c8] sm:$0xff]
    %v908 = vld [vmem:[%s3 + $0x7d0] sm:$0xff]
    %v909 = vld [vmem:[%s3 + $0x7d8] sm:$0xff]
    %v910 = vld [vmem:[%s3 + $0x7e0] sm:$0xff]
    %v911 = vld [vmem:[%s3 + $0x7e8] sm:$0xff]
    %v912 = vld [vmem:[%s3 + $0x7f0] sm:$0xff]
    %v913 = vld [vmem:[%s3 + $0x7f8] sm:$0xff]
    %v914 = vld [vmem:[%s3 + $0x800] sm:$0xff]
    %v915 = vld [vmem:[%s3 + $0x808] sm:$0xff]
    %v916 = vld [vmem:[%s3 + $0x810] sm:$0xff]
    %v917 = vld [vmem:[%s3 + $0x818] sm:$0xff]
    %v918 = vld [vmem:[%s3 + $0x820] sm:$0xff]
    %v919 = vld [vmem:[%s3 + $0x828] sm:$0xff]
    %v920 = vld [vmem:[%s3 + $0x830] sm:$0xff]
    %v921 = vld [vmem:[%s3 + $0x838] sm:$0xff]
    %v922 = vld [vmem:[%s3 + $0x840] sm:$0xff]
    %v923 = vld [vmem:[%s3 + $0x848] sm:$0xff]
    %v924 = vld [vmem:[%s3 + $0x850] sm:$0xff]
    %v925 = vld [vmem:[%s3 + $0x858] sm:$0xff]
    %v926 = vld [vmem:[%s3 + $0x860] sm:$0xff]
    %v927 = vld [vmem:[%s3 + $0x868] sm:$0xff]
    %v928 = vld [vmem:[%s3 + $0x870] sm:$0xff]
    %v929 = vld [vmem:[%s3 + $0x878] sm:$0xff]
    %v930 = vld [vmem:[%s3 + $0x880] sm:$0xff]
    %v931 = vld [vmem:[%s3 + $0x888] sm:$0xff]
    %v932 = vld [vmem:[%s3 + $0x890] sm:$0xff]
    %v933 = vld [vmem:[%s3 + $0x898] sm:$0xff]
    %v934 = vld [vmem:[%s3 + $0x8a0] sm:$0xff]
    %v935 = vld [vmem:[%s3 + $0x8a8] sm:$0xff]
    %v936 = vld [vmem:[%s3 + $0x8b0] sm:$0xff]
    %v937 = vld [vmem:[%s3 + $0x8b8] sm:$0xff]
    %v938 = vld [vmem:[%s3 + $0x8c0] sm:$0xff]
    %v939 = vld [vmem:[%s3 + $0x8c8] sm:$0xff]
    %v940 = vld [vmem:[%s3 + $0x8d0] sm:$0xff]
    %v941 = vld [vmem:[%s3 + $0x8d8] sm:$0xff]
    %v942 = vld [vmem:[%s3 + $0x8e0] sm:$0xff]
    %v943 = vld [vmem:[%s3 + $0x8e8] sm:$0xff]
    %v944 = vld [vmem:[%s3 + $0x8f0] sm:$0xff]
    %v945 = vld [vmem:[%s3 + $0x8f8] sm:$0xff]
    %v946 = vld [vmem:[%s3 + $0x900] sm:$0xff]
    %v947 = vld [vmem:[%s3 + $0x908] sm:$0xff]
    %v948 = vld [vmem:[%s3 + $0x910] sm:$0xff]
    %v949 = vld [vmem:[%s3 + $0x918] sm:$0xff]
    %v950 = vld [vmem:[%s3 + $0x920] sm:$0xff]
    %v951 = vld [vmem:[%s3 + $0x928] sm:$0xff]
    %v952 = vld [vmem:[%s3 + $0x930] sm:$0xff]
    %v953 = vld [vmem:[%s3 + $0x938] sm:$0xff]
    %v954 = vld [vmem:[%s3 + $0x940] sm:$0xff]
    %v955 = vld [vmem:[%s3 + $0x948] sm:$0xff]
    %v956 = vld [vmem:[%s3 + $0x950] sm:$0xff]
    %v957 = vld [vmem:[%s3 + $0x958] sm:$0xff]
    %v958 = vld [vmem:[%s3 + $0x960] sm:$0xff]
    %v959 = vld [vmem:[%s3 + $0x968] sm:$0xff]
    %v960 = vld [vmem:[%s3 + $0x970] sm:$0xff]
    %v961 = vld [vmem:[%s3 + $0x978] sm:$0xff]
    %v962 = vld [vmem:[%s3 + $0x980] sm:$0xff]
    %v963 = vld [vmem:[%s3 + $0x988] sm:$0xff]
    %v964 = vld [vmem:[%s3 + $0x990] sm:$0xff]
    %v965 = vld [vmem:[%s3 + $0x998] sm:$0xff]
    %v966 = vld [vmem:[%s3 + $0x9a0] sm:$0xff]
    %v967 = vld [vmem:[%s3 + $0x9a8] sm:$0xff]
    %v968 = vld [vmem:[%s3 + $0x9b0] sm:$0xff]
    %v969 = vld [vmem:[%s3 + $0x9b8] sm:$0xff]
    %v970 = vld [vmem:[%s3 + $0x9c0] sm:$0xff]
    %v971 = vld [vmem:[%s3 + $0x9c8] sm:$0xff]
    %v972 = vld [vmem:[%s3 + $0x9d0] sm:$0xff]
    %v973 = vld [vmem:[%s3 + $0x9d8] sm:$0xff]
    %v974 = vld [vmem:[%s3 + $0x9e0] sm:$0xff]
    %v975 = vld [vmem:[%s3 + $0x9e8] sm:$0xff]
    %v976 = vld [vmem:[%s3 + $0x9f0] sm:$0xff]
    %v977 = vld [vmem:[%s3 + $0x9f8] sm:$0xff]
    %v978 = vld [vmem:[%s3 + $0xa00] sm:$0xff]
    %v979 = vld [vmem:[%s3 + $0xa08] sm:$0xff]
    %v980 = vld [vmem:[%s3 + $0xa10] sm:$0xff]
    %v981 = vld [vmem:[%s3 + $0xa18] sm:$0xff]
    %v982 = vld [vmem:[%s3 + $0xa20] sm:$0xff]
    %v983 = vld [vmem:[%s3 + $0xa28] sm:$0xff]
    %v984 = vld [vmem:[%s3 + $0xa30] sm:$0xff]
    %v985 = vld [vmem:[%s3 + $0xa38] sm:$0xff]
    %v986 = vld [vmem:[%s3 + $0xa40] sm:$0xff]
    %v987 = vld [vmem:[%s3 + $0xa48] sm:$0xff]
    %v988 = vld [vmem:[%s3 + $0xa50] sm:$0xff]
    %v989 = vld [vmem:[%s3 + $0xa58] sm:$0xff]
    %v990 = vld [vmem:[%s3 + $0xa60] sm:$0xff]
    %v991 = vld [vmem:[%s3 + $0xa68] sm:$0xff]
    %v992 = vld [vmem:[%s3 + $0xa70] sm:$0xff]
    %v993 = vld [vmem:[%s3 + $0xa78] sm:$0xff]
    %v994 = vld [vmem:[%s3 + $0xa80] sm:$0xff]
    %v995 = vld [vmem:[%s3 + $0xa88] sm:$0xff]
    %v996 = vld [vmem:[%s3 + $0xa90] sm:$0xff]
    %v997 = vld [vmem:[%s3 + $0xa98] sm:$0xff]
    %v998 = vld [vmem:[%s3 + $0xaa0] sm:$0xff]
    %v999 = vld [vmem:[%s3 + $0xaa8] sm:$0xff]
    %v1000 = vld [vmem:[%s3 + $0xab0] sm:$0xff]
    %v1001 = vld [vmem:[%s3 + $0xab8] sm:$0xff]
    %v1002 = vld [vmem:[%s3 + $0xac0] sm:$0xff]
    %v1003 = vld [vmem:[%s3 + $0xac8] sm:$0xff]
    %v1004 = vld [vmem:[%s3 + $0xad0] sm:$0xff]
    %v1005 = vld [vmem:[%s3 + $0xad8] sm:$0xff]
    %v1006 = vld [vmem:[%s3 + $0xae0] sm:$0xff]
    %v1007 = vld [vmem:[%s3 + $0xae8] sm:$0xff]
    %v1008 = vld [vmem:[%s3 + $0xaf0] sm:$0xff]
    %v1009 = vld [vmem:[%s3 + $0xaf8] sm:$0xff]
    %v1010 = vld [vmem:[%s3 + $0xb00] sm:$0xff]
    %v1011 = vld [vmem:[%s3 + $0xb08] sm:$0xff]
    %v1012 = vld [vmem:[%s3 + $0xb10] sm:$0xff]
    %v1013 = vld [vmem:[%s3 + $0xb18] sm:$0xff]
    %v1014 = vld [vmem:[%s3 + $0xb20] sm:$0xff]
    %v1015 = vld [vmem:[%s3 + $0xb28] sm:$0xff]
    %v1016 = vld [vmem:[%s3 + $0xb30] sm:$0xff]
    %v1017 = vld [vmem:[%s3 + $0xb38] sm:$0xff]
    %v1018 = vld [vmem:[%s3 + $0xb40] sm:$0xff]
    %v1019 = vld [vmem:[%s3 + $0xb48] sm:$0xff]
    %v1020 = vld [vmem:[%s3 + $0xb50] sm:$0xff]
    %v1021 = vld [vmem:[%s3 + $0xb58] sm:$0xff]
    %v1022 = vld [vmem:[%s3 + $0xb60] sm:$0xff]
    %v1023 = vld [vmem:[%s3 + $0xb68] sm:$0xff]
    %v1024 = vld [vmem:[%s3 + $0xb70] sm:$0xff]
    %v1025 = vld [vmem:[%s3 + $0xb78] sm:$0xff]
    %v1026 = vld [vmem:[%s3 + $0xb80] sm:$0xff]
    %v1027 = vld [vmem:[%s3 + $0xb88] sm:$0xff]
    %v1028 = vld [vmem:[%s3 + $0xb90] sm:$0xff]
    %v1029 = vld [vmem:[%s3 + $0xb98] sm:$0xff]
    %v1030 = vld [vmem:[%s3 + $0xba0] sm:$0xff]
    %v1031 = vld [vmem:[%s3 + $0xba8] sm:$0xff]
    %v1032 = vld [vmem:[%s3 + $0xbb0] sm:$0xff]
    %v1033 = vld [vmem:[%s3 + $0xbb8] sm:$0xff]
    %v1034 = vld [vmem:[%s3 + $0xbc0] sm:$0xff]
    %v1035 = vld [vmem:[%s3 + $0xbc8] sm:$0xff]
    %v1036 = vld [vmem:[%s3 + $0xbd0] sm:$0xff]
    %v1037 = vld [vmem:[%s3 + $0xbd8] sm:$0xff]
    %v1038 = vld [vmem:[%s3 + $0xbe0] sm:$0xff]
    %v1039 = vld [vmem:[%s3 + $0xbe8] sm:$0xff]
    %v1040 = vld [vmem:[%s3 + $0xbf0] sm:$0xff]
    %v1041 = vld [vmem:[%s3 + $0xbf8] sm:$0xff]
    %v1042 = vld [vmem:[%s3 + $0xc00] sm:$0xff]
    %v1043 = vld [vmem:[%s3 + $0xc08] sm:$0xff]
    %v1044 = vld [vmem:[%s3 + $0xc10] sm:$0xff]
    %v1045 = vld [vmem:[%s3 + $0xc18] sm:$0xff]
    %v1046 = vld [vmem:[%s3 + $0xc20] sm:$0xff]
    %v1047 = vld [vmem:[%s3 + $0xc28] sm:$0xff]
    %v1048 = vld [vmem:[%s3 + $0xc30] sm:$0xff]
    %v1049 = vld [vmem:[%s3 + $0xc38] sm:$0xff]
    %v1050 = vld [vmem:[%s3 + $0xc40] sm:$0xff]
    %v1051 = vld [vmem:[%s3 + $0xc48] sm:$0xff]
    %v1052 = vld [vmem:[%s3 + $0xc50] sm:$0xff]
    %v1053 = vld [vmem:[%s3 + $0xc58] sm:$0xff]
    %v1054 = vld [vmem:[%s3 + $0xc60] sm:$0xff]
    %v1055 = vld [vmem:[%s3 + $0xc68] sm:$0xff]
    %v1056 = vld [vmem:[%s3 + $0xc70] sm:$0xff]
    %v1057 = vld [vmem:[%s3 + $0xc78] sm:$0xff]
    %v1058 = vld [vmem:[%s3 + $0xc80] sm:$0xff]
    %v1059 = vld [vmem:[%s3 + $0xc88] sm:$0xff]
    %v1060 = vld [vmem:[%s3 + $0xc90] sm:$0xff]
    %v1061 = vld [vmem:[%s3 + $0xc98] sm:$0xff]
    %v1062 = vld [vmem:[%s3 + $0xca0] sm:$0xff]
    %v1063 = vld [vmem:[%s3 + $0xca8] sm:$0xff]
    %v1064 = vld [vmem:[%s3 + $0xcb0] sm:$0xff]
    %v1065 = vld [vmem:[%s3 + $0xcb8] sm:$0xff]
    %v1066 = vld [vmem:[%s3 + $0xcc0] sm:$0xff]
    %v1067 = vld [vmem:[%s3 + $0xcc8] sm:$0xff]
    %v1068 = vld [vmem:[%s3 + $0xcd0] sm:$0xff]
    %v1069 = vld [vmem:[%s3 + $0xcd8] sm:$0xff]
    %v1070 = vld [vmem:[%s3 + $0xce0] sm:$0xff]
    %v1071 = vld [vmem:[%s3 + $0xce8] sm:$0xff]
    %v1072 = vld [vmem:[%s3 + $0xcf0] sm:$0xff]
    %v1073 = vld [vmem:[%s3 + $0xcf8] sm:$0xff]
    %v1074 = vld [vmem:[%s3 + $0xd00] sm:$0xff]
    %v1075 = vld [vmem:[%s3 + $0xd08] sm:$0xff]
    %v1076 = vld [vmem:[%s3 + $0xd10] sm:$0xff]
    %v1077 = vld [vmem:[%s3 + $0xd18] sm:$0xff]
    %v1078 = vld [vmem:[%s3 + $0xd20] sm:$0xff]
    %v1079 = vld [vmem:[%s3 + $0xd28] sm:$0xff]
    %v1080 = vld [vmem:[%s3 + $0xd30] sm:$0xff]
    %v1081 = vld [vmem:[%s3 + $0xd38] sm:$0xff]
    %v1082 = vld [vmem:[%s3 + $0xd40] sm:$0xff]
    %v1083 = vld [vmem:[%s3 + $0xd48] sm:$0xff]
    %v1084 = vld [vmem:[%s3 + $0xd50] sm:$0xff]
    %v1085 = vld [vmem:[%s3 + $0xd58] sm:$0xff]
    %v1086 = vld [vmem:[%s3 + $0xd60] sm:$0xff]
    %v1087 = vld [vmem:[%s3 + $0xd68] sm:$0xff]
    %v1088 = vld [vmem:[%s3 + $0xd70] sm:$0xff]
    %v1089 = vld [vmem:[%s3 + $0xd78] sm:$0xff]
    %v1090 = vld [vmem:[%s3 + $0xd80] sm:$0xff]
    %v1091 = vld [vmem:[%s3 + $0xd88] sm:$0xff]
    %v1092 = vld [vmem:[%s3 + $0xd90] sm:$0xff]
    %v1093 = vld [vmem:[%s3 + $0xd98] sm:$0xff]
    %v1094 = vld [vmem:[%s3 + $0xda0] sm:$0xff]
    %v1095 = vld [vmem:[%s3 + $0xda8] sm:$0xff]
    %v1096 = vld [vmem:[%s3 + $0xdb0] sm:$0xff]
    %v1097 = vld [vmem:[%s3 + $0xdb8] sm:$0xff]
    %v1098 = vld [vmem:[%s3 + $0xdc0] sm:$0xff]
    %v1099 = vld [vmem:[%s3 + $0xdc8] sm:$0xff]
    %v1100 = vld [vmem:[%s3 + $0xdd0] sm:$0xff]
    %v1101 = vld [vmem:[%s3 + $0xdd8] sm:$0xff]
    %v1102 = vld [vmem:[%s3 + $0xde0] sm:$0xff]
    %v1103 = vld [vmem:[%s3 + $0xde8] sm:$0xff]
    %v1104 = vld [vmem:[%s3 + $0xdf0] sm:$0xff]
    %v1105 = vld [vmem:[%s3 + $0xdf8] sm:$0xff]
    %v1106 = vld [vmem:[%s3 + $0xe00] sm:$0xff]
    %v1107 = vld [vmem:[%s3 + $0xe08] sm:$0xff]
    %v1108 = vld [vmem:[%s3 + $0xe10] sm:$0xff]
    %v1109 = vld [vmem:[%s3 + $0xe18] sm:$0xff]
    %v1110 = vld [vmem:[%s3 + $0xe20] sm:$0xff]
    %v1111 = vld [vmem:[%s3 + $0xe28] sm:$0xff]
    %v1112 = vld [vmem:[%s3 + $0xe30] sm:$0xff]
    %v1113 = vld [vmem:[%s3 + $0xe38] sm:$0xff]
    %v1114 = vld [vmem:[%s3 + $0xe40] sm:$0xff]
    %v1115 = vld [vmem:[%s3 + $0xe48] sm:$0xff]
    %v1116 = vld [vmem:[%s3 + $0xe50] sm:$0xff]
    %v1117 = vld [vmem:[%s3 + $0xe58] sm:$0xff]
    %v1118 = vld [vmem:[%s3 + $0xe60] sm:$0xff]
    %v1119 = vld [vmem:[%s3 + $0xe68] sm:$0xff]
    %v1120 = vld [vmem:[%s3 + $0xe70] sm:$0xff]
    %v1121 = vld [vmem:[%s3 + $0xe78] sm:$0xff]
    %v1122 = vld [vmem:[%s3 + $0xe80] sm:$0xff]
    %v1123 = vld [vmem:[%s3 + $0xe88] sm:$0xff]
    %v1124 = vld [vmem:[%s3 + $0xe90] sm:$0xff]
    %v1125 = vld [vmem:[%s3 + $0xe98] sm:$0xff]
    %v1126 = vld [vmem:[%s3 + $0xea0] sm:$0xff]
    %v1127 = vld [vmem:[%s3 + $0xea8] sm:$0xff]
    %v1128 = vld [vmem:[%s3 + $0xeb0] sm:$0xff]
    %v1129 = vld [vmem:[%s3 + $0xeb8] sm:$0xff]
    %v1130 = vld [vmem:[%s3 + $0xec0] sm:$0xff]
    %v1131 = vld [vmem:[%s3 + $0xec8] sm:$0xff]
    %v1132 = vld [vmem:[%s3 + $0xed0] sm:$0xff]
    %v1133 = vld [vmem:[%s3 + $0xed8] sm:$0xff]
    %v1134 = vld [vmem:[%s3 + $0xee0] sm:$0xff]
    %v1135 = vld [vmem:[%s3 + $0xee8] sm:$0xff]
    %v1136 = vld [vmem:[%s3 + $0xef0] sm:$0xff]
    %v1137 = vld [vmem:[%s3 + $0xef8] sm:$0xff]
    %v1138 = vld [vmem:[%s3 + $0xf00] sm:$0xff]
    %v1139 = vld [vmem:[%s3 + $0xf08] sm:$0xff]
    %v1140 = vld [vmem:[%s3 + $0xf10] sm:$0xff]
    %v1141 = vld [vmem:[%s3 + $0xf18] sm:$0xff]
    %v1142 = vld [vmem:[%s3 + $0xf20] sm:$0xff]
    %v1143 = vld [vmem:[%s3 + $0xf28] sm:$0xff]
    %v1144 = vld [vmem:[%s3 + $0xf30] sm:$0xff]
    %v1145 = vld [vmem:[%s3 + $0xf38] sm:$0xff]
    %v1146 = vld [vmem:[%s3 + $0xf40] sm:$0xff]
    %v1147 = vld [vmem:[%s3 + $0xf48] sm:$0xff]
    %v1148 = vld [vmem:[%s3 + $0xf50] sm:$0xff]
    %v1149 = vld [vmem:[%s3 + $0xf58] sm:$0xff]
    %v1150 = vld [vmem:[%s3 + $0xf60] sm:$0xff]
    %v1151 = vld [vmem:[%s3 + $0xf68] sm:$0xff]
    %v1152 = vld [vmem:[%s3 + $0xf70] sm:$0xff]
    %v1153 = vld [vmem:[%s3 + $0xf78] sm:$0xff]
    %v1154 = vld [vmem:[%s3 + $0xf80] sm:$0xff]
    %v1155 = vld [vmem:[%s3 + $0xf88] sm:$0xff]
    %v1156 = vld [vmem:[%s3 + $0xf90] sm:$0xff]
    %v1157 = vld [vmem:[%s3 + $0xf98] sm:$0xff]
    %v1158 = vld [vmem:[%s3 + $0xfa0] sm:$0xff]
    %v1159 = vld [vmem:[%s3 + $0xfa8] sm:$0xff]
    %v1160 = vld [vmem:[%s3 + $0xfb0] sm:$0xff]
    %v1161 = vld [vmem:[%s3 + $0xfb8] sm:$0xff]
    %v1162 = vld [vmem:[%s3 + $0xfc0] sm:$0xff]
    %v1163 = vld [vmem:[%s3 + $0xfc8] sm:$0xff]
    %v1164 = vld [vmem:[%s3 + $0xfd0] sm:$0xff]
    %v1165 = vld [vmem:[%s3 + $0xfd8] sm:$0xff]
    %v1166 = vld [vmem:[%s3 + $0xfe0] sm:$0xff]
    %v1167 = vld [vmem:[%s3 + $0xfe8] sm:$0xff]
    %v1168 = vld [vmem:[%s3 + $0xff0] sm:$0xff]
    %v1169 = vld [vmem:[%s3 + $0xff8] sm:$0xff]
    %v1170 = vld [vmem:[%s4] sm:$0xff]
    %v1172 = vlaneseq
    %v1173 = vshrl.u32 %v1172, 7
    %v1174 = vsub.s32 0, %v1173
    %v1175 = vrot.slane %v1170, %v1174
    %v1176 = vlaneseq
    %v1177 = vshrl.u32 %v1176, 7
    %v1178 = vsub.s32 1, %v1177
    %v1179 = vrot.slane %v1170, %v1178
    %v1180 = vlaneseq
    %v1181 = vshrl.u32 %v1180, 7
    %v1182 = vsub.s32 2, %v1181
    %v1183 = vrot.slane %v1170, %v1182
    %v1184 = vlaneseq
    %v1185 = vshrl.u32 %v1184, 7
    %v1186 = vsub.s32 3, %v1185
    %v1187 = vrot.slane %v1170, %v1186
    %v1188 = vlaneseq
    %v1189 = vshrl.u32 %v1188, 7
    %v1190 = vsub.s32 4, %v1189
    %v1191 = vrot.slane %v1170, %v1190
    %v1192 = vlaneseq
    %v1193 = vshrl.u32 %v1192, 7
    %v1194 = vsub.s32 5, %v1193
    %v1195 = vrot.slane %v1170, %v1194
    %v1196 = vlaneseq
    %v1197 = vshrl.u32 %v1196, 7
    %v1198 = vsub.s32 6, %v1197
    %v1199 = vrot.slane %v1170, %v1198
    %v1200 = vlaneseq
    %v1201 = vshrl.u32 %v1200, 7
    %v1202 = vsub.s32 7, %v1201
    %v1203 = vrot.slane %v1170, %v1202
    %v1724 = vunpack.c.l.b16 %v658
    %v1725 = vunpack.c.h.b16 %v658
    %v1726 = vunpack.c.l.b16 %v659
    %v1727 = vunpack.c.h.b16 %v659
    %v1728 = vunpack.c.l.b16 %v660
    %v1729 = vunpack.c.h.b16 %v660
    %v1730 = vunpack.c.l.b16 %v661
    %v1731 = vunpack.c.h.b16 %v661
    %v1732 = vunpack.c.l.b16 %v662
    %v1733 = vunpack.c.h.b16 %v662
    %v1734 = vunpack.c.l.b16 %v663
    %v1735 = vunpack.c.h.b16 %v663
    %v1736 = vunpack.c.l.b16 %v664
    %v1737 = vunpack.c.h.b16 %v664
    %v1738 = vunpack.c.l.b16 %v665
    %v1739 = vunpack.c.h.b16 %v665
    %v1740 = vunpack.c.l.b16 %v666
    %v1741 = vunpack.c.h.b16 %v666
    %v1742 = vunpack.c.l.b16 %v667
    %v1743 = vunpack.c.h.b16 %v667
    %v1744 = vunpack.c.l.b16 %v668
    %v1745 = vunpack.c.h.b16 %v668
    %v1746 = vunpack.c.l.b16 %v669
    %v1747 = vunpack.c.h.b16 %v669
    %v1748 = vunpack.c.l.b16 %v670
    %v1749 = vunpack.c.h.b16 %v670
    %v1750 = vunpack.c.l.b16 %v671
    %v1751 = vunpack.c.h.b16 %v671
    %v1752 = vunpack.c.l.b16 %v672
    %v1753 = vunpack.c.h.b16 %v672
    %v1754 = vunpack.c.l.b16 %v673
    %v1755 = vunpack.c.h.b16 %v673
    %v1756 = vunpack.c.l.b16 %v674
    %v1757 = vunpack.c.h.b16 %v674
    %v1758 = vunpack.c.l.b16 %v675
    %v1759 = vunpack.c.h.b16 %v675
    %v1760 = vunpack.c.l.b16 %v676
    %v1761 = vunpack.c.h.b16 %v676
    %v1762 = vunpack.c.l.b16 %v677
    %v1763 = vunpack.c.h.b16 %v677
    %v1764 = vunpack.c.l.b16 %v678
    %v1765 = vunpack.c.h.b16 %v678
    %v1766 = vunpack.c.l.b16 %v679
    %v1767 = vunpack.c.h.b16 %v679
    %v1768 = vunpack.c.l.b16 %v680
    %v1769 = vunpack.c.h.b16 %v680
    %v1770 = vunpack.c.l.b16 %v681
    %v1771 = vunpack.c.h.b16 %v681
    %v1772 = vunpack.c.l.b16 %v682
    %v1773 = vunpack.c.h.b16 %v682
    %v1774 = vunpack.c.l.b16 %v683
    %v1775 = vunpack.c.h.b16 %v683
    %v1776 = vunpack.c.l.b16 %v684
    %v1777 = vunpack.c.h.b16 %v684
    %v1778 = vunpack.c.l.b16 %v685
    %v1779 = vunpack.c.h.b16 %v685
    %v1780 = vunpack.c.l.b16 %v686
    %v1781 = vunpack.c.h.b16 %v686
    %v1782 = vunpack.c.l.b16 %v687
    %v1783 = vunpack.c.h.b16 %v687
    %v1784 = vunpack.c.l.b16 %v688
    %v1785 = vunpack.c.h.b16 %v688
    %v1786 = vunpack.c.l.b16 %v689
    %v1787 = vunpack.c.h.b16 %v689
    %v1788 = vunpack.c.l.b16 %v690
    %v1789 = vunpack.c.h.b16 %v690
    %v1790 = vunpack.c.l.b16 %v691
    %v1791 = vunpack.c.h.b16 %v691
    %v1792 = vunpack.c.l.b16 %v692
    %v1793 = vunpack.c.h.b16 %v692
    %v1794 = vunpack.c.l.b16 %v693
    %v1795 = vunpack.c.h.b16 %v693
    %v1796 = vunpack.c.l.b16 %v694
    %v1797 = vunpack.c.h.b16 %v694
    %v1798 = vunpack.c.l.b16 %v695
    %v1799 = vunpack.c.h.b16 %v695
    %v1800 = vunpack.c.l.b16 %v696
    %v1801 = vunpack.c.h.b16 %v696
    %v1802 = vunpack.c.l.b16 %v697
    %v1803 = vunpack.c.h.b16 %v697
    %v1804 = vunpack.c.l.b16 %v698
    %v1805 = vunpack.c.h.b16 %v698
    %v1806 = vunpack.c.l.b16 %v699
    %v1807 = vunpack.c.h.b16 %v699
    %v1808 = vunpack.c.l.b16 %v700
    %v1809 = vunpack.c.h.b16 %v700
    %v1810 = vunpack.c.l.b16 %v701
    %v1811 = vunpack.c.h.b16 %v701
    %v1812 = vunpack.c.l.b16 %v702
    %v1813 = vunpack.c.h.b16 %v702
    %v1814 = vunpack.c.l.b16 %v703
    %v1815 = vunpack.c.h.b16 %v703
    %v1816 = vunpack.c.l.b16 %v704
    %v1817 = vunpack.c.h.b16 %v704
    %v1818 = vunpack.c.l.b16 %v705
    %v1819 = vunpack.c.h.b16 %v705
    %v1820 = vunpack.c.l.b16 %v706
    %v1821 = vunpack.c.h.b16 %v706
    %v1822 = vunpack.c.l.b16 %v707
    %v1823 = vunpack.c.h.b16 %v707
    %v1824 = vunpack.c.l.b16 %v708
    %v1825 = vunpack.c.h.b16 %v708
    %v1826 = vunpack.c.l.b16 %v709
    %v1827 = vunpack.c.h.b16 %v709
    %v1828 = vunpack.c.l.b16 %v710
    %v1829 = vunpack.c.h.b16 %v710
    %v1830 = vunpack.c.l.b16 %v711
    %v1831 = vunpack.c.h.b16 %v711
    %v1832 = vunpack.c.l.b16 %v712
    %v1833 = vunpack.c.h.b16 %v712
    %v1834 = vunpack.c.l.b16 %v713
    %v1835 = vunpack.c.h.b16 %v713
    %v1836 = vunpack.c.l.b16 %v714
    %v1837 = vunpack.c.h.b16 %v714
    %v1838 = vunpack.c.l.b16 %v715
    %v1839 = vunpack.c.h.b16 %v715
    %v1840 = vunpack.c.l.b16 %v716
    %v1841 = vunpack.c.h.b16 %v716
    %v1842 = vunpack.c.l.b16 %v717
    %v1843 = vunpack.c.h.b16 %v717
    %v1844 = vunpack.c.l.b16 %v718
    %v1845 = vunpack.c.h.b16 %v718
    %v1846 = vunpack.c.l.b16 %v719
    %v1847 = vunpack.c.h.b16 %v719
    %v1848 = vunpack.c.l.b16 %v720
    %v1849 = vunpack.c.h.b16 %v720
    %v1850 = vunpack.c.l.b16 %v721
    %v1851 = vunpack.c.h.b16 %v721
    %v1852 = vunpack.c.l.b16 %v722
    %v1853 = vunpack.c.h.b16 %v722
    %v1854 = vunpack.c.l.b16 %v723
    %v1855 = vunpack.c.h.b16 %v723
    %v1856 = vunpack.c.l.b16 %v724
    %v1857 = vunpack.c.h.b16 %v724
    %v1858 = vunpack.c.l.b16 %v725
    %v1859 = vunpack.c.h.b16 %v725
    %v1860 = vunpack.c.l.b16 %v726
    %v1861 = vunpack.c.h.b16 %v726
    %v1862 = vunpack.c.l.b16 %v727
    %v1863 = vunpack.c.h.b16 %v727
    %v1864 = vunpack.c.l.b16 %v728
    %v1865 = vunpack.c.h.b16 %v728
    %v1866 = vunpack.c.l.b16 %v729
    %v1867 = vunpack.c.h.b16 %v729
    %v1868 = vunpack.c.l.b16 %v730
    %v1869 = vunpack.c.h.b16 %v730
    %v1870 = vunpack.c.l.b16 %v731
    %v1871 = vunpack.c.h.b16 %v731
    %v1872 = vunpack.c.l.b16 %v732
    %v1873 = vunpack.c.h.b16 %v732
    %v1874 = vunpack.c.l.b16 %v733
    %v1875 = vunpack.c.h.b16 %v733
    %v1876 = vunpack.c.l.b16 %v734
    %v1877 = vunpack.c.h.b16 %v734
    %v1878 = vunpack.c.l.b16 %v735
    %v1879 = vunpack.c.h.b16 %v735
    %v1880 = vunpack.c.l.b16 %v736
    %v1881 = vunpack.c.h.b16 %v736
    %v1882 = vunpack.c.l.b16 %v737
    %v1883 = vunpack.c.h.b16 %v737
    %v1884 = vunpack.c.l.b16 %v738
    %v1885 = vunpack.c.h.b16 %v738
    %v1886 = vunpack.c.l.b16 %v739
    %v1887 = vunpack.c.h.b16 %v739
    %v1888 = vunpack.c.l.b16 %v740
    %v1889 = vunpack.c.h.b16 %v740
    %v1890 = vunpack.c.l.b16 %v741
    %v1891 = vunpack.c.h.b16 %v741
    %v1892 = vunpack.c.l.b16 %v742
    %v1893 = vunpack.c.h.b16 %v742
    %v1894 = vunpack.c.l.b16 %v743
    %v1895 = vunpack.c.h.b16 %v743
    %v1896 = vunpack.c.l.b16 %v744
    %v1897 = vunpack.c.h.b16 %v744
    %v1898 = vunpack.c.l.b16 %v745
    %v1899 = vunpack.c.h.b16 %v745
    %v1900 = vunpack.c.l.b16 %v746
    %v1901 = vunpack.c.h.b16 %v746
    %v1902 = vunpack.c.l.b16 %v747
    %v1903 = vunpack.c.h.b16 %v747
    %v1904 = vunpack.c.l.b16 %v748
    %v1905 = vunpack.c.h.b16 %v748
    %v1906 = vunpack.c.l.b16 %v749
    %v1907 = vunpack.c.h.b16 %v749
    %v1908 = vunpack.c.l.b16 %v750
    %v1909 = vunpack.c.h.b16 %v750
    %v1910 = vunpack.c.l.b16 %v751
    %v1911 = vunpack.c.h.b16 %v751
    %v1912 = vunpack.c.l.b16 %v752
    %v1913 = vunpack.c.h.b16 %v752
    %v1914 = vunpack.c.l.b16 %v753
    %v1915 = vunpack.c.h.b16 %v753
    %v1916 = vunpack.c.l.b16 %v754
    %v1917 = vunpack.c.h.b16 %v754
    %v1918 = vunpack.c.l.b16 %v755
    %v1919 = vunpack.c.h.b16 %v755
    %v1920 = vunpack.c.l.b16 %v756
    %v1921 = vunpack.c.h.b16 %v756
    %v1922 = vunpack.c.l.b16 %v757
    %v1923 = vunpack.c.h.b16 %v757
    %v1924 = vunpack.c.l.b16 %v758
    %v1925 = vunpack.c.h.b16 %v758
    %v1926 = vunpack.c.l.b16 %v759
    %v1927 = vunpack.c.h.b16 %v759
    %v1928 = vunpack.c.l.b16 %v760
    %v1929 = vunpack.c.h.b16 %v760
    %v1930 = vunpack.c.l.b16 %v761
    %v1931 = vunpack.c.h.b16 %v761
    %v1932 = vunpack.c.l.b16 %v762
    %v1933 = vunpack.c.h.b16 %v762
    %v1934 = vunpack.c.l.b16 %v763
    %v1935 = vunpack.c.h.b16 %v763
    %v1936 = vunpack.c.l.b16 %v764
    %v1937 = vunpack.c.h.b16 %v764
    %v1938 = vunpack.c.l.b16 %v765
    %v1939 = vunpack.c.h.b16 %v765
    %v1940 = vunpack.c.l.b16 %v766
    %v1941 = vunpack.c.h.b16 %v766
    %v1942 = vunpack.c.l.b16 %v767
    %v1943 = vunpack.c.h.b16 %v767
    %v1944 = vunpack.c.l.b16 %v768
    %v1945 = vunpack.c.h.b16 %v768
    %v1946 = vunpack.c.l.b16 %v769
    %v1947 = vunpack.c.h.b16 %v769
    %v1948 = vunpack.c.l.b16 %v770
    %v1949 = vunpack.c.h.b16 %v770
    %v1950 = vunpack.c.l.b16 %v771
    %v1951 = vunpack.c.h.b16 %v771
    %v1952 = vunpack.c.l.b16 %v772
    %v1953 = vunpack.c.h.b16 %v772
    %v1954 = vunpack.c.l.b16 %v773
    %v1955 = vunpack.c.h.b16 %v773
    %v1956 = vunpack.c.l.b16 %v774
    %v1957 = vunpack.c.h.b16 %v774
    %v1958 = vunpack.c.l.b16 %v775
    %v1959 = vunpack.c.h.b16 %v775
    %v1960 = vunpack.c.l.b16 %v776
    %v1961 = vunpack.c.h.b16 %v776
    %v1962 = vunpack.c.l.b16 %v777
    %v1963 = vunpack.c.h.b16 %v777
    %v1964 = vunpack.c.l.b16 %v778
    %v1965 = vunpack.c.h.b16 %v778
    %v1966 = vunpack.c.l.b16 %v779
    %v1967 = vunpack.c.h.b16 %v779
    %v1968 = vunpack.c.l.b16 %v780
    %v1969 = vunpack.c.h.b16 %v780
    %v1970 = vunpack.c.l.b16 %v781
    %v1971 = vunpack.c.h.b16 %v781
    %v1972 = vunpack.c.l.b16 %v782
    %v1973 = vunpack.c.h.b16 %v782
    %v1974 = vunpack.c.l.b16 %v783
    %v1975 = vunpack.c.h.b16 %v783
    %v1976 = vunpack.c.l.b16 %v784
    %v1977 = vunpack.c.h.b16 %v784
    %v1978 = vunpack.c.l.b16 %v785
    %v1979 = vunpack.c.h.b16 %v785
    %v1980 = vunpack.c.l.b16 %v786
    %v1981 = vunpack.c.h.b16 %v786
    %v1982 = vunpack.c.l.b16 %v787
    %v1983 = vunpack.c.h.b16 %v787
    %v1984 = vunpack.c.l.b16 %v788
    %v1985 = vunpack.c.h.b16 %v788
    %v1986 = vunpack.c.l.b16 %v789
    %v1987 = vunpack.c.h.b16 %v789
    %v1988 = vunpack.c.l.b16 %v790
    %v1989 = vunpack.c.h.b16 %v790
    %v1990 = vunpack.c.l.b16 %v791
    %v1991 = vunpack.c.h.b16 %v791
    %v1992 = vunpack.c.l.b16 %v792
    %v1993 = vunpack.c.h.b16 %v792
    %v1994 = vunpack.c.l.b16 %v793
    %v1995 = vunpack.c.h.b16 %v793
    %v1996 = vunpack.c.l.b16 %v794
    %v1997 = vunpack.c.h.b16 %v794
    %v1998 = vunpack.c.l.b16 %v795
    %v1999 = vunpack.c.h.b16 %v795
    %v2000 = vunpack.c.l.b16 %v796
    %v2001 = vunpack.c.h.b16 %v796
    %v2002 = vunpack.c.l.b16 %v797
    %v2003 = vunpack.c.h.b16 %v797
    %v2004 = vunpack.c.l.b16 %v798
    %v2005 = vunpack.c.h.b16 %v798
    %v2006 = vunpack.c.l.b16 %v799
    %v2007 = vunpack.c.h.b16 %v799
    %v2008 = vunpack.c.l.b16 %v800
    %v2009 = vunpack.c.h.b16 %v800
    %v2010 = vunpack.c.l.b16 %v801
    %v2011 = vunpack.c.h.b16 %v801
    %v2012 = vunpack.c.l.b16 %v802
    %v2013 = vunpack.c.h.b16 %v802
    %v2014 = vunpack.c.l.b16 %v803
    %v2015 = vunpack.c.h.b16 %v803
    %v2016 = vunpack.c.l.b16 %v804
    %v2017 = vunpack.c.h.b16 %v804
    %v2018 = vunpack.c.l.b16 %v805
    %v2019 = vunpack.c.h.b16 %v805
    %v2020 = vunpack.c.l.b16 %v806
    %v2021 = vunpack.c.h.b16 %v806
    %v2022 = vunpack.c.l.b16 %v807
    %v2023 = vunpack.c.h.b16 %v807
    %v2024 = vunpack.c.l.b16 %v808
    %v2025 = vunpack.c.h.b16 %v808
    %v2026 = vunpack.c.l.b16 %v809
    %v2027 = vunpack.c.h.b16 %v809
    %v2028 = vunpack.c.l.b16 %v810
    %v2029 = vunpack.c.h.b16 %v810
    %v2030 = vunpack.c.l.b16 %v811
    %v2031 = vunpack.c.h.b16 %v811
    %v2032 = vunpack.c.l.b16 %v812
    %v2033 = vunpack.c.h.b16 %v812
    %v2034 = vunpack.c.l.b16 %v813
    %v2035 = vunpack.c.h.b16 %v813
    %v2036 = vunpack.c.l.b16 %v814
    %v2037 = vunpack.c.h.b16 %v814
    %v2038 = vunpack.c.l.b16 %v815
    %v2039 = vunpack.c.h.b16 %v815
    %v2040 = vunpack.c.l.b16 %v816
    %v2041 = vunpack.c.h.b16 %v816
    %v2042 = vunpack.c.l.b16 %v817
    %v2043 = vunpack.c.h.b16 %v817
    %v2044 = vunpack.c.l.b16 %v818
    %v2045 = vunpack.c.h.b16 %v818
    %v2046 = vunpack.c.l.b16 %v819
    %v2047 = vunpack.c.h.b16 %v819
    %v2048 = vunpack.c.l.b16 %v820
    %v2049 = vunpack.c.h.b16 %v820
    %v2050 = vunpack.c.l.b16 %v821
    %v2051 = vunpack.c.h.b16 %v821
    %v2052 = vunpack.c.l.b16 %v822
    %v2053 = vunpack.c.h.b16 %v822
    %v2054 = vunpack.c.l.b16 %v823
    %v2055 = vunpack.c.h.b16 %v823
    %v2056 = vunpack.c.l.b16 %v824
    %v2057 = vunpack.c.h.b16 %v824
    %v2058 = vunpack.c.l.b16 %v825
    %v2059 = vunpack.c.h.b16 %v825
    %v2060 = vunpack.c.l.b16 %v826
    %v2061 = vunpack.c.h.b16 %v826
    %v2062 = vunpack.c.l.b16 %v827
    %v2063 = vunpack.c.h.b16 %v827
    %v2064 = vunpack.c.l.b16 %v828
    %v2065 = vunpack.c.h.b16 %v828
    %v2066 = vunpack.c.l.b16 %v829
    %v2067 = vunpack.c.h.b16 %v829
    %v2068 = vunpack.c.l.b16 %v830
    %v2069 = vunpack.c.h.b16 %v830
    %v2070 = vunpack.c.l.b16 %v831
    %v2071 = vunpack.c.h.b16 %v831
    %v2072 = vunpack.c.l.b16 %v832
    %v2073 = vunpack.c.h.b16 %v832
    %v2074 = vunpack.c.l.b16 %v833
    %v2075 = vunpack.c.h.b16 %v833
    %v2076 = vunpack.c.l.b16 %v834
    %v2077 = vunpack.c.h.b16 %v834
    %v2078 = vunpack.c.l.b16 %v835
    %v2079 = vunpack.c.h.b16 %v835
    %v2080 = vunpack.c.l.b16 %v836
    %v2081 = vunpack.c.h.b16 %v836
    %v2082 = vunpack.c.l.b16 %v837
    %v2083 = vunpack.c.h.b16 %v837
    %v2084 = vunpack.c.l.b16 %v838
    %v2085 = vunpack.c.h.b16 %v838
    %v2086 = vunpack.c.l.b16 %v839
    %v2087 = vunpack.c.h.b16 %v839
    %v2088 = vunpack.c.l.b16 %v840
    %v2089 = vunpack.c.h.b16 %v840
    %v2090 = vunpack.c.l.b16 %v841
    %v2091 = vunpack.c.h.b16 %v841
    %v2092 = vunpack.c.l.b16 %v842
    %v2093 = vunpack.c.h.b16 %v842
    %v2094 = vunpack.c.l.b16 %v843
    %v2095 = vunpack.c.h.b16 %v843
    %v2096 = vunpack.c.l.b16 %v844
    %v2097 = vunpack.c.h.b16 %v844
    %v2098 = vunpack.c.l.b16 %v845
    %v2099 = vunpack.c.h.b16 %v845
    %v2100 = vunpack.c.l.b16 %v846
    %v2101 = vunpack.c.h.b16 %v846
    %v2102 = vunpack.c.l.b16 %v847
    %v2103 = vunpack.c.h.b16 %v847
    %v2104 = vunpack.c.l.b16 %v848
    %v2105 = vunpack.c.h.b16 %v848
    %v2106 = vunpack.c.l.b16 %v849
    %v2107 = vunpack.c.h.b16 %v849
    %v2108 = vunpack.c.l.b16 %v850
    %v2109 = vunpack.c.h.b16 %v850
    %v2110 = vunpack.c.l.b16 %v851
    %v2111 = vunpack.c.h.b16 %v851
    %v2112 = vunpack.c.l.b16 %v852
    %v2113 = vunpack.c.h.b16 %v852
    %v2114 = vunpack.c.l.b16 %v853
    %v2115 = vunpack.c.h.b16 %v853
    %v2116 = vunpack.c.l.b16 %v854
    %v2117 = vunpack.c.h.b16 %v854
    %v2118 = vunpack.c.l.b16 %v855
    %v2119 = vunpack.c.h.b16 %v855
    %v2120 = vunpack.c.l.b16 %v856
    %v2121 = vunpack.c.h.b16 %v856
    %v2122 = vunpack.c.l.b16 %v857
    %v2123 = vunpack.c.h.b16 %v857
    %v2124 = vunpack.c.l.b16 %v858
    %v2125 = vunpack.c.h.b16 %v858
    %v2126 = vunpack.c.l.b16 %v859
    %v2127 = vunpack.c.h.b16 %v859
    %v2128 = vunpack.c.l.b16 %v860
    %v2129 = vunpack.c.h.b16 %v860
    %v2130 = vunpack.c.l.b16 %v861
    %v2131 = vunpack.c.h.b16 %v861
    %v2132 = vunpack.c.l.b16 %v862
    %v2133 = vunpack.c.h.b16 %v862
    %v2134 = vunpack.c.l.b16 %v863
    %v2135 = vunpack.c.h.b16 %v863
    %v2136 = vunpack.c.l.b16 %v864
    %v2137 = vunpack.c.h.b16 %v864
    %v2138 = vunpack.c.l.b16 %v865
    %v2139 = vunpack.c.h.b16 %v865
    %v2140 = vunpack.c.l.b16 %v866
    %v2141 = vunpack.c.h.b16 %v866
    %v2142 = vunpack.c.l.b16 %v867
    %v2143 = vunpack.c.h.b16 %v867
    %v2144 = vunpack.c.l.b16 %v868
    %v2145 = vunpack.c.h.b16 %v868
    %v2146 = vunpack.c.l.b16 %v869
    %v2147 = vunpack.c.h.b16 %v869
    %v2148 = vunpack.c.l.b16 %v870
    %v2149 = vunpack.c.h.b16 %v870
    %v2150 = vunpack.c.l.b16 %v871
    %v2151 = vunpack.c.h.b16 %v871
    %v2152 = vunpack.c.l.b16 %v872
    %v2153 = vunpack.c.h.b16 %v872
    %v2154 = vunpack.c.l.b16 %v873
    %v2155 = vunpack.c.h.b16 %v873
    %v2156 = vunpack.c.l.b16 %v874
    %v2157 = vunpack.c.h.b16 %v874
    %v2158 = vunpack.c.l.b16 %v875
    %v2159 = vunpack.c.h.b16 %v875
    %v2160 = vunpack.c.l.b16 %v876
    %v2161 = vunpack.c.h.b16 %v876
    %v2162 = vunpack.c.l.b16 %v877
    %v2163 = vunpack.c.h.b16 %v877
    %v2164 = vunpack.c.l.b16 %v878
    %v2165 = vunpack.c.h.b16 %v878
    %v2166 = vunpack.c.l.b16 %v879
    %v2167 = vunpack.c.h.b16 %v879
    %v2168 = vunpack.c.l.b16 %v880
    %v2169 = vunpack.c.h.b16 %v880
    %v2170 = vunpack.c.l.b16 %v881
    %v2171 = vunpack.c.h.b16 %v881
    %v2172 = vunpack.c.l.b16 %v882
    %v2173 = vunpack.c.h.b16 %v882
    %v2174 = vunpack.c.l.b16 %v883
    %v2175 = vunpack.c.h.b16 %v883
    %v2176 = vunpack.c.l.b16 %v884
    %v2177 = vunpack.c.h.b16 %v884
    %v2178 = vunpack.c.l.b16 %v885
    %v2179 = vunpack.c.h.b16 %v885
    %v2180 = vunpack.c.l.b16 %v886
    %v2181 = vunpack.c.h.b16 %v886
    %v2182 = vunpack.c.l.b16 %v887
    %v2183 = vunpack.c.h.b16 %v887
    %v2184 = vunpack.c.l.b16 %v888
    %v2185 = vunpack.c.h.b16 %v888
    %v2186 = vunpack.c.l.b16 %v889
    %v2187 = vunpack.c.h.b16 %v889
    %v2188 = vunpack.c.l.b16 %v890
    %v2189 = vunpack.c.h.b16 %v890
    %v2190 = vunpack.c.l.b16 %v891
    %v2191 = vunpack.c.h.b16 %v891
    %v2192 = vunpack.c.l.b16 %v892
    %v2193 = vunpack.c.h.b16 %v892
    %v2194 = vunpack.c.l.b16 %v893
    %v2195 = vunpack.c.h.b16 %v893
    %v2196 = vunpack.c.l.b16 %v894
    %v2197 = vunpack.c.h.b16 %v894
    %v2198 = vunpack.c.l.b16 %v895
    %v2199 = vunpack.c.h.b16 %v895
    %v2200 = vunpack.c.l.b16 %v896
    %v2201 = vunpack.c.h.b16 %v896
    %v2202 = vunpack.c.l.b16 %v897
    %v2203 = vunpack.c.h.b16 %v897
    %v2204 = vunpack.c.l.b16 %v898
    %v2205 = vunpack.c.h.b16 %v898
    %v2206 = vunpack.c.l.b16 %v899
    %v2207 = vunpack.c.h.b16 %v899
    %v2208 = vunpack.c.l.b16 %v900
    %v2209 = vunpack.c.h.b16 %v900
    %v2210 = vunpack.c.l.b16 %v901
    %v2211 = vunpack.c.h.b16 %v901
    %v2212 = vunpack.c.l.b16 %v902
    %v2213 = vunpack.c.h.b16 %v902
    %v2214 = vunpack.c.l.b16 %v903
    %v2215 = vunpack.c.h.b16 %v903
    %v2216 = vunpack.c.l.b16 %v904
    %v2217 = vunpack.c.h.b16 %v904
    %v2218 = vunpack.c.l.b16 %v905
    %v2219 = vunpack.c.h.b16 %v905
    %v2220 = vunpack.c.l.b16 %v906
    %v2221 = vunpack.c.h.b16 %v906
    %v2222 = vunpack.c.l.b16 %v907
    %v2223 = vunpack.c.h.b16 %v907
    %v2224 = vunpack.c.l.b16 %v908
    %v2225 = vunpack.c.h.b16 %v908
    %v2226 = vunpack.c.l.b16 %v909
    %v2227 = vunpack.c.h.b16 %v909
    %v2228 = vunpack.c.l.b16 %v910
    %v2229 = vunpack.c.h.b16 %v910
    %v2230 = vunpack.c.l.b16 %v911
    %v2231 = vunpack.c.h.b16 %v911
    %v2232 = vunpack.c.l.b16 %v912
    %v2233 = vunpack.c.h.b16 %v912
    %v2234 = vunpack.c.l.b16 %v913
    %v2235 = vunpack.c.h.b16 %v913
    %v2236 = vunpack.c.l.b16 %v914
    %v2237 = vunpack.c.h.b16 %v914
    %v2238 = vunpack.c.l.b16 %v915
    %v2239 = vunpack.c.h.b16 %v915
    %v2240 = vunpack.c.l.b16 %v916
    %v2241 = vunpack.c.h.b16 %v916
    %v2242 = vunpack.c.l.b16 %v917
    %v2243 = vunpack.c.h.b16 %v917
    %v2244 = vunpack.c.l.b16 %v918
    %v2245 = vunpack.c.h.b16 %v918
    %v2246 = vunpack.c.l.b16 %v919
    %v2247 = vunpack.c.h.b16 %v919
    %v2248 = vunpack.c.l.b16 %v920
    %v2249 = vunpack.c.h.b16 %v920
    %v2250 = vunpack.c.l.b16 %v921
    %v2251 = vunpack.c.h.b16 %v921
    %v2252 = vunpack.c.l.b16 %v922
    %v2253 = vunpack.c.h.b16 %v922
    %v2254 = vunpack.c.l.b16 %v923
    %v2255 = vunpack.c.h.b16 %v923
    %v2256 = vunpack.c.l.b16 %v924
    %v2257 = vunpack.c.h.b16 %v924
    %v2258 = vunpack.c.l.b16 %v925
    %v2259 = vunpack.c.h.b16 %v925
    %v2260 = vunpack.c.l.b16 %v926
    %v2261 = vunpack.c.h.b16 %v926
    %v2262 = vunpack.c.l.b16 %v927
    %v2263 = vunpack.c.h.b16 %v927
    %v2264 = vunpack.c.l.b16 %v928
    %v2265 = vunpack.c.h.b16 %v928
    %v2266 = vunpack.c.l.b16 %v929
    %v2267 = vunpack.c.h.b16 %v929
    %v2268 = vunpack.c.l.b16 %v930
    %v2269 = vunpack.c.h.b16 %v930
    %v2270 = vunpack.c.l.b16 %v931
    %v2271 = vunpack.c.h.b16 %v931
    %v2272 = vunpack.c.l.b16 %v932
    %v2273 = vunpack.c.h.b16 %v932
    %v2274 = vunpack.c.l.b16 %v933
    %v2275 = vunpack.c.h.b16 %v933
    %v2276 = vunpack.c.l.b16 %v934
    %v2277 = vunpack.c.h.b16 %v934
    %v2278 = vunpack.c.l.b16 %v935
    %v2279 = vunpack.c.h.b16 %v935
    %v2280 = vunpack.c.l.b16 %v936
    %v2281 = vunpack.c.h.b16 %v936
    %v2282 = vunpack.c.l.b16 %v937
    %v2283 = vunpack.c.h.b16 %v937
    %v2284 = vunpack.c.l.b16 %v938
    %v2285 = vunpack.c.h.b16 %v938
    %v2286 = vunpack.c.l.b16 %v939
    %v2287 = vunpack.c.h.b16 %v939
    %v2288 = vunpack.c.l.b16 %v940
    %v2289 = vunpack.c.h.b16 %v940
    %v2290 = vunpack.c.l.b16 %v941
    %v2291 = vunpack.c.h.b16 %v941
    %v2292 = vunpack.c.l.b16 %v942
    %v2293 = vunpack.c.h.b16 %v942
    %v2294 = vunpack.c.l.b16 %v943
    %v2295 = vunpack.c.h.b16 %v943
    %v2296 = vunpack.c.l.b16 %v944
    %v2297 = vunpack.c.h.b16 %v944
    %v2298 = vunpack.c.l.b16 %v945
    %v2299 = vunpack.c.h.b16 %v945
    %v2300 = vunpack.c.l.b16 %v946
    %v2301 = vunpack.c.h.b16 %v946
    %v2302 = vunpack.c.l.b16 %v947
    %v2303 = vunpack.c.h.b16 %v947
    %v2304 = vunpack.c.l.b16 %v948
    %v2305 = vunpack.c.h.b16 %v948
    %v2306 = vunpack.c.l.b16 %v949
    %v2307 = vunpack.c.h.b16 %v949
    %v2308 = vunpack.c.l.b16 %v950
    %v2309 = vunpack.c.h.b16 %v950
    %v2310 = vunpack.c.l.b16 %v951
    %v2311 = vunpack.c.h.b16 %v951
    %v2312 = vunpack.c.l.b16 %v952
    %v2313 = vunpack.c.h.b16 %v952
    %v2314 = vunpack.c.l.b16 %v953
    %v2315 = vunpack.c.h.b16 %v953
    %v2316 = vunpack.c.l.b16 %v954
    %v2317 = vunpack.c.h.b16 %v954
    %v2318 = vunpack.c.l.b16 %v955
    %v2319 = vunpack.c.h.b16 %v955
    %v2320 = vunpack.c.l.b16 %v956
    %v2321 = vunpack.c.h.b16 %v956
    %v2322 = vunpack.c.l.b16 %v957
    %v2323 = vunpack.c.h.b16 %v957
    %v2324 = vunpack.c.l.b16 %v958
    %v2325 = vunpack.c.h.b16 %v958
    %v2326 = vunpack.c.l.b16 %v959
    %v2327 = vunpack.c.h.b16 %v959
    %v2328 = vunpack.c.l.b16 %v960
    %v2329 = vunpack.c.h.b16 %v960
    %v2330 = vunpack.c.l.b16 %v961
    %v2331 = vunpack.c.h.b16 %v961
    %v2332 = vunpack.c.l.b16 %v962
    %v2333 = vunpack.c.h.b16 %v962
    %v2334 = vunpack.c.l.b16 %v963
    %v2335 = vunpack.c.h.b16 %v963
    %v2336 = vunpack.c.l.b16 %v964
    %v2337 = vunpack.c.h.b16 %v964
    %v2338 = vunpack.c.l.b16 %v965
    %v2339 = vunpack.c.h.b16 %v965
    %v2340 = vunpack.c.l.b16 %v966
    %v2341 = vunpack.c.h.b16 %v966
    %v2342 = vunpack.c.l.b16 %v967
    %v2343 = vunpack.c.h.b16 %v967
    %v2344 = vunpack.c.l.b16 %v968
    %v2345 = vunpack.c.h.b16 %v968
    %v2346 = vunpack.c.l.b16 %v969
    %v2347 = vunpack.c.h.b16 %v969
    %v2348 = vunpack.c.l.b16 %v970
    %v2349 = vunpack.c.h.b16 %v970
    %v2350 = vunpack.c.l.b16 %v971
    %v2351 = vunpack.c.h.b16 %v971
    %v2352 = vunpack.c.l.b16 %v972
    %v2353 = vunpack.c.h.b16 %v972
    %v2354 = vunpack.c.l.b16 %v973
    %v2355 = vunpack.c.h.b16 %v973
    %v2356 = vunpack.c.l.b16 %v974
    %v2357 = vunpack.c.h.b16 %v974
    %v2358 = vunpack.c.l.b16 %v975
    %v2359 = vunpack.c.h.b16 %v975
    %v2360 = vunpack.c.l.b16 %v976
    %v2361 = vunpack.c.h.b16 %v976
    %v2362 = vunpack.c.l.b16 %v977
    %v2363 = vunpack.c.h.b16 %v977
    %v2364 = vunpack.c.l.b16 %v978
    %v2365 = vunpack.c.h.b16 %v978
    %v2366 = vunpack.c.l.b16 %v979
    %v2367 = vunpack.c.h.b16 %v979
    %v2368 = vunpack.c.l.b16 %v980
    %v2369 = vunpack.c.h.b16 %v980
    %v2370 = vunpack.c.l.b16 %v981
    %v2371 = vunpack.c.h.b16 %v981
    %v2372 = vunpack.c.l.b16 %v982
    %v2373 = vunpack.c.h.b16 %v982
    %v2374 = vunpack.c.l.b16 %v983
    %v2375 = vunpack.c.h.b16 %v983
    %v2376 = vunpack.c.l.b16 %v984
    %v2377 = vunpack.c.h.b16 %v984
    %v2378 = vunpack.c.l.b16 %v985
    %v2379 = vunpack.c.h.b16 %v985
    %v2380 = vunpack.c.l.b16 %v986
    %v2381 = vunpack.c.h.b16 %v986
    %v2382 = vunpack.c.l.b16 %v987
    %v2383 = vunpack.c.h.b16 %v987
    %v2384 = vunpack.c.l.b16 %v988
    %v2385 = vunpack.c.h.b16 %v988
    %v2386 = vunpack.c.l.b16 %v989
    %v2387 = vunpack.c.h.b16 %v989
    %v2388 = vunpack.c.l.b16 %v990
    %v2389 = vunpack.c.h.b16 %v990
    %v2390 = vunpack.c.l.b16 %v991
    %v2391 = vunpack.c.h.b16 %v991
    %v2392 = vunpack.c.l.b16 %v992
    %v2393 = vunpack.c.h.b16 %v992
    %v2394 = vunpack.c.l.b16 %v993
    %v2395 = vunpack.c.h.b16 %v993
    %v2396 = vunpack.c.l.b16 %v994
    %v2397 = vunpack.c.h.b16 %v994
    %v2398 = vunpack.c.l.b16 %v995
    %v2399 = vunpack.c.h.b16 %v995
    %v2400 = vunpack.c.l.b16 %v996
    %v2401 = vunpack.c.h.b16 %v996
    %v2402 = vunpack.c.l.b16 %v997
    %v2403 = vunpack.c.h.b16 %v997
    %v2404 = vunpack.c.l.b16 %v998
    %v2405 = vunpack.c.h.b16 %v998
    %v2406 = vunpack.c.l.b16 %v999
    %v2407 = vunpack.c.h.b16 %v999
    %v2408 = vunpack.c.l.b16 %v1000
    %v2409 = vunpack.c.h.b16 %v1000
    %v2410 = vunpack.c.l.b16 %v1001
    %v2411 = vunpack.c.h.b16 %v1001
    %v2412 = vunpack.c.l.b16 %v1002
    %v2413 = vunpack.c.h.b16 %v1002
    %v2414 = vunpack.c.l.b16 %v1003
    %v2415 = vunpack.c.h.b16 %v1003
    %v2416 = vunpack.c.l.b16 %v1004
    %v2417 = vunpack.c.h.b16 %v1004
    %v2418 = vunpack.c.l.b16 %v1005
    %v2419 = vunpack.c.h.b16 %v1005
    %v2420 = vunpack.c.l.b16 %v1006
    %v2421 = vunpack.c.h.b16 %v1006
    %v2422 = vunpack.c.l.b16 %v1007
    %v2423 = vunpack.c.h.b16 %v1007
    %v2424 = vunpack.c.l.b16 %v1008
    %v2425 = vunpack.c.h.b16 %v1008
    %v2426 = vunpack.c.l.b16 %v1009
    %v2427 = vunpack.c.h.b16 %v1009
    %v2428 = vunpack.c.l.b16 %v1010
    %v2429 = vunpack.c.h.b16 %v1010
    %v2430 = vunpack.c.l.b16 %v1011
    %v2431 = vunpack.c.h.b16 %v1011
    %v2432 = vunpack.c.l.b16 %v1012
    %v2433 = vunpack.c.h.b16 %v1012
    %v2434 = vunpack.c.l.b16 %v1013
    %v2435 = vunpack.c.h.b16 %v1013
    %v2436 = vunpack.c.l.b16 %v1014
    %v2437 = vunpack.c.h.b16 %v1014
    %v2438 = vunpack.c.l.b16 %v1015
    %v2439 = vunpack.c.h.b16 %v1015
    %v2440 = vunpack.c.l.b16 %v1016
    %v2441 = vunpack.c.h.b16 %v1016
    %v2442 = vunpack.c.l.b16 %v1017
    %v2443 = vunpack.c.h.b16 %v1017
    %v2444 = vunpack.c.l.b16 %v1018
    %v2445 = vunpack.c.h.b16 %v1018
    %v2446 = vunpack.c.l.b16 %v1019
    %v2447 = vunpack.c.h.b16 %v1019
    %v2448 = vunpack.c.l.b16 %v1020
    %v2449 = vunpack.c.h.b16 %v1020
    %v2450 = vunpack.c.l.b16 %v1021
    %v2451 = vunpack.c.h.b16 %v1021
    %v2452 = vunpack.c.l.b16 %v1022
    %v2453 = vunpack.c.h.b16 %v1022
    %v2454 = vunpack.c.l.b16 %v1023
    %v2455 = vunpack.c.h.b16 %v1023
    %v2456 = vunpack.c.l.b16 %v1024
    %v2457 = vunpack.c.h.b16 %v1024
    %v2458 = vunpack.c.l.b16 %v1025
    %v2459 = vunpack.c.h.b16 %v1025
    %v2460 = vunpack.c.l.b16 %v1026
    %v2461 = vunpack.c.h.b16 %v1026
    %v2462 = vunpack.c.l.b16 %v1027
    %v2463 = vunpack.c.h.b16 %v1027
    %v2464 = vunpack.c.l.b16 %v1028
    %v2465 = vunpack.c.h.b16 %v1028
    %v2466 = vunpack.c.l.b16 %v1029
    %v2467 = vunpack.c.h.b16 %v1029
    %v2468 = vunpack.c.l.b16 %v1030
    %v2469 = vunpack.c.h.b16 %v1030
    %v2470 = vunpack.c.l.b16 %v1031
    %v2471 = vunpack.c.h.b16 %v1031
    %v2472 = vunpack.c.l.b16 %v1032
    %v2473 = vunpack.c.h.b16 %v1032
    %v2474 = vunpack.c.l.b16 %v1033
    %v2475 = vunpack.c.h.b16 %v1033
    %v2476 = vunpack.c.l.b16 %v1034
    %v2477 = vunpack.c.h.b16 %v1034
    %v2478 = vunpack.c.l.b16 %v1035
    %v2479 = vunpack.c.h.b16 %v1035
    %v2480 = vunpack.c.l.b16 %v1036
    %v2481 = vunpack.c.h.b16 %v1036
    %v2482 = vunpack.c.l.b16 %v1037
    %v2483 = vunpack.c.h.b16 %v1037
    %v2484 = vunpack.c.l.b16 %v1038
    %v2485 = vunpack.c.h.b16 %v1038
    %v2486 = vunpack.c.l.b16 %v1039
    %v2487 = vunpack.c.h.b16 %v1039
    %v2488 = vunpack.c.l.b16 %v1040
    %v2489 = vunpack.c.h.b16 %v1040
    %v2490 = vunpack.c.l.b16 %v1041
    %v2491 = vunpack.c.h.b16 %v1041
    %v2492 = vunpack.c.l.b16 %v1042
    %v2493 = vunpack.c.h.b16 %v1042
    %v2494 = vunpack.c.l.b16 %v1043
    %v2495 = vunpack.c.h.b16 %v1043
    %v2496 = vunpack.c.l.b16 %v1044
    %v2497 = vunpack.c.h.b16 %v1044
    %v2498 = vunpack.c.l.b16 %v1045
    %v2499 = vunpack.c.h.b16 %v1045
    %v2500 = vunpack.c.l.b16 %v1046
    %v2501 = vunpack.c.h.b16 %v1046
    %v2502 = vunpack.c.l.b16 %v1047
    %v2503 = vunpack.c.h.b16 %v1047
    %v2504 = vunpack.c.l.b16 %v1048
    %v2505 = vunpack.c.h.b16 %v1048
    %v2506 = vunpack.c.l.b16 %v1049
    %v2507 = vunpack.c.h.b16 %v1049
    %v2508 = vunpack.c.l.b16 %v1050
    %v2509 = vunpack.c.h.b16 %v1050
    %v2510 = vunpack.c.l.b16 %v1051
    %v2511 = vunpack.c.h.b16 %v1051
    %v2512 = vunpack.c.l.b16 %v1052
    %v2513 = vunpack.c.h.b16 %v1052
    %v2514 = vunpack.c.l.b16 %v1053
    %v2515 = vunpack.c.h.b16 %v1053
    %v2516 = vunpack.c.l.b16 %v1054
    %v2517 = vunpack.c.h.b16 %v1054
    %v2518 = vunpack.c.l.b16 %v1055
    %v2519 = vunpack.c.h.b16 %v1055
    %v2520 = vunpack.c.l.b16 %v1056
    %v2521 = vunpack.c.h.b16 %v1056
    %v2522 = vunpack.c.l.b16 %v1057
    %v2523 = vunpack.c.h.b16 %v1057
    %v2524 = vunpack.c.l.b16 %v1058
    %v2525 = vunpack.c.h.b16 %v1058
    %v2526 = vunpack.c.l.b16 %v1059
    %v2527 = vunpack.c.h.b16 %v1059
    %v2528 = vunpack.c.l.b16 %v1060
    %v2529 = vunpack.c.h.b16 %v1060
    %v2530 = vunpack.c.l.b16 %v1061
    %v2531 = vunpack.c.h.b16 %v1061
    %v2532 = vunpack.c.l.b16 %v1062
    %v2533 = vunpack.c.h.b16 %v1062
    %v2534 = vunpack.c.l.b16 %v1063
    %v2535 = vunpack.c.h.b16 %v1063
    %v2536 = vunpack.c.l.b16 %v1064
    %v2537 = vunpack.c.h.b16 %v1064
    %v2538 = vunpack.c.l.b16 %v1065
    %v2539 = vunpack.c.h.b16 %v1065
    %v2540 = vunpack.c.l.b16 %v1066
    %v2541 = vunpack.c.h.b16 %v1066
    %v2542 = vunpack.c.l.b16 %v1067
    %v2543 = vunpack.c.h.b16 %v1067
    %v2544 = vunpack.c.l.b16 %v1068
    %v2545 = vunpack.c.h.b16 %v1068
    %v2546 = vunpack.c.l.b16 %v1069
    %v2547 = vunpack.c.h.b16 %v1069
    %v2548 = vunpack.c.l.b16 %v1070
    %v2549 = vunpack.c.h.b16 %v1070
    %v2550 = vunpack.c.l.b16 %v1071
    %v2551 = vunpack.c.h.b16 %v1071
    %v2552 = vunpack.c.l.b16 %v1072
    %v2553 = vunpack.c.h.b16 %v1072
    %v2554 = vunpack.c.l.b16 %v1073
    %v2555 = vunpack.c.h.b16 %v1073
    %v2556 = vunpack.c.l.b16 %v1074
    %v2557 = vunpack.c.h.b16 %v1074
    %v2558 = vunpack.c.l.b16 %v1075
    %v2559 = vunpack.c.h.b16 %v1075
    %v2560 = vunpack.c.l.b16 %v1076
    %v2561 = vunpack.c.h.b16 %v1076
    %v2562 = vunpack.c.l.b16 %v1077
    %v2563 = vunpack.c.h.b16 %v1077
    %v2564 = vunpack.c.l.b16 %v1078
    %v2565 = vunpack.c.h.b16 %v1078
    %v2566 = vunpack.c.l.b16 %v1079
    %v2567 = vunpack.c.h.b16 %v1079
    %v2568 = vunpack.c.l.b16 %v1080
    %v2569 = vunpack.c.h.b16 %v1080
    %v2570 = vunpack.c.l.b16 %v1081
    %v2571 = vunpack.c.h.b16 %v1081
    %v2572 = vunpack.c.l.b16 %v1082
    %v2573 = vunpack.c.h.b16 %v1082
    %v2574 = vunpack.c.l.b16 %v1083
    %v2575 = vunpack.c.h.b16 %v1083
    %v2576 = vunpack.c.l.b16 %v1084
    %v2577 = vunpack.c.h.b16 %v1084
    %v2578 = vunpack.c.l.b16 %v1085
    %v2579 = vunpack.c.h.b16 %v1085
    %v2580 = vunpack.c.l.b16 %v1086
    %v2581 = vunpack.c.h.b16 %v1086
    %v2582 = vunpack.c.l.b16 %v1087
    %v2583 = vunpack.c.h.b16 %v1087
    %v2584 = vunpack.c.l.b16 %v1088
    %v2585 = vunpack.c.h.b16 %v1088
    %v2586 = vunpack.c.l.b16 %v1089
    %v2587 = vunpack.c.h.b16 %v1089
    %v2588 = vunpack.c.l.b16 %v1090
    %v2589 = vunpack.c.h.b16 %v1090
    %v2590 = vunpack.c.l.b16 %v1091
    %v2591 = vunpack.c.h.b16 %v1091
    %v2592 = vunpack.c.l.b16 %v1092
    %v2593 = vunpack.c.h.b16 %v1092
    %v2594 = vunpack.c.l.b16 %v1093
    %v2595 = vunpack.c.h.b16 %v1093
    %v2596 = vunpack.c.l.b16 %v1094
    %v2597 = vunpack.c.h.b16 %v1094
    %v2598 = vunpack.c.l.b16 %v1095
    %v2599 = vunpack.c.h.b16 %v1095
    %v2600 = vunpack.c.l.b16 %v1096
    %v2601 = vunpack.c.h.b16 %v1096
    %v2602 = vunpack.c.l.b16 %v1097
    %v2603 = vunpack.c.h.b16 %v1097
    %v2604 = vunpack.c.l.b16 %v1098
    %v2605 = vunpack.c.h.b16 %v1098
    %v2606 = vunpack.c.l.b16 %v1099
    %v2607 = vunpack.c.h.b16 %v1099
    %v2608 = vunpack.c.l.b16 %v1100
    %v2609 = vunpack.c.h.b16 %v1100
    %v2610 = vunpack.c.l.b16 %v1101
    %v2611 = vunpack.c.h.b16 %v1101
    %v2612 = vunpack.c.l.b16 %v1102
    %v2613 = vunpack.c.h.b16 %v1102
    %v2614 = vunpack.c.l.b16 %v1103
    %v2615 = vunpack.c.h.b16 %v1103
    %v2616 = vunpack.c.l.b16 %v1104
    %v2617 = vunpack.c.h.b16 %v1104
    %v2618 = vunpack.c.l.b16 %v1105
    %v2619 = vunpack.c.h.b16 %v1105
    %v2620 = vunpack.c.l.b16 %v1106
    %v2621 = vunpack.c.h.b16 %v1106
    %v2622 = vunpack.c.l.b16 %v1107
    %v2623 = vunpack.c.h.b16 %v1107
    %v2624 = vunpack.c.l.b16 %v1108
    %v2625 = vunpack.c.h.b16 %v1108
    %v2626 = vunpack.c.l.b16 %v1109
    %v2627 = vunpack.c.h.b16 %v1109
    %v2628 = vunpack.c.l.b16 %v1110
    %v2629 = vunpack.c.h.b16 %v1110
    %v2630 = vunpack.c.l.b16 %v1111
    %v2631 = vunpack.c.h.b16 %v1111
    %v2632 = vunpack.c.l.b16 %v1112
    %v2633 = vunpack.c.h.b16 %v1112
    %v2634 = vunpack.c.l.b16 %v1113
    %v2635 = vunpack.c.h.b16 %v1113
    %v2636 = vunpack.c.l.b16 %v1114
    %v2637 = vunpack.c.h.b16 %v1114
    %v2638 = vunpack.c.l.b16 %v1115
    %v2639 = vunpack.c.h.b16 %v1115
    %v2640 = vunpack.c.l.b16 %v1116
    %v2641 = vunpack.c.h.b16 %v1116
    %v2642 = vunpack.c.l.b16 %v1117
    %v2643 = vunpack.c.h.b16 %v1117
    %v2644 = vunpack.c.l.b16 %v1118
    %v2645 = vunpack.c.h.b16 %v1118
    %v2646 = vunpack.c.l.b16 %v1119
    %v2647 = vunpack.c.h.b16 %v1119
    %v2648 = vunpack.c.l.b16 %v1120
    %v2649 = vunpack.c.h.b16 %v1120
    %v2650 = vunpack.c.l.b16 %v1121
    %v2651 = vunpack.c.h.b16 %v1121
    %v2652 = vunpack.c.l.b16 %v1122
    %v2653 = vunpack.c.h.b16 %v1122
    %v2654 = vunpack.c.l.b16 %v1123
    %v2655 = vunpack.c.h.b16 %v1123
    %v2656 = vunpack.c.l.b16 %v1124
    %v2657 = vunpack.c.h.b16 %v1124
    %v2658 = vunpack.c.l.b16 %v1125
    %v2659 = vunpack.c.h.b16 %v1125
    %v2660 = vunpack.c.l.b16 %v1126
    %v2661 = vunpack.c.h.b16 %v1126
    %v2662 = vunpack.c.l.b16 %v1127
    %v2663 = vunpack.c.h.b16 %v1127
    %v2664 = vunpack.c.l.b16 %v1128
    %v2665 = vunpack.c.h.b16 %v1128
    %v2666 = vunpack.c.l.b16 %v1129
    %v2667 = vunpack.c.h.b16 %v1129
    %v2668 = vunpack.c.l.b16 %v1130
    %v2669 = vunpack.c.h.b16 %v1130
    %v2670 = vunpack.c.l.b16 %v1131
    %v2671 = vunpack.c.h.b16 %v1131
    %v2672 = vunpack.c.l.b16 %v1132
    %v2673 = vunpack.c.h.b16 %v1132
    %v2674 = vunpack.c.l.b16 %v1133
    %v2675 = vunpack.c.h.b16 %v1133
    %v2676 = vunpack.c.l.b16 %v1134
    %v2677 = vunpack.c.h.b16 %v1134
    %v2678 = vunpack.c.l.b16 %v1135
    %v2679 = vunpack.c.h.b16 %v1135
    %v2680 = vunpack.c.l.b16 %v1136
    %v2681 = vunpack.c.h.b16 %v1136
    %v2682 = vunpack.c.l.b16 %v1137
    %v2683 = vunpack.c.h.b16 %v1137
    %v2684 = vunpack.c.l.b16 %v1138
    %v2685 = vunpack.c.h.b16 %v1138
    %v2686 = vunpack.c.l.b16 %v1139
    %v2687 = vunpack.c.h.b16 %v1139
    %v2688 = vunpack.c.l.b16 %v1140
    %v2689 = vunpack.c.h.b16 %v1140
    %v2690 = vunpack.c.l.b16 %v1141
    %v2691 = vunpack.c.h.b16 %v1141
    %v2692 = vunpack.c.l.b16 %v1142
    %v2693 = vunpack.c.h.b16 %v1142
    %v2694 = vunpack.c.l.b16 %v1143
    %v2695 = vunpack.c.h.b16 %v1143
    %v2696 = vunpack.c.l.b16 %v1144
    %v2697 = vunpack.c.h.b16 %v1144
    %v2698 = vunpack.c.l.b16 %v1145
    %v2699 = vunpack.c.h.b16 %v1145
    %v2700 = vunpack.c.l.b16 %v1146
    %v2701 = vunpack.c.h.b16 %v1146
    %v2702 = vunpack.c.l.b16 %v1147
    %v2703 = vunpack.c.h.b16 %v1147
    %v2704 = vunpack.c.l.b16 %v1148
    %v2705 = vunpack.c.h.b16 %v1148
    %v2706 = vunpack.c.l.b16 %v1149
    %v2707 = vunpack.c.h.b16 %v1149
    %v2708 = vunpack.c.l.b16 %v1150
    %v2709 = vunpack.c.h.b16 %v1150
    %v2710 = vunpack.c.l.b16 %v1151
    %v2711 = vunpack.c.h.b16 %v1151
    %v2712 = vunpack.c.l.b16 %v1152
    %v2713 = vunpack.c.h.b16 %v1152
    %v2714 = vunpack.c.l.b16 %v1153
    %v2715 = vunpack.c.h.b16 %v1153
    %v2716 = vunpack.c.l.b16 %v1154
    %v2717 = vunpack.c.h.b16 %v1154
    %v2718 = vunpack.c.l.b16 %v1155
    %v2719 = vunpack.c.h.b16 %v1155
    %v2720 = vunpack.c.l.b16 %v1156
    %v2721 = vunpack.c.h.b16 %v1156
    %v2722 = vunpack.c.l.b16 %v1157
    %v2723 = vunpack.c.h.b16 %v1157
    %v2724 = vunpack.c.l.b16 %v1158
    %v2725 = vunpack.c.h.b16 %v1158
    %v2726 = vunpack.c.l.b16 %v1159
    %v2727 = vunpack.c.h.b16 %v1159
    %v2728 = vunpack.c.l.b16 %v1160
    %v2729 = vunpack.c.h.b16 %v1160
    %v2730 = vunpack.c.l.b16 %v1161
    %v2731 = vunpack.c.h.b16 %v1161
    %v2732 = vunpack.c.l.b16 %v1162
    %v2733 = vunpack.c.h.b16 %v1162
    %v2734 = vunpack.c.l.b16 %v1163
    %v2735 = vunpack.c.h.b16 %v1163
    %v2736 = vunpack.c.l.b16 %v1164
    %v2737 = vunpack.c.h.b16 %v1164
    %v2738 = vunpack.c.l.b16 %v1165
    %v2739 = vunpack.c.h.b16 %v1165
    %v2740 = vunpack.c.l.b16 %v1166
    %v2741 = vunpack.c.h.b16 %v1166
    %v2742 = vunpack.c.l.b16 %v1167
    %v2743 = vunpack.c.h.b16 %v1167
    %v2744 = vunpack.c.l.b16 %v1168
    %v2745 = vunpack.c.h.b16 %v1168
    %v2746 = vunpack.c.l.b16 %v1169
    %v2747 = vunpack.c.h.b16 %v1169
    %v2748 = vpack.c.b16 %v1732, %v1724
    %v2749 = vpack.c.b16 %v1733, %v1725
    %v2750 = vpack.c.b16 %v1734, %v1726
    %v2751 = vpack.c.b16 %v1735, %v1727
    %v2752 = vpack.c.b16 %v1736, %v1728
    %v2753 = vpack.c.b16 %v1737, %v1729
    %v2754 = vpack.c.b16 %v1738, %v1730
    %v2755 = vpack.c.b16 %v1739, %v1731
    %v2756 = vpack.c.b16 %v1748, %v1740
    %v2757 = vpack.c.b16 %v1749, %v1741
    %v2758 = vpack.c.b16 %v1750, %v1742
    %v2759 = vpack.c.b16 %v1751, %v1743
    %v2760 = vpack.c.b16 %v1752, %v1744
    %v2761 = vpack.c.b16 %v1753, %v1745
    %v2762 = vpack.c.b16 %v1754, %v1746
    %v2763 = vpack.c.b16 %v1755, %v1747
    %v2764 = vpack.c.b16 %v1764, %v1756
    %v2765 = vpack.c.b16 %v1765, %v1757
    %v2766 = vpack.c.b16 %v1766, %v1758
    %v2767 = vpack.c.b16 %v1767, %v1759
    %v2768 = vpack.c.b16 %v1768, %v1760
    %v2769 = vpack.c.b16 %v1769, %v1761
    %v2770 = vpack.c.b16 %v1770, %v1762
    %v2771 = vpack.c.b16 %v1771, %v1763
    %v2772 = vpack.c.b16 %v1780, %v1772
    %v2773 = vpack.c.b16 %v1781, %v1773
    %v2774 = vpack.c.b16 %v1782, %v1774
    %v2775 = vpack.c.b16 %v1783, %v1775
    %v2776 = vpack.c.b16 %v1784, %v1776
    %v2777 = vpack.c.b16 %v1785, %v1777
    %v2778 = vpack.c.b16 %v1786, %v1778
    %v2779 = vpack.c.b16 %v1787, %v1779
    %v2780 = vpack.c.b16 %v1796, %v1788
    %v2781 = vpack.c.b16 %v1797, %v1789
    %v2782 = vpack.c.b16 %v1798, %v1790
    %v2783 = vpack.c.b16 %v1799, %v1791
    %v2784 = vpack.c.b16 %v1800, %v1792
    %v2785 = vpack.c.b16 %v1801, %v1793
    %v2786 = vpack.c.b16 %v1802, %v1794
    %v2787 = vpack.c.b16 %v1803, %v1795
    %v2788 = vpack.c.b16 %v1812, %v1804
    %v2789 = vpack.c.b16 %v1813, %v1805
    %v2790 = vpack.c.b16 %v1814, %v1806
    %v2791 = vpack.c.b16 %v1815, %v1807
    %v2792 = vpack.c.b16 %v1816, %v1808
    %v2793 = vpack.c.b16 %v1817, %v1809
    %v2794 = vpack.c.b16 %v1818, %v1810
    %v2795 = vpack.c.b16 %v1819, %v1811
    %v2796 = vpack.c.b16 %v1828, %v1820
    %v2797 = vpack.c.b16 %v1829, %v1821
    %v2798 = vpack.c.b16 %v1830, %v1822
    %v2799 = vpack.c.b16 %v1831, %v1823
    %v2800 = vpack.c.b16 %v1832, %v1824
    %v2801 = vpack.c.b16 %v1833, %v1825
    %v2802 = vpack.c.b16 %v1834, %v1826
    %v2803 = vpack.c.b16 %v1835, %v1827
    %v2804 = vpack.c.b16 %v1844, %v1836
    %v2805 = vpack.c.b16 %v1845, %v1837
    %v2806 = vpack.c.b16 %v1846, %v1838
    %v2807 = vpack.c.b16 %v1847, %v1839
    %v2808 = vpack.c.b16 %v1848, %v1840
    %v2809 = vpack.c.b16 %v1849, %v1841
    %v2810 = vpack.c.b16 %v1850, %v1842
    %v2811 = vpack.c.b16 %v1851, %v1843
    %v2812 = vpack.c.b16 %v1860, %v1852
    %v2813 = vpack.c.b16 %v1861, %v1853
    %v2814 = vpack.c.b16 %v1862, %v1854
    %v2815 = vpack.c.b16 %v1863, %v1855
    %v2816 = vpack.c.b16 %v1864, %v1856
    %v2817 = vpack.c.b16 %v1865, %v1857
    %v2818 = vpack.c.b16 %v1866, %v1858
    %v2819 = vpack.c.b16 %v1867, %v1859
    %v2820 = vpack.c.b16 %v1876, %v1868
    %v2821 = vpack.c.b16 %v1877, %v1869
    %v2822 = vpack.c.b16 %v1878, %v1870
    %v2823 = vpack.c.b16 %v1879, %v1871
    %v2824 = vpack.c.b16 %v1880, %v1872
    %v2825 = vpack.c.b16 %v1881, %v1873
    %v2826 = vpack.c.b16 %v1882, %v1874
    %v2827 = vpack.c.b16 %v1883, %v1875
    %v2828 = vpack.c.b16 %v1892, %v1884
    %v2829 = vpack.c.b16 %v1893, %v1885
    %v2830 = vpack.c.b16 %v1894, %v1886
    %v2831 = vpack.c.b16 %v1895, %v1887
    %v2832 = vpack.c.b16 %v1896, %v1888
    %v2833 = vpack.c.b16 %v1897, %v1889
    %v2834 = vpack.c.b16 %v1898, %v1890
    %v2835 = vpack.c.b16 %v1899, %v1891
    %v2836 = vpack.c.b16 %v1908, %v1900
    %v2837 = vpack.c.b16 %v1909, %v1901
    %v2838 = vpack.c.b16 %v1910, %v1902
    %v2839 = vpack.c.b16 %v1911, %v1903
    %v2840 = vpack.c.b16 %v1912, %v1904
    %v2841 = vpack.c.b16 %v1913, %v1905
    %v2842 = vpack.c.b16 %v1914, %v1906
    %v2843 = vpack.c.b16 %v1915, %v1907
    %v2844 = vpack.c.b16 %v1924, %v1916
    %v2845 = vpack.c.b16 %v1925, %v1917
    %v2846 = vpack.c.b16 %v1926, %v1918
    %v2847 = vpack.c.b16 %v1927, %v1919
    %v2848 = vpack.c.b16 %v1928, %v1920
    %v2849 = vpack.c.b16 %v1929, %v1921
    %v2850 = vpack.c.b16 %v1930, %v1922
    %v2851 = vpack.c.b16 %v1931, %v1923
    %v2852 = vpack.c.b16 %v1940, %v1932
    %v2853 = vpack.c.b16 %v1941, %v1933
    %v2854 = vpack.c.b16 %v1942, %v1934
    %v2855 = vpack.c.b16 %v1943, %v1935
    %v2856 = vpack.c.b16 %v1944, %v1936
    %v2857 = vpack.c.b16 %v1945, %v1937
    %v2858 = vpack.c.b16 %v1946, %v1938
    %v2859 = vpack.c.b16 %v1947, %v1939
    %v2860 = vpack.c.b16 %v1956, %v1948
    %v2861 = vpack.c.b16 %v1957, %v1949
    %v2862 = vpack.c.b16 %v1958, %v1950
    %v2863 = vpack.c.b16 %v1959, %v1951
    %v2864 = vpack.c.b16 %v1960, %v1952
    %v2865 = vpack.c.b16 %v1961, %v1953
    %v2866 = vpack.c.b16 %v1962, %v1954
    %v2867 = vpack.c.b16 %v1963, %v1955
    %v2868 = vpack.c.b16 %v1972, %v1964
    %v2869 = vpack.c.b16 %v1973, %v1965
    %v2870 = vpack.c.b16 %v1974, %v1966
    %v2871 = vpack.c.b16 %v1975, %v1967
    %v2872 = vpack.c.b16 %v1976, %v1968
    %v2873 = vpack.c.b16 %v1977, %v1969
    %v2874 = vpack.c.b16 %v1978, %v1970
    %v2875 = vpack.c.b16 %v1979, %v1971
    %v2876 = vpack.c.b16 %v1988, %v1980
    %v2877 = vpack.c.b16 %v1989, %v1981
    %v2878 = vpack.c.b16 %v1990, %v1982
    %v2879 = vpack.c.b16 %v1991, %v1983
    %v2880 = vpack.c.b16 %v1992, %v1984
    %v2881 = vpack.c.b16 %v1993, %v1985
    %v2882 = vpack.c.b16 %v1994, %v1986
    %v2883 = vpack.c.b16 %v1995, %v1987
    %v2884 = vpack.c.b16 %v2004, %v1996
    %v2885 = vpack.c.b16 %v2005, %v1997
    %v2886 = vpack.c.b16 %v2006, %v1998
    %v2887 = vpack.c.b16 %v2007, %v1999
    %v2888 = vpack.c.b16 %v2008, %v2000
    %v2889 = vpack.c.b16 %v2009, %v2001
    %v2890 = vpack.c.b16 %v2010, %v2002
    %v2891 = vpack.c.b16 %v2011, %v2003
    %v2892 = vpack.c.b16 %v2020, %v2012
    %v2893 = vpack.c.b16 %v2021, %v2013
    %v2894 = vpack.c.b16 %v2022, %v2014
    %v2895 = vpack.c.b16 %v2023, %v2015
    %v2896 = vpack.c.b16 %v2024, %v2016
    %v2897 = vpack.c.b16 %v2025, %v2017
    %v2898 = vpack.c.b16 %v2026, %v2018
    %v2899 = vpack.c.b16 %v2027, %v2019
    %v2900 = vpack.c.b16 %v2036, %v2028
    %v2901 = vpack.c.b16 %v2037, %v2029
    %v2902 = vpack.c.b16 %v2038, %v2030
    %v2903 = vpack.c.b16 %v2039, %v2031
    %v2904 = vpack.c.b16 %v2040, %v2032
    %v2905 = vpack.c.b16 %v2041, %v2033
    %v2906 = vpack.c.b16 %v2042, %v2034
    %v2907 = vpack.c.b16 %v2043, %v2035
    %v2908 = vpack.c.b16 %v2052, %v2044
    %v2909 = vpack.c.b16 %v2053, %v2045
    %v2910 = vpack.c.b16 %v2054, %v2046
    %v2911 = vpack.c.b16 %v2055, %v2047
    %v2912 = vpack.c.b16 %v2056, %v2048
    %v2913 = vpack.c.b16 %v2057, %v2049
    %v2914 = vpack.c.b16 %v2058, %v2050
    %v2915 = vpack.c.b16 %v2059, %v2051
    %v2916 = vpack.c.b16 %v2068, %v2060
    %v2917 = vpack.c.b16 %v2069, %v2061
    %v2918 = vpack.c.b16 %v2070, %v2062
    %v2919 = vpack.c.b16 %v2071, %v2063
    %v2920 = vpack.c.b16 %v2072, %v2064
    %v2921 = vpack.c.b16 %v2073, %v2065
    %v2922 = vpack.c.b16 %v2074, %v2066
    %v2923 = vpack.c.b16 %v2075, %v2067
    %v2924 = vpack.c.b16 %v2084, %v2076
    %v2925 = vpack.c.b16 %v2085, %v2077
    %v2926 = vpack.c.b16 %v2086, %v2078
    %v2927 = vpack.c.b16 %v2087, %v2079
    %v2928 = vpack.c.b16 %v2088, %v2080
    %v2929 = vpack.c.b16 %v2089, %v2081
    %v2930 = vpack.c.b16 %v2090, %v2082
    %v2931 = vpack.c.b16 %v2091, %v2083
    %v2932 = vpack.c.b16 %v2100, %v2092
    %v2933 = vpack.c.b16 %v2101, %v2093
    %v2934 = vpack.c.b16 %v2102, %v2094
    %v2935 = vpack.c.b16 %v2103, %v2095
    %v2936 = vpack.c.b16 %v2104, %v2096
    %v2937 = vpack.c.b16 %v2105, %v2097
    %v2938 = vpack.c.b16 %v2106, %v2098
    %v2939 = vpack.c.b16 %v2107, %v2099
    %v2940 = vpack.c.b16 %v2116, %v2108
    %v2941 = vpack.c.b16 %v2117, %v2109
    %v2942 = vpack.c.b16 %v2118, %v2110
    %v2943 = vpack.c.b16 %v2119, %v2111
    %v2944 = vpack.c.b16 %v2120, %v2112
    %v2945 = vpack.c.b16 %v2121, %v2113
    %v2946 = vpack.c.b16 %v2122, %v2114
    %v2947 = vpack.c.b16 %v2123, %v2115
    %v2948 = vpack.c.b16 %v2132, %v2124
    %v2949 = vpack.c.b16 %v2133, %v2125
    %v2950 = vpack.c.b16 %v2134, %v2126
    %v2951 = vpack.c.b16 %v2135, %v2127
    %v2952 = vpack.c.b16 %v2136, %v2128
    %v2953 = vpack.c.b16 %v2137, %v2129
    %v2954 = vpack.c.b16 %v2138, %v2130
    %v2955 = vpack.c.b16 %v2139, %v2131
    %v2956 = vpack.c.b16 %v2148, %v2140
    %v2957 = vpack.c.b16 %v2149, %v2141
    %v2958 = vpack.c.b16 %v2150, %v2142
    %v2959 = vpack.c.b16 %v2151, %v2143
    %v2960 = vpack.c.b16 %v2152, %v2144
    %v2961 = vpack.c.b16 %v2153, %v2145
    %v2962 = vpack.c.b16 %v2154, %v2146
    %v2963 = vpack.c.b16 %v2155, %v2147
    %v2964 = vpack.c.b16 %v2164, %v2156
    %v2965 = vpack.c.b16 %v2165, %v2157
    %v2966 = vpack.c.b16 %v2166, %v2158
    %v2967 = vpack.c.b16 %v2167, %v2159
    %v2968 = vpack.c.b16 %v2168, %v2160
    %v2969 = vpack.c.b16 %v2169, %v2161
    %v2970 = vpack.c.b16 %v2170, %v2162
    %v2971 = vpack.c.b16 %v2171, %v2163
    %v2972 = vpack.c.b16 %v2180, %v2172
    %v2973 = vpack.c.b16 %v2181, %v2173
    %v2974 = vpack.c.b16 %v2182, %v2174
    %v2975 = vpack.c.b16 %v2183, %v2175
    %v2976 = vpack.c.b16 %v2184, %v2176
    %v2977 = vpack.c.b16 %v2185, %v2177
    %v2978 = vpack.c.b16 %v2186, %v2178
    %v2979 = vpack.c.b16 %v2187, %v2179
    %v2980 = vpack.c.b16 %v2196, %v2188
    %v2981 = vpack.c.b16 %v2197, %v2189
    %v2982 = vpack.c.b16 %v2198, %v2190
    %v2983 = vpack.c.b16 %v2199, %v2191
    %v2984 = vpack.c.b16 %v2200, %v2192
    %v2985 = vpack.c.b16 %v2201, %v2193
    %v2986 = vpack.c.b16 %v2202, %v2194
    %v2987 = vpack.c.b16 %v2203, %v2195
    %v2988 = vpack.c.b16 %v2212, %v2204
    %v2989 = vpack.c.b16 %v2213, %v2205
    %v2990 = vpack.c.b16 %v2214, %v2206
    %v2991 = vpack.c.b16 %v2215, %v2207
    %v2992 = vpack.c.b16 %v2216, %v2208
    %v2993 = vpack.c.b16 %v2217, %v2209
    %v2994 = vpack.c.b16 %v2218, %v2210
    %v2995 = vpack.c.b16 %v2219, %v2211
    %v2996 = vpack.c.b16 %v2228, %v2220
    %v2997 = vpack.c.b16 %v2229, %v2221
    %v2998 = vpack.c.b16 %v2230, %v2222
    %v2999 = vpack.c.b16 %v2231, %v2223
    %v3000 = vpack.c.b16 %v2232, %v2224
    %v3001 = vpack.c.b16 %v2233, %v2225
    %v3002 = vpack.c.b16 %v2234, %v2226
    %v3003 = vpack.c.b16 %v2235, %v2227
    %v3004 = vpack.c.b16 %v2244, %v2236
    %v3005 = vpack.c.b16 %v2245, %v2237
    %v3006 = vpack.c.b16 %v2246, %v2238
    %v3007 = vpack.c.b16 %v2247, %v2239
    %v3008 = vpack.c.b16 %v2248, %v2240
    %v3009 = vpack.c.b16 %v2249, %v2241
    %v3010 = vpack.c.b16 %v2250, %v2242
    %v3011 = vpack.c.b16 %v2251, %v2243
    %v3012 = vpack.c.b16 %v2260, %v2252
    %v3013 = vpack.c.b16 %v2261, %v2253
    %v3014 = vpack.c.b16 %v2262, %v2254
    %v3015 = vpack.c.b16 %v2263, %v2255
    %v3016 = vpack.c.b16 %v2264, %v2256
    %v3017 = vpack.c.b16 %v2265, %v2257
    %v3018 = vpack.c.b16 %v2266, %v2258
    %v3019 = vpack.c.b16 %v2267, %v2259
    %v3020 = vpack.c.b16 %v2276, %v2268
    %v3021 = vpack.c.b16 %v2277, %v2269
    %v3022 = vpack.c.b16 %v2278, %v2270
    %v3023 = vpack.c.b16 %v2279, %v2271
    %v3024 = vpack.c.b16 %v2280, %v2272
    %v3025 = vpack.c.b16 %v2281, %v2273
    %v3026 = vpack.c.b16 %v2282, %v2274
    %v3027 = vpack.c.b16 %v2283, %v2275
    %v3028 = vpack.c.b16 %v2292, %v2284
    %v3029 = vpack.c.b16 %v2293, %v2285
    %v3030 = vpack.c.b16 %v2294, %v2286
    %v3031 = vpack.c.b16 %v2295, %v2287
    %v3032 = vpack.c.b16 %v2296, %v2288
    %v3033 = vpack.c.b16 %v2297, %v2289
    %v3034 = vpack.c.b16 %v2298, %v2290
    %v3035 = vpack.c.b16 %v2299, %v2291
    %v3036 = vpack.c.b16 %v2308, %v2300
    %v3037 = vpack.c.b16 %v2309, %v2301
    %v3038 = vpack.c.b16 %v2310, %v2302
    %v3039 = vpack.c.b16 %v2311, %v2303
    %v3040 = vpack.c.b16 %v2312, %v2304
    %v3041 = vpack.c.b16 %v2313, %v2305
    %v3042 = vpack.c.b16 %v2314, %v2306
    %v3043 = vpack.c.b16 %v2315, %v2307
    %v3044 = vpack.c.b16 %v2324, %v2316
    %v3045 = vpack.c.b16 %v2325, %v2317
    %v3046 = vpack.c.b16 %v2326, %v2318
    %v3047 = vpack.c.b16 %v2327, %v2319
    %v3048 = vpack.c.b16 %v2328, %v2320
    %v3049 = vpack.c.b16 %v2329, %v2321
    %v3050 = vpack.c.b16 %v2330, %v2322
    %v3051 = vpack.c.b16 %v2331, %v2323
    %v3052 = vpack.c.b16 %v2340, %v2332
    %v3053 = vpack.c.b16 %v2341, %v2333
    %v3054 = vpack.c.b16 %v2342, %v2334
    %v3055 = vpack.c.b16 %v2343, %v2335
    %v3056 = vpack.c.b16 %v2344, %v2336
    %v3057 = vpack.c.b16 %v2345, %v2337
    %v3058 = vpack.c.b16 %v2346, %v2338
    %v3059 = vpack.c.b16 %v2347, %v2339
    %v3060 = vpack.c.b16 %v2356, %v2348
    %v3061 = vpack.c.b16 %v2357, %v2349
    %v3062 = vpack.c.b16 %v2358, %v2350
    %v3063 = vpack.c.b16 %v2359, %v2351
    %v3064 = vpack.c.b16 %v2360, %v2352
    %v3065 = vpack.c.b16 %v2361, %v2353
    %v3066 = vpack.c.b16 %v2362, %v2354
    %v3067 = vpack.c.b16 %v2363, %v2355
    %v3068 = vpack.c.b16 %v2372, %v2364
    %v3069 = vpack.c.b16 %v2373, %v2365
    %v3070 = vpack.c.b16 %v2374, %v2366
    %v3071 = vpack.c.b16 %v2375, %v2367
    %v3072 = vpack.c.b16 %v2376, %v2368
    %v3073 = vpack.c.b16 %v2377, %v2369
    %v3074 = vpack.c.b16 %v2378, %v2370
    %v3075 = vpack.c.b16 %v2379, %v2371
    %v3076 = vpack.c.b16 %v2388, %v2380
    %v3077 = vpack.c.b16 %v2389, %v2381
    %v3078 = vpack.c.b16 %v2390, %v2382
    %v3079 = vpack.c.b16 %v2391, %v2383
    %v3080 = vpack.c.b16 %v2392, %v2384
    %v3081 = vpack.c.b16 %v2393, %v2385
    %v3082 = vpack.c.b16 %v2394, %v2386
    %v3083 = vpack.c.b16 %v2395, %v2387
    %v3084 = vpack.c.b16 %v2404, %v2396
    %v3085 = vpack.c.b16 %v2405, %v2397
    %v3086 = vpack.c.b16 %v2406, %v2398
    %v3087 = vpack.c.b16 %v2407, %v2399
    %v3088 = vpack.c.b16 %v2408, %v2400
    %v3089 = vpack.c.b16 %v2409, %v2401
    %v3090 = vpack.c.b16 %v2410, %v2402
    %v3091 = vpack.c.b16 %v2411, %v2403
    %v3092 = vpack.c.b16 %v2420, %v2412
    %v3093 = vpack.c.b16 %v2421, %v2413
    %v3094 = vpack.c.b16 %v2422, %v2414
    %v3095 = vpack.c.b16 %v2423, %v2415
    %v3096 = vpack.c.b16 %v2424, %v2416
    %v3097 = vpack.c.b16 %v2425, %v2417
    %v3098 = vpack.c.b16 %v2426, %v2418
    %v3099 = vpack.c.b16 %v2427, %v2419
    %v3100 = vpack.c.b16 %v2436, %v2428
    %v3101 = vpack.c.b16 %v2437, %v2429
    %v3102 = vpack.c.b16 %v2438, %v2430
    %v3103 = vpack.c.b16 %v2439, %v2431
    %v3104 = vpack.c.b16 %v2440, %v2432
    %v3105 = vpack.c.b16 %v2441, %v2433
    %v3106 = vpack.c.b16 %v2442, %v2434
    %v3107 = vpack.c.b16 %v2443, %v2435
    %v3108 = vpack.c.b16 %v2452, %v2444
    %v3109 = vpack.c.b16 %v2453, %v2445
    %v3110 = vpack.c.b16 %v2454, %v2446
    %v3111 = vpack.c.b16 %v2455, %v2447
    %v3112 = vpack.c.b16 %v2456, %v2448
    %v3113 = vpack.c.b16 %v2457, %v2449
    %v3114 = vpack.c.b16 %v2458, %v2450
    %v3115 = vpack.c.b16 %v2459, %v2451
    %v3116 = vpack.c.b16 %v2468, %v2460
    %v3117 = vpack.c.b16 %v2469, %v2461
    %v3118 = vpack.c.b16 %v2470, %v2462
    %v3119 = vpack.c.b16 %v2471, %v2463
    %v3120 = vpack.c.b16 %v2472, %v2464
    %v3121 = vpack.c.b16 %v2473, %v2465
    %v3122 = vpack.c.b16 %v2474, %v2466
    %v3123 = vpack.c.b16 %v2475, %v2467
    %v3124 = vpack.c.b16 %v2484, %v2476
    %v3125 = vpack.c.b16 %v2485, %v2477
    %v3126 = vpack.c.b16 %v2486, %v2478
    %v3127 = vpack.c.b16 %v2487, %v2479
    %v3128 = vpack.c.b16 %v2488, %v2480
    %v3129 = vpack.c.b16 %v2489, %v2481
    %v3130 = vpack.c.b16 %v2490, %v2482
    %v3131 = vpack.c.b16 %v2491, %v2483
    %v3132 = vpack.c.b16 %v2500, %v2492
    %v3133 = vpack.c.b16 %v2501, %v2493
    %v3134 = vpack.c.b16 %v2502, %v2494
    %v3135 = vpack.c.b16 %v2503, %v2495
    %v3136 = vpack.c.b16 %v2504, %v2496
    %v3137 = vpack.c.b16 %v2505, %v2497
    %v3138 = vpack.c.b16 %v2506, %v2498
    %v3139 = vpack.c.b16 %v2507, %v2499
    %v3140 = vpack.c.b16 %v2516, %v2508
    %v3141 = vpack.c.b16 %v2517, %v2509
    %v3142 = vpack.c.b16 %v2518, %v2510
    %v3143 = vpack.c.b16 %v2519, %v2511
    %v3144 = vpack.c.b16 %v2520, %v2512
    %v3145 = vpack.c.b16 %v2521, %v2513
    %v3146 = vpack.c.b16 %v2522, %v2514
    %v3147 = vpack.c.b16 %v2523, %v2515
    %v3148 = vpack.c.b16 %v2532, %v2524
    %v3149 = vpack.c.b16 %v2533, %v2525
    %v3150 = vpack.c.b16 %v2534, %v2526
    %v3151 = vpack.c.b16 %v2535, %v2527
    %v3152 = vpack.c.b16 %v2536, %v2528
    %v3153 = vpack.c.b16 %v2537, %v2529
    %v3154 = vpack.c.b16 %v2538, %v2530
    %v3155 = vpack.c.b16 %v2539, %v2531
    %v3156 = vpack.c.b16 %v2548, %v2540
    %v3157 = vpack.c.b16 %v2549, %v2541
    %v3158 = vpack.c.b16 %v2550, %v2542
    %v3159 = vpack.c.b16 %v2551, %v2543
    %v3160 = vpack.c.b16 %v2552, %v2544
    %v3161 = vpack.c.b16 %v2553, %v2545
    %v3162 = vpack.c.b16 %v2554, %v2546
    %v3163 = vpack.c.b16 %v2555, %v2547
    %v3164 = vpack.c.b16 %v2564, %v2556
    %v3165 = vpack.c.b16 %v2565, %v2557
    %v3166 = vpack.c.b16 %v2566, %v2558
    %v3167 = vpack.c.b16 %v2567, %v2559
    %v3168 = vpack.c.b16 %v2568, %v2560
    %v3169 = vpack.c.b16 %v2569, %v2561
    %v3170 = vpack.c.b16 %v2570, %v2562
    %v3171 = vpack.c.b16 %v2571, %v2563
    %v3172 = vpack.c.b16 %v2580, %v2572
    %v3173 = vpack.c.b16 %v2581, %v2573
    %v3174 = vpack.c.b16 %v2582, %v2574
    %v3175 = vpack.c.b16 %v2583, %v2575
    %v3176 = vpack.c.b16 %v2584, %v2576
    %v3177 = vpack.c.b16 %v2585, %v2577
    %v3178 = vpack.c.b16 %v2586, %v2578
    %v3179 = vpack.c.b16 %v2587, %v2579
    %v3180 = vpack.c.b16 %v2596, %v2588
    %v3181 = vpack.c.b16 %v2597, %v2589
    %v3182 = vpack.c.b16 %v2598, %v2590
    %v3183 = vpack.c.b16 %v2599, %v2591
    %v3184 = vpack.c.b16 %v2600, %v2592
    %v3185 = vpack.c.b16 %v2601, %v2593
    %v3186 = vpack.c.b16 %v2602, %v2594
    %v3187 = vpack.c.b16 %v2603, %v2595
    %v3188 = vpack.c.b16 %v2612, %v2604
    %v3189 = vpack.c.b16 %v2613, %v2605
    %v3190 = vpack.c.b16 %v2614, %v2606
    %v3191 = vpack.c.b16 %v2615, %v2607
    %v3192 = vpack.c.b16 %v2616, %v2608
    %v3193 = vpack.c.b16 %v2617, %v2609
    %v3194 = vpack.c.b16 %v2618, %v2610
    %v3195 = vpack.c.b16 %v2619, %v2611
    %v3196 = vpack.c.b16 %v2628, %v2620
    %v3197 = vpack.c.b16 %v2629, %v2621
    %v3198 = vpack.c.b16 %v2630, %v2622
    %v3199 = vpack.c.b16 %v2631, %v2623
    %v3200 = vpack.c.b16 %v2632, %v2624
    %v3201 = vpack.c.b16 %v2633, %v2625
    %v3202 = vpack.c.b16 %v2634, %v2626
    %v3203 = vpack.c.b16 %v2635, %v2627
    %v3204 = vpack.c.b16 %v2644, %v2636
    %v3205 = vpack.c.b16 %v2645, %v2637
    %v3206 = vpack.c.b16 %v2646, %v2638
    %v3207 = vpack.c.b16 %v2647, %v2639
    %v3208 = vpack.c.b16 %v2648, %v2640
    %v3209 = vpack.c.b16 %v2649, %v2641
    %v3210 = vpack.c.b16 %v2650, %v2642
    %v3211 = vpack.c.b16 %v2651, %v2643
    %v3212 = vpack.c.b16 %v2660, %v2652
    %v3213 = vpack.c.b16 %v2661, %v2653
    %v3214 = vpack.c.b16 %v2662, %v2654
    %v3215 = vpack.c.b16 %v2663, %v2655
    %v3216 = vpack.c.b16 %v2664, %v2656
    %v3217 = vpack.c.b16 %v2665, %v2657
    %v3218 = vpack.c.b16 %v2666, %v2658
    %v3219 = vpack.c.b16 %v2667, %v2659
    %v3220 = vpack.c.b16 %v2676, %v2668
    %v3221 = vpack.c.b16 %v2677, %v2669
    %v3222 = vpack.c.b16 %v2678, %v2670
    %v3223 = vpack.c.b16 %v2679, %v2671
    %v3224 = vpack.c.b16 %v2680, %v2672
    %v3225 = vpack.c.b16 %v2681, %v2673
    %v3226 = vpack.c.b16 %v2682, %v2674
    %v3227 = vpack.c.b16 %v2683, %v2675
    %v3228 = vpack.c.b16 %v2692, %v2684
    %v3229 = vpack.c.b16 %v2693, %v2685
    %v3230 = vpack.c.b16 %v2694, %v2686
    %v3231 = vpack.c.b16 %v2695, %v2687
    %v3232 = vpack.c.b16 %v2696, %v2688
    %v3233 = vpack.c.b16 %v2697, %v2689
    %v3234 = vpack.c.b16 %v2698, %v2690
    %v3235 = vpack.c.b16 %v2699, %v2691
    %v3236 = vpack.c.b16 %v2708, %v2700
    %v3237 = vpack.c.b16 %v2709, %v2701
    %v3238 = vpack.c.b16 %v2710, %v2702
    %v3239 = vpack.c.b16 %v2711, %v2703
    %v3240 = vpack.c.b16 %v2712, %v2704
    %v3241 = vpack.c.b16 %v2713, %v2705
    %v3242 = vpack.c.b16 %v2714, %v2706
    %v3243 = vpack.c.b16 %v2715, %v2707
    %v3244 = vpack.c.b16 %v2724, %v2716
    %v3245 = vpack.c.b16 %v2725, %v2717
    %v3246 = vpack.c.b16 %v2726, %v2718
    %v3247 = vpack.c.b16 %v2727, %v2719
    %v3248 = vpack.c.b16 %v2728, %v2720
    %v3249 = vpack.c.b16 %v2729, %v2721
    %v3250 = vpack.c.b16 %v2730, %v2722
    %v3251 = vpack.c.b16 %v2731, %v2723
    %v3252 = vpack.c.b16 %v2740, %v2732
    %v3253 = vpack.c.b16 %v2741, %v2733
    %v3254 = vpack.c.b16 %v2742, %v2734
    %v3255 = vpack.c.b16 %v2743, %v2735
    %v3256 = vpack.c.b16 %v2744, %v2736
    %v3257 = vpack.c.b16 %v2745, %v2737
    %v3258 = vpack.c.b16 %v2746, %v2738
    %v3259 = vpack.c.b16 %v2747, %v2739
    %3772 = vmatprep.subr.bf16.mxu0 %v2749
    %3773 = vmatpush1.bf16.msra.mxu0 %v2748
    %3774 = vmatprep.subr.bf16.mxu0 %v2757
    %3775 = vmatpush1.bf16.msra.mxu0 %v2756
    %3776 = vmatprep.subr.bf16.mxu0 %v2765
    %3777 = vmatpush1.bf16.msra.mxu0 %v2764
    %3778 = vmatprep.subr.bf16.mxu0 %v2773
    %3779 = vmatpush1.bf16.msra.mxu0 %v2772
    %3780 = vmatprep.subr.bf16.mxu0 %v2781
    %3781 = vmatpush1.bf16.msra.mxu0 %v2780
    %3782 = vmatprep.subr.bf16.mxu0 %v2789
    %3783 = vmatpush1.bf16.msra.mxu0 %v2788
    %3784 = vmatprep.subr.bf16.mxu0 %v2797
    %3785 = vmatpush1.bf16.msra.mxu0 %v2796
    %3786 = vmatprep.subr.bf16.mxu0 %v2805
    %3787 = vmatpush1.bf16.msra.mxu0 %v2804
    %3788 = vmatprep.subr.bf16.mxu0 %v2813
    %3789 = vmatpush1.bf16.msra.mxu0 %v2812
    %3790 = vmatprep.subr.bf16.mxu0 %v2821
    %3791 = vmatpush1.bf16.msra.mxu0 %v2820
    %3792 = vmatprep.subr.bf16.mxu0 %v2829
    %3793 = vmatpush1.bf16.msra.mxu0 %v2828
    %3794 = vmatprep.subr.bf16.mxu0 %v2837
    %3795 = vmatpush1.bf16.msra.mxu0 %v2836
    %3796 = vmatprep.subr.bf16.mxu0 %v2845
    %3797 = vmatpush1.bf16.msra.mxu0 %v2844
    %3798 = vmatprep.subr.bf16.mxu0 %v2853
    %3799 = vmatpush1.bf16.msra.mxu0 %v2852
    %3800 = vmatprep.subr.bf16.mxu0 %v2861
    %3801 = vmatpush1.bf16.msra.mxu0 %v2860
    %3802 = vmatprep.subr.bf16.mxu0 %v2869
    %3803 = vmatpush1.bf16.msra.mxu0 %v2868
    %3804 = vmatprep.mubr.bf16.mxu0 %v651
    %3805 = vmatmul.mubr.bf16.gmra.mrb[0].mxu0 %v650
    %v3806 = vpop.f32.mrb[0].mxu0
    %v3807 = vadd.f32 %v1175, %v3806
    %v3808 = vpop.f32.mrb[0].mxu0
    %v3809 = vadd.f32 %v1179, %v3808
    %v3810 = vpop.f32.mrb[0].mxu0
    %v3811 = vadd.f32 %v1175, %v3810
    %v3812 = vpop.f32.mrb[0].mxu0
    %v3813 = vadd.f32 %v1179, %v3812
    %3814 = vdwg.mxu0
    %3815 = vmatprep.subr.bf16.mxu0 %v2877
    %3816 = vmatpush1.bf16.msra.mxu0 %v2876
    %3817 = vmatprep.subr.bf16.mxu0 %v2885
    %3818 = vmatpush1.bf16.msra.mxu0 %v2884
    %3819 = vmatprep.subr.bf16.mxu0 %v2893
    %3820 = vmatpush1.bf16.msra.mxu0 %v2892
    %3821 = vmatprep.subr.bf16.mxu0 %v2901
    %3822 = vmatpush1.bf16.msra.mxu0 %v2900
    %3823 = vmatprep.subr.bf16.mxu0 %v2909
    %3824 = vmatpush1.bf16.msra.mxu0 %v2908
    %3825 = vmatprep.subr.bf16.mxu0 %v2917
    %3826 = vmatpush1.bf16.msra.mxu0 %v2916
    %3827 = vmatprep.subr.bf16.mxu0 %v2925
    %3828 = vmatpush1.bf16.msra.mxu0 %v2924
    %3829 = vmatprep.subr.bf16.mxu0 %v2933
    %3830 = vmatpush1.bf16.msra.mxu0 %v2932
    %3831 = vmatprep.subr.bf16.mxu0 %v2941
    %3832 = vmatpush1.bf16.msra.mxu0 %v2940
    %3833 = vmatprep.subr.bf16.mxu0 %v2949
    %3834 = vmatpush1.bf16.msra.mxu0 %v2948
    %3835 = vmatprep.subr.bf16.mxu0 %v2957
    %3836 = vmatpush1.bf16.msra.mxu0 %v2956
    %3837 = vmatprep.subr.bf16.mxu0 %v2965
    %3838 = vmatpush1.bf16.msra.mxu0 %v2964
    %3839 = vmatprep.subr.bf16.mxu0 %v2973
    %3840 = vmatpush1.bf16.msra.mxu0 %v2972
    %3841 = vmatprep.subr.bf16.mxu0 %v2981
    %3842 = vmatpush1.bf16.msra.mxu0 %v2980
    %3843 = vmatprep.subr.bf16.mxu0 %v2989
    %3844 = vmatpush1.bf16.msra.mxu0 %v2988
    %3845 = vmatprep.subr.bf16.mxu0 %v2997
    %3846 = vmatpush1.bf16.msra.mxu0 %v2996
    %3847 = vmatprep.mubr.bf16.mxu0 %v653
    %3848 = vmatmul.mubr.bf16.gmra.mrb[0].mxu0 %v652
    %v3849 = vpop.f32.mrb[0].mxu0
    %v3850 = vadd.f32 %v3807, %v3849
    %v3851 = vpop.f32.mrb[0].mxu0
    %v3852 = vadd.f32 %v3809, %v3851
    %v3853 = vpop.f32.mrb[0].mxu0
    %v3854 = vadd.f32 %v3811, %v3853
    %v3855 = vpop.f32.mrb[0].mxu0
    %v3856 = vadd.f32 %v3813, %v3855
    %3857 = vdwg.mxu0
    %3858 = vmatprep.subr.bf16.mxu0 %v3005
    %3859 = vmatpush1.bf16.msra.mxu0 %v3004
    %3860 = vmatprep.subr.bf16.mxu0 %v3013
    %3861 = vmatpush1.bf16.msra.mxu0 %v3012
    %3862 = vmatprep.subr.bf16.mxu0 %v3021
    %3863 = vmatpush1.bf16.msra.mxu0 %v3020
    %3864 = vmatprep.subr.bf16.mxu0 %v3029
    %3865 = vmatpush1.bf16.msra.mxu0 %v3028
    %3866 = vmatprep.subr.bf16.mxu0 %v3037
    %3867 = vmatpush1.bf16.msra.mxu0 %v3036
    %3868 = vmatprep.subr.bf16.mxu0 %v3045
    %3869 = vmatpush1.bf16.msra.mxu0 %v3044
    %3870 = vmatprep.subr.bf16.mxu0 %v3053
    %3871 = vmatpush1.bf16.msra.mxu0 %v3052
    %3872 = vmatprep.subr.bf16.mxu0 %v3061
    %3873 = vmatpush1.bf16.msra.mxu0 %v3060
    %3874 = vmatprep.subr.bf16.mxu0 %v3069
    %3875 = vmatpush1.bf16.msra.mxu0 %v3068
    %3876 = vmatprep.subr.bf16.mxu0 %v3077
    %3877 = vmatpush1.bf16.msra.mxu0 %v3076
    %3878 = vmatprep.subr.bf16.mxu0 %v3085
    %3879 = vmatpush1.bf16.msra.mxu0 %v3084
    %3880 = vmatprep.subr.bf16.mxu0 %v3093
    %3881 = vmatpush1.bf16.msra.mxu0 %v3092
    %3882 = vmatprep.subr.bf16.mxu0 %v3101
    %3883 = vmatpush1.bf16.msra.mxu0 %v3100
    %3884 = vmatprep.subr.bf16.mxu0 %v3109
    %3885 = vmatpush1.bf16.msra.mxu0 %v3108
    %3886 = vmatprep.subr.bf16.mxu0 %v3117
    %3887 = vmatpush1.bf16.msra.mxu0 %v3116
    %3888 = vmatprep.subr.bf16.mxu0 %v3125
    %3889 = vmatpush1.bf16.msra.mxu0 %v3124
    %3890 = vmatprep.mubr.bf16.mxu0 %v655
    %3891 = vmatmul.mubr.bf16.gmra.mrb[0].mxu0 %v654
    %v3892 = vpop.f32.mrb[0].mxu0
    %v3893 = vadd.f32 %v3850, %v3892
    %v3894 = vpop.f32.mrb[0].mxu0
    %v3895 = vadd.f32 %v3852, %v3894
    %v3896 = vpop.f32.mrb[0].mxu0
    %v3897 = vadd.f32 %v3854, %v3896
    %v3898 = vpop.f32.mrb[0].mxu0
    %v3899 = vadd.f32 %v3856, %v3898
    %3900 = vdwg.mxu0
    %3901 = vmatprep.subr.bf16.mxu0 %v3133
    %3902 = vmatpush1.bf16.msra.mxu0 %v3132
    %3903 = vmatprep.subr.bf16.mxu0 %v3141
    %3904 = vmatpush1.bf16.msra.mxu0 %v3140
    %3905 = vmatprep.subr.bf16.mxu0 %v3149
    %3906 = vmatpush1.bf16.msra.mxu0 %v3148
    %3907 = vmatprep.subr.bf16.mxu0 %v3157
    %3908 = vmatpush1.bf16.msra.mxu0 %v3156
    %3909 = vmatprep.subr.bf16.mxu0 %v3165
    %3910 = vmatpush1.bf16.msra.mxu0 %v3164
    %3911 = vmatprep.subr.bf16.mxu0 %v3173
    %3912 = vmatpush1.bf16.msra.mxu0 %v3172
    %3913 = vmatprep.subr.bf16.mxu0 %v3181
    %3914 = vmatpush1.bf16.msra.mxu0 %v3180
    %3915 = vmatprep.subr.bf16.mxu0 %v3189
    %3916 = vmatpush1.bf16.msra.mxu0 %v3188
    %3917 = vmatprep.subr.bf16.mxu0 %v3197
    %3918 = vmatpush1.bf16.msra.mxu0 %v3196
    %3919 = vmatprep.subr.bf16.mxu0 %v3205
    %3920 = vmatpush1.bf16.msra.mxu0 %v3204
    %3921 = vmatprep.subr.bf16.mxu0 %v3213
    %3922 = vmatpush1.bf16.msra.mxu0 %v3212
    %3923 = vmatprep.subr.bf16.mxu0 %v3221
    %3924 = vmatpush1.bf16.msra.mxu0 %v3220
    %3925 = vmatprep.subr.bf16.mxu0 %v3229
    %3926 = vmatpush1.bf16.msra.mxu0 %v3228
    %3927 = vmatprep.subr.bf16.mxu0 %v3237
    %3928 = vmatpush1.bf16.msra.mxu0 %v3236
    %3929 = vmatprep.subr.bf16.mxu0 %v3245
    %3930 = vmatpush1.bf16.msra.mxu0 %v3244
    %3931 = vmatprep.subr.bf16.mxu0 %v3253
    %3932 = vmatpush1.bf16.msra.mxu0 %v3252
    %3933 = vmatprep.mubr.bf16.mxu0 %v657
    %3934 = vmatmul.mubr.bf16.gmra.mrb[0].mxu0 %v656
    %v3935 = vpop.f32.mrb[0].mxu0
    %v3936 = vadd.f32 %v3893, %v3935
    %v3937 = vpop.f32.mrb[0].mxu0
    %v3938 = vadd.f32 %v3895, %v3937
    %v3939 = vpop.f32.mrb[0].mxu0
    %v3940 = vadd.f32 %v3897, %v3939
    %v3941 = vpop.f32.mrb[0].mxu0
    %v3942 = vadd.f32 %v3899, %v3941
    %3943 = vdwg.mxu0
    %3944 = vmatprep.subr.bf16.mxu0 %v2751
    %3945 = vmatpush1.bf16.msra.mxu0 %v2750
    %3946 = vmatprep.subr.bf16.mxu0 %v2759
    %3947 = vmatpush1.bf16.msra.mxu0 %v2758
    %3948 = vmatprep.subr.bf16.mxu0 %v2767
    %3949 = vmatpush1.bf16.msra.mxu0 %v2766
    %3950 = vmatprep.subr.bf16.mxu0 %v2775
    %3951 = vmatpush1.bf16.msra.mxu0 %v2774
    %3952 = vmatprep.subr.bf16.mxu0 %v2783
    %3953 = vmatpush1.bf16.msra.mxu0 %v2782
    %3954 = vmatprep.subr.bf16.mxu0 %v2791
    %3955 = vmatpush1.bf16.msra.mxu0 %v2790
    %3956 = vmatprep.subr.bf16.mxu0 %v2799
    %3957 = vmatpush1.bf16.msra.mxu0 %v2798
    %3958 = vmatprep.subr.bf16.mxu0 %v2807
    %3959 = vmatpush1.bf16.msra.mxu0 %v2806
    %3960 = vmatprep.subr.bf16.mxu0 %v2815
    %3961 = vmatpush1.bf16.msra.mxu0 %v2814
    %3962 = vmatprep.subr.bf16.mxu0 %v2823
    %3963 = vmatpush1.bf16.msra.mxu0 %v2822
    %3964 = vmatprep.subr.bf16.mxu0 %v2831
    %3965 = vmatpush1.bf16.msra.mxu0 %v2830
    %3966 = vmatprep.subr.bf16.mxu0 %v2839
    %3967 = vmatpush1.bf16.msra.mxu0 %v2838
    %3968 = vmatprep.subr.bf16.mxu0 %v2847
    %3969 = vmatpush1.bf16.msra.mxu0 %v2846
    %3970 = vmatprep.subr.bf16.mxu0 %v2855
    %3971 = vmatpush1.bf16.msra.mxu0 %v2854
    %3972 = vmatprep.subr.bf16.mxu0 %v2863
    %3973 = vmatpush1.bf16.msra.mxu0 %v2862
    %3974 = vmatprep.subr.bf16.mxu0 %v2871
    %3975 = vmatpush1.bf16.msra.mxu0 %v2870
    %3976 = vmatprep.mubr.bf16.mxu0 %v651
    %3977 = vmatmul.mubr.bf16.gmra.mrb[0].mxu0 %v650
    %v3978 = vpop.f32.mrb[0].mxu0
    %v3979 = vadd.f32 %v1183, %v3978
    %v3980 = vpop.f32.mrb[0].mxu0
    %v3981 = vadd.f32 %v1187, %v3980
    %v3982 = vpop.f32.mrb[0].mxu0
    %v3983 = vadd.f32 %v1183, %v3982
    %v3984 = vpop.f32.mrb[0].mxu0
    %v3985 = vadd.f32 %v1187, %v3984
    %3986 = vdwg.mxu0
    %3987 = vmatprep.subr.bf16.mxu0 %v2879
    %3988 = vmatpush1.bf16.msra.mxu0 %v2878
    %3989 = vmatprep.subr.bf16.mxu0 %v2887
    %3990 = vmatpush1.bf16.msra.mxu0 %v2886
    %3991 = vmatprep.subr.bf16.mxu0 %v2895
    %3992 = vmatpush1.bf16.msra.mxu0 %v2894
    %3993 = vmatprep.subr.bf16.mxu0 %v2903
    %3994 = vmatpush1.bf16.msra.mxu0 %v2902
    %3995 = vmatprep.subr.bf16.mxu0 %v2911
    %3996 = vmatpush1.bf16.msra.mxu0 %v2910
    %3997 = vmatprep.subr.bf16.mxu0 %v2919
    %3998 = vmatpush1.bf16.msra.mxu0 %v2918
    %3999 = vmatprep.subr.bf16.mxu0 %v2927
    %4000 = vmatpush1.bf16.msra.mxu0 %v2926
    %4001 = vmatprep.subr.bf16.mxu0 %v2935
    %4002 = vmatpush1.bf16.msra.mxu0 %v2934
    %4003 = vmatprep.subr.bf16.mxu0 %v2943
    %4004 = vmatpush1.bf16.msra.mxu0 %v2942
    %4005 = vmatprep.subr.bf16.mxu0 %v2951
    %4006 = vmatpush1.bf16.msra.mxu0 %v2950
    %4007 = vmatprep.subr.bf16.mxu0 %v2959
    %4008 = vmatpush1.bf16.msra.mxu0 %v2958
    %4009 = vmatprep.subr.bf16.mxu0 %v2967
    %4010 = vmatpush1.bf16.msra.mxu0 %v2966
    %4011 = vmatprep.subr.bf16.mxu0 %v2975
    %4012 = vmatpush1.bf16.msra.mxu0 %v2974
    %4013 = vmatprep.subr.bf16.mxu0 %v2983
    %4014 = vmatpush1.bf16.msra.mxu0 %v2982
    %4015 = vmatprep.subr.bf16.mxu0 %v2991
    %4016 = vmatpush1.bf16.msra.mxu0 %v2990
    %4017 = vmatprep.subr.bf16.mxu0 %v2999
    %4018 = vmatpush1.bf16.msra.mxu0 %v2998
    %4019 = vmatprep.mubr.bf16.mxu0 %v653
    %4020 = vmatmul.mubr.bf16.gmra.mrb[0].mxu0 %v652
    %v4021 = vpop.f32.mrb[0].mxu0
    %v4022 = vadd.f32 %v3979, %v4021
    %v4023 = vpop.f32.mrb[0].mxu0
    %v4024 = vadd.f32 %v3981, %v4023
    %v4025 = vpop.f32.mrb[0].mxu0
    %v4026 = vadd.f32 %v3983, %v4025
    %v4027 = vpop.f32.mrb[0].mxu0
    %v4028 = vadd.f32 %v3985, %v4027
    %4029 = vdwg.mxu0
    %4030 = vmatprep.subr.bf16.mxu0 %v3007
    %4031 = vmatpush1.bf16.msra.mxu0 %v3006
    %4032 = vmatprep.subr.bf16.mxu0 %v3015
    %4033 = vmatpush1.bf16.msra.mxu0 %v3014
    %4034 = vmatprep.subr.bf16.mxu0 %v3023
    %4035 = vmatpush1.bf16.msra.mxu0 %v3022
    %4036 = vmatprep.subr.bf16.mxu0 %v3031
    %4037 = vmatpush1.bf16.msra.mxu0 %v3030
    %4038 = vmatprep.subr.bf16.mxu0 %v3039
    %4039 = vmatpush1.bf16.msra.mxu0 %v3038
    %4040 = vmatprep.subr.bf16.mxu0 %v3047
    %4041 = vmatpush1.bf16.msra.mxu0 %v3046
    %4042 = vmatprep.subr.bf16.mxu0 %v3055
    %4043 = vmatpush1.bf16.msra.mxu0 %v3054
    %4044 = vmatprep.subr.bf16.mxu0 %v3063
    %4045 = vmatpush1.bf16.msra.mxu0 %v3062
    %4046 = vmatprep.subr.bf16.mxu0 %v3071
    %4047 = vmatpush1.bf16.msra.mxu0 %v3070
    %4048 = vmatprep.subr.bf16.mxu0 %v3079
    %4049 = vmatpush1.bf16.msra.mxu0 %v3078
    %4050 = vmatprep.subr.bf16.mxu0 %v3087
    %4051 = vmatpush1.bf16.msra.mxu0 %v3086
    %4052 = vmatprep.subr.bf16.mxu0 %v3095
    %4053 = vmatpush1.bf16.msra.mxu0 %v3094
    %4054 = vmatprep.subr.bf16.mxu0 %v3103
    %4055 = vmatpush1.bf16.msra.mxu0 %v3102
    %4056 = vmatprep.subr.bf16.mxu0 %v3111
    %4057 = vmatpush1.bf16.msra.mxu0 %v3110
    %4058 = vmatprep.subr.bf16.mxu0 %v3119
    %4059 = vmatpush1.bf16.msra.mxu0 %v3118
    %4060 = vmatprep.subr.bf16.mxu0 %v3127
    %4061 = vmatpush1.bf16.msra.mxu0 %v3126
    %4062 = vmatprep.mubr.bf16.mxu0 %v655
    %4063 = vmatmul.mubr.bf16.gmra.mrb[0].mxu0 %v654
    %v4064 = vpop.f32.mrb[0].mxu0
    %v4065 = vadd.f32 %v4022, %v4064
    %v4066 = vpop.f32.mrb[0].mxu0
    %v4067 = vadd.f32 %v4024, %v4066
    %v4068 = vpop.f32.mrb[0].mxu0
    %v4069 = vadd.f32 %v4026, %v4068
    %v4070 = vpop.f32.mrb[0].mxu0
    %v4071 = vadd.f32 %v4028, %v4070
    %4072 = vdwg.mxu0
    %4073 = vmatprep.subr.bf16.mxu0 %v3135
    %4074 = vmatpush1.bf16.msra.mxu0 %v3134
    %4075 = vmatprep.subr.bf16.mxu0 %v3143
    %4076 = vmatpush1.bf16.msra.mxu0 %v3142
    %4077 = vmatprep.subr.bf16.mxu0 %v3151
    %4078 = vmatpush1.bf16.msra.mxu0 %v3150
    %4079 = vmatprep.subr.bf16.mxu0 %v3159
    %4080 = vmatpush1.bf16.msra.mxu0 %v3158
    %4081 = vmatprep.subr.bf16.mxu0 %v3167
    %4082 = vmatpush1.bf16.msra.mxu0 %v3166
    %4083 = vmatprep.subr.bf16.mxu0 %v3175
    %4084 = vmatpush1.bf16.msra.mxu0 %v3174
    %4085 = vmatprep.subr.bf16.mxu0 %v3183
    %4086 = vmatpush1.bf16.msra.mxu0 %v3182
    %4087 = vmatprep.subr.bf16.mxu0 %v3191
    %4088 = vmatpush1.bf16.msra.mxu0 %v3190
    %4089 = vmatprep.subr.bf16.mxu0 %v3199
    %4090 = vmatpush1.bf16.msra.mxu0 %v3198
    %4091 = vmatprep.subr.bf16.mxu0 %v3207
    %4092 = vmatpush1.bf16.msra.mxu0 %v3206
    %4093 = vmatprep.subr.bf16.mxu0 %v3215
    %4094 = vmatpush1.bf16.msra.mxu0 %v3214
    %4095 = vmatprep.subr.bf16.mxu0 %v3223
    %4096 = vmatpush1.bf16.msra.mxu0 %v3222
    %4097 = vmatprep.subr.bf16.mxu0 %v3231
    %4098 = vmatpush1.bf16.msra.mxu0 %v3230
    %4099 = vmatprep.subr.bf16.mxu0 %v3239
    %4100 = vmatpush1.bf16.msra.mxu0 %v3238
    %4101 = vmatprep.subr.bf16.mxu0 %v3247
    %4102 = vmatpush1.bf16.msra.mxu0 %v3246
    %4103 = vmatprep.subr.bf16.mxu0 %v3255
    %4104 = vmatpush1.bf16.msra.mxu0 %v3254
    %4105 = vmatprep.mubr.bf16.mxu0 %v657
    %4106 = vmatmul.mubr.bf16.gmra.mrb[0].mxu0 %v656
    %v4107 = vpop.f32.mrb[0].mxu0
    %v4108 = vadd.f32 %v4065, %v4107
    %v4109 = vpop.f32.mrb[0].mxu0
    %v4110 = vadd.f32 %v4067, %v4109
    %v4111 = vpop.f32.mrb[0].mxu0
    %v4112 = vadd.f32 %v4069, %v4111
    %v4113 = vpop.f32.mrb[0].mxu0
    %v4114 = vadd.f32 %v4071, %v4113
    %4115 = vdwg.mxu0
    %4116 = vmatprep.subr.bf16.mxu0 %v2753
    %4117 = vmatpush1.bf16.msra.mxu0 %v2752
    %4118 = vmatprep.subr.bf16.mxu0 %v2761
    %4119 = vmatpush1.bf16.msra.mxu0 %v2760
    %4120 = vmatprep.subr.bf16.mxu0 %v2769
    %4121 = vmatpush1.bf16.msra.mxu0 %v2768
    %4122 = vmatprep.subr.bf16.mxu0 %v2777
    %4123 = vmatpush1.bf16.msra.mxu0 %v2776
    %4124 = vmatprep.subr.bf16.mxu0 %v2785
    %4125 = vmatpush1.bf16.msra.mxu0 %v2784
    %4126 = vmatprep.subr.bf16.mxu0 %v2793
    %4127 = vmatpush1.bf16.msra.mxu0 %v2792
    %4128 = vmatprep.subr.bf16.mxu0 %v2801
    %4129 = vmatpush1.bf16.msra.mxu0 %v2800
    %4130 = vmatprep.subr.bf16.mxu0 %v2809
    %4131 = vmatpush1.bf16.msra.mxu0 %v2808
    %4132 = vmatprep.subr.bf16.mxu0 %v2817
    %4133 = vmatpush1.bf16.msra.mxu0 %v2816
    %4134 = vmatprep.subr.bf16.mxu0 %v2825
    %4135 = vmatpush1.bf16.msra.mxu0 %v2824
    %4136 = vmatprep.subr.bf16.mxu0 %v2833
    %4137 = vmatpush1.bf16.msra.mxu0 %v2832
    %4138 = vmatprep.subr.bf16.mxu0 %v2841
    %4139 = vmatpush1.bf16.msra.mxu0 %v2840
    %4140 = vmatprep.subr.bf16.mxu0 %v2849
    %4141 = vmatpush1.bf16.msra.mxu0 %v2848
    %4142 = vmatprep.subr.bf16.mxu0 %v2857
    %4143 = vmatpush1.bf16.msra.mxu0 %v2856
    %4144 = vmatprep.subr.bf16.mxu0 %v2865
    %4145 = vmatpush1.bf16.msra.mxu0 %v2864
    %4146 = vmatprep.subr.bf16.mxu0 %v2873
    %4147 = vmatpush1.bf16.msra.mxu0 %v2872
    %4148 = vmatprep.mubr.bf16.mxu0 %v651
    %4149 = vmatmul.mubr.bf16.gmra.mrb[0].mxu0 %v650
    %v4150 = vpop.f32.mrb[0].mxu0
    %v4151 = vadd.f32 %v1191, %v4150
    %v4152 = vpop.f32.mrb[0].mxu0
    %v4153 = vadd.f32 %v1195, %v4152
    %v4154 = vpop.f32.mrb[0].mxu0
    %v4155 = vadd.f32 %v1191, %v4154
    %v4156 = vpop.f32.mrb[0].mxu0
    %v4157 = vadd.f32 %v1195, %v4156
    %4158 = vdwg.mxu0
    %4159 = vmatprep.subr.bf16.mxu0 %v2881
    %4160 = vmatpush1.bf16.msra.mxu0 %v2880
    %4161 = vmatprep.subr.bf16.mxu0 %v2889
    %4162 = vmatpush1.bf16.msra.mxu0 %v2888
    %4163 = vmatprep.subr.bf16.mxu0 %v2897
    %4164 = vmatpush1.bf16.msra.mxu0 %v2896
    %4165 = vmatprep.subr.bf16.mxu0 %v2905
    %4166 = vmatpush1.bf16.msra.mxu0 %v2904
    %4167 = vmatprep.subr.bf16.mxu0 %v2913
    %4168 = vmatpush1.bf16.msra.mxu0 %v2912
    %4169 = vmatprep.subr.bf16.mxu0 %v2921
    %4170 = vmatpush1.bf16.msra.mxu0 %v2920
    %4171 = vmatprep.subr.bf16.mxu0 %v2929
    %4172 = vmatpush1.bf16.msra.mxu0 %v2928
    %4173 = vmatprep.subr.bf16.mxu0 %v2937
    %4174 = vmatpush1.bf16.msra.mxu0 %v2936
    %4175 = vmatprep.subr.bf16.mxu0 %v2945
    %4176 = vmatpush1.bf16.msra.mxu0 %v2944
    %4177 = vmatprep.subr.bf16.mxu0 %v2953
    %4178 = vmatpush1.bf16.msra.mxu0 %v2952
    %4179 = vmatprep.subr.bf16.mxu0 %v2961
    %4180 = vmatpush1.bf16.msra.mxu0 %v2960
    %4181 = vmatprep.subr.bf16.mxu0 %v2969
    %4182 = vmatpush1.bf16.msra.mxu0 %v2968
    %4183 = vmatprep.subr.bf16.mxu0 %v2977
    %4184 = vmatpush1.bf16.msra.mxu0 %v2976
    %4185 = vmatprep.subr.bf16.mxu0 %v2985
    %4186 = vmatpush1.bf16.msra.mxu0 %v2984
    %4187 = vmatprep.subr.bf16.mxu0 %v2993
    %4188 = vmatpush1.bf16.msra.mxu0 %v2992
    %4189 = vmatprep.subr.bf16.mxu0 %v3001
    %4190 = vmatpush1.bf16.msra.mxu0 %v3000
    %4191 = vmatprep.mubr.bf16.mxu0 %v653
    %4192 = vmatmul.mubr.bf16.gmra.mrb[0].mxu0 %v652
    %v4193 = vpop.f32.mrb[0].mxu0
    %v4194 = vadd.f32 %v4151, %v4193
    %v4195 = vpop.f32.mrb[0].mxu0
    %v4196 = vadd.f32 %v4153, %v4195
    %v4197 = vpop.f32.mrb[0].mxu0
    %v4198 = vadd.f32 %v4155, %v4197
    %v4199 = vpop.f32.mrb[0].mxu0
    %v4200 = vadd.f32 %v4157, %v4199
    %4201 = vdwg.mxu0
    %4202 = vmatprep.subr.bf16.mxu0 %v3009
    %4203 = vmatpush1.bf16.msra.mxu0 %v3008
    %4204 = vmatprep.subr.bf16.mxu0 %v3017
    %4205 = vmatpush1.bf16.msra.mxu0 %v3016
    %4206 = vmatprep.subr.bf16.mxu0 %v3025
    %4207 = vmatpush1.bf16.msra.mxu0 %v3024
    %4208 = vmatprep.subr.bf16.mxu0 %v3033
    %4209 = vmatpush1.bf16.msra.mxu0 %v3032
    %4210 = vmatprep.subr.bf16.mxu0 %v3041
    %4211 = vmatpush1.bf16.msra.mxu0 %v3040
    %4212 = vmatprep.subr.bf16.mxu0 %v3049
    %4213 = vmatpush1.bf16.msra.mxu0 %v3048
    %4214 = vmatprep.subr.bf16.mxu0 %v3057
    %4215 = vmatpush1.bf16.msra.mxu0 %v3056
    %4216 = vmatprep.subr.bf16.mxu0 %v3065
    %4217 = vmatpush1.bf16.msra.mxu0 %v3064
    %4218 = vmatprep.subr.bf16.mxu0 %v3073
    %4219 = vmatpush1.bf16.msra.mxu0 %v3072
    %4220 = vmatprep.subr.bf16.mxu0 %v3081
    %4221 = vmatpush1.bf16.msra.mxu0 %v3080
    %4222 = vmatprep.subr.bf16.mxu0 %v3089
    %4223 = vmatpush1.bf16.msra.mxu0 %v3088
    %4224 = vmatprep.subr.bf16.mxu0 %v3097
    %4225 = vmatpush1.bf16.msra.mxu0 %v3096
    %4226 = vmatprep.subr.bf16.mxu0 %v3105
    %4227 = vmatpush1.bf16.msra.mxu0 %v3104
    %4228 = vmatprep.subr.bf16.mxu0 %v3113
    %4229 = vmatpush1.bf16.msra.mxu0 %v3112
    %4230 = vmatprep.subr.bf16.mxu0 %v3121
    %4231 = vmatpush1.bf16.msra.mxu0 %v3120
    %4232 = vmatprep.subr.bf16.mxu0 %v3129
    %4233 = vmatpush1.bf16.msra.mxu0 %v3128
    %4234 = vmatprep.mubr.bf16.mxu0 %v655
    %4235 = vmatmul.mubr.bf16.gmra.mrb[0].mxu0 %v654
    %v4236 = vpop.f32.mrb[0].mxu0
    %v4237 = vadd.f32 %v4194, %v4236
    %v4238 = vpop.f32.mrb[0].mxu0
    %v4239 = vadd.f32 %v4196, %v4238
    %v4240 = vpop.f32.mrb[0].mxu0
    %v4241 = vadd.f32 %v4198, %v4240
    %v4242 = vpop.f32.mrb[0].mxu0
    %v4243 = vadd.f32 %v4200, %v4242
    %4244 = vdwg.mxu0
    %4245 = vmatprep.subr.bf16.mxu0 %v3137
    %4246 = vmatpush1.bf16.msra.mxu0 %v3136
    %4247 = vmatprep.subr.bf16.mxu0 %v3145
    %4248 = vmatpush1.bf16.msra.mxu0 %v3144
    %4249 = vmatprep.subr.bf16.mxu0 %v3153
    %4250 = vmatpush1.bf16.msra.mxu0 %v3152
    %4251 = vmatprep.subr.bf16.mxu0 %v3161
    %4252 = vmatpush1.bf16.msra.mxu0 %v3160
    %4253 = vmatprep.subr.bf16.mxu0 %v3169
    %4254 = vmatpush1.bf16.msra.mxu0 %v3168
    %4255 = vmatprep.subr.bf16.mxu0 %v3177
    %4256 = vmatpush1.bf16.msra.mxu0 %v3176
    %4257 = vmatprep.subr.bf16.mxu0 %v3185
    %4258 = vmatpush1.bf16.msra.mxu0 %v3184
    %4259 = vmatprep.subr.bf16.mxu0 %v3193
    %4260 = vmatpush1.bf16.msra.mxu0 %v3192
    %4261 = vmatprep.subr.bf16.mxu0 %v3201
    %4262 = vmatpush1.bf16.msra.mxu0 %v3200
    %4263 = vmatprep.subr.bf16.mxu0 %v3209
    %4264 = vmatpush1.bf16.msra.mxu0 %v3208
    %4265 = vmatprep.subr.bf16.mxu0 %v3217
    %4266 = vmatpush1.bf16.msra.mxu0 %v3216
    %4267 = vmatprep.subr.bf16.mxu0 %v3225
    %4268 = vmatpush1.bf16.msra.mxu0 %v3224
    %4269 = vmatprep.subr.bf16.mxu0 %v3233
    %4270 = vmatpush1.bf16.msra.mxu0 %v3232
    %4271 = vmatprep.subr.bf16.mxu0 %v3241
    %4272 = vmatpush1.bf16.msra.mxu0 %v3240
    %4273 = vmatprep.subr.bf16.mxu0 %v3249
    %4274 = vmatpush1.bf16.msra.mxu0 %v3248
    %4275 = vmatprep.subr.bf16.mxu0 %v3257
    %4276 = vmatpush1.bf16.msra.mxu0 %v3256
    %4277 = vmatprep.mubr.bf16.mxu0 %v657
    %4278 = vmatmul.mubr.bf16.gmra.mrb[0].mxu0 %v656
    %v4279 = vpop.f32.mrb[0].mxu0
    %v4280 = vadd.f32 %v4237, %v4279
    %v4281 = vpop.f32.mrb[0].mxu0
    %v4282 = vadd.f32 %v4239, %v4281
    %v4283 = vpop.f32.mrb[0].mxu0
    %v4284 = vadd.f32 %v4241, %v4283
    %v4285 = vpop.f32.mrb[0].mxu0
    %v4286 = vadd.f32 %v4243, %v4285
    %4287 = vdwg.mxu0
    %4288 = vmatprep.subr.bf16.mxu0 %v2755
    %4289 = vmatpush1.bf16.msra.mxu0 %v2754
    %4290 = vmatprep.subr.bf16.mxu0 %v2763
    %4291 = vmatpush1.bf16.msra.mxu0 %v2762
    %4292 = vmatprep.subr.bf16.mxu0 %v2771
    %4293 = vmatpush1.bf16.msra.mxu0 %v2770
    %4294 = vmatprep.subr.bf16.mxu0 %v2779
    %4295 = vmatpush1.bf16.msra.mxu0 %v2778
    %4296 = vmatprep.subr.bf16.mxu0 %v2787
    %4297 = vmatpush1.bf16.msra.mxu0 %v2786
    %4298 = vmatprep.subr.bf16.mxu0 %v2795
    %4299 = vmatpush1.bf16.msra.mxu0 %v2794
    %4300 = vmatprep.subr.bf16.mxu0 %v2803
    %4301 = vmatpush1.bf16.msra.mxu0 %v2802
    %4302 = vmatprep.subr.bf16.mxu0 %v2811
    %4303 = vmatpush1.bf16.msra.mxu0 %v2810
    %4304 = vmatprep.subr.bf16.mxu0 %v2819
    %4305 = vmatpush1.bf16.msra.mxu0 %v2818
    %4306 = vmatprep.subr.bf16.mxu0 %v2827
    %4307 = vmatpush1.bf16.msra.mxu0 %v2826
    %4308 = vmatprep.subr.bf16.mxu0 %v2835
    %4309 = vmatpush1.bf16.msra.mxu0 %v2834
    %4310 = vmatprep.subr.bf16.mxu0 %v2843
    %4311 = vmatpush1.bf16.msra.mxu0 %v2842
    %4312 = vmatprep.subr.bf16.mxu0 %v2851
    %4313 = vmatpush1.bf16.msra.mxu0 %v2850
    %4314 = vmatprep.subr.bf16.mxu0 %v2859
    %4315 = vmatpush1.bf16.msra.mxu0 %v2858
    %4316 = vmatprep.subr.bf16.mxu0 %v2867
    %4317 = vmatpush1.bf16.msra.mxu0 %v2866
    %4318 = vmatprep.subr.bf16.mxu0 %v2875
    %4319 = vmatpush1.bf16.msra.mxu0 %v2874
    %4320 = vmatprep.mubr.bf16.mxu0 %v651
    %4321 = vmatmul.mubr.bf16.gmra.mrb[0].mxu0 %v650
    %v4322 = vpop.f32.mrb[0].mxu0
    %v4323 = vadd.f32 %v1199, %v4322
    %v4324 = vpop.f32.mrb[0].mxu0
    %v4325 = vadd.f32 %v1203, %v4324
    %v4326 = vpop.f32.mrb[0].mxu0
    %v4327 = vadd.f32 %v1199, %v4326
    %v4328 = vpop.f32.mrb[0].mxu0
    %v4329 = vadd.f32 %v1203, %v4328
    %4330 = vdwg.mxu0
    %4331 = vmatprep.subr.bf16.mxu0 %v2883
    %4332 = vmatpush1.bf16.msra.mxu0 %v2882
    %4333 = vmatprep.subr.bf16.mxu0 %v2891
    %4334 = vmatpush1.bf16.msra.mxu0 %v2890
    %4335 = vmatprep.subr.bf16.mxu0 %v2899
    %4336 = vmatpush1.bf16.msra.mxu0 %v2898
    %4337 = vmatprep.subr.bf16.mxu0 %v2907
    %4338 = vmatpush1.bf16.msra.mxu0 %v2906
    %4339 = vmatprep.subr.bf16.mxu0 %v2915
    %4340 = vmatpush1.bf16.msra.mxu0 %v2914
    %4341 = vmatprep.subr.bf16.mxu0 %v2923
    %4342 = vmatpush1.bf16.msra.mxu0 %v2922
    %4343 = vmatprep.subr.bf16.mxu0 %v2931
    %4344 = vmatpush1.bf16.msra.mxu0 %v2930
    %4345 = vmatprep.subr.bf16.mxu0 %v2939
    %4346 = vmatpush1.bf16.msra.mxu0 %v2938
    %4347 = vmatprep.subr.bf16.mxu0 %v2947
    %4348 = vmatpush1.bf16.msra.mxu0 %v2946
    %4349 = vmatprep.subr.bf16.mxu0 %v2955
    %4350 = vmatpush1.bf16.msra.mxu0 %v2954
    %4351 = vmatprep.subr.bf16.mxu0 %v2963
    %4352 = vmatpush1.bf16.msra.mxu0 %v2962
    %4353 = vmatprep.subr.bf16.mxu0 %v2971
    %4354 = vmatpush1.bf16.msra.mxu0 %v2970
    %4355 = vmatprep.subr.bf16.mxu0 %v2979
    %4356 = vmatpush1.bf16.msra.mxu0 %v2978
    %4357 = vmatprep.subr.bf16.mxu0 %v2987
    %4358 = vmatpush1.bf16.msra.mxu0 %v2986
    %4359 = vmatprep.subr.bf16.mxu0 %v2995
    %4360 = vmatpush1.bf16.msra.mxu0 %v2994
    %4361 = vmatprep.subr.bf16.mxu0 %v3003
    %4362 = vmatpush1.bf16.msra.mxu0 %v3002
    %4363 = vmatprep.mubr.bf16.mxu0 %v653
    %4364 = vmatmul.mubr.bf16.gmra.mrb[0].mxu0 %v652
    %v4365 = vpop.f32.mrb[0].mxu0
    %v4366 = vadd.f32 %v4323, %v4365
    %v4367 = vpop.f32.mrb[0].mxu0
    %v4368 = vadd.f32 %v4325, %v4367
    %v4369 = vpop.f32.mrb[0].mxu0
    %v4370 = vadd.f32 %v4327, %v4369
    %v4371 = vpop.f32.mrb[0].mxu0
    %v4372 = vadd.f32 %v4329, %v4371
    %4373 = vdwg.mxu0
    %4374 = vmatprep.subr.bf16.mxu0 %v3011
    %4375 = vmatpush1.bf16.msra.mxu0 %v3010
    %4376 = vmatprep.subr.bf16.mxu0 %v3019
    %4377 = vmatpush1.bf16.msra.mxu0 %v3018
    %4378 = vmatprep.subr.bf16.mxu0 %v3027
    %4379 = vmatpush1.bf16.msra.mxu0 %v3026
    %4380 = vmatprep.subr.bf16.mxu0 %v3035
    %4381 = vmatpush1.bf16.msra.mxu0 %v3034
    %4382 = vmatprep.subr.bf16.mxu0 %v3043
    %4383 = vmatpush1.bf16.msra.mxu0 %v3042
    %4384 = vmatprep.subr.bf16.mxu0 %v3051
    %4385 = vmatpush1.bf16.msra.mxu0 %v3050
    %4386 = vmatprep.subr.bf16.mxu0 %v3059
    %4387 = vmatpush1.bf16.msra.mxu0 %v3058
    %4388 = vmatprep.subr.bf16.mxu0 %v3067
    %4389 = vmatpush1.bf16.msra.mxu0 %v3066
    %4390 = vmatprep.subr.bf16.mxu0 %v3075
    %4391 = vmatpush1.bf16.msra.mxu0 %v3074
    %4392 = vmatprep.subr.bf16.mxu0 %v3083
    %4393 = vmatpush1.bf16.msra.mxu0 %v3082
    %4394 = vmatprep.subr.bf16.mxu0 %v3091
    %4395 = vmatpush1.bf16.msra.mxu0 %v3090
    %4396 = vmatprep.subr.bf16.mxu0 %v3099
    %4397 = vmatpush1.bf16.msra.mxu0 %v3098
    %4398 = vmatprep.subr.bf16.mxu0 %v3107
    %4399 = vmatpush1.bf16.msra.mxu0 %v3106
    %4400 = vmatprep.subr.bf16.mxu0 %v3115
    %4401 = vmatpush1.bf16.msra.mxu0 %v3114
    %4402 = vmatprep.subr.bf16.mxu0 %v3123
    %4403 = vmatpush1.bf16.msra.mxu0 %v3122
    %4404 = vmatprep.subr.bf16.mxu0 %v3131
    %4405 = vmatpush1.bf16.msra.mxu0 %v3130
    %4406 = vmatprep.mubr.bf16.mxu0 %v655
    %4407 = vmatmul.mubr.bf16.gmra.mrb[0].mxu0 %v654
    %v4408 = vpop.f32.mrb[0].mxu0
    %v4409 = vadd.f32 %v4366, %v4408
    %v4410 = vpop.f32.mrb[0].mxu0
    %v4411 = vadd.f32 %v4368, %v4410
    %v4412 = vpop.f32.mrb[0].mxu0
    %v4413 = vadd.f32 %v4370, %v4412
    %v4414 = vpop.f32.mrb[0].mxu0
    %v4415 = vadd.f32 %v4372, %v4414
    %4416 = vdwg.mxu0
    %4417 = vmatprep.subr.bf16.mxu0 %v3139
    %4418 = vmatpush1.bf16.msra.mxu0 %v3138
    %4419 = vmatprep.subr.bf16.mxu0 %v3147
    %4420 = vmatpush1.bf16.msra.mxu0 %v3146
    %4421 = vmatprep.subr.bf16.mxu0 %v3155
    %4422 = vmatpush1.bf16.msra.mxu0 %v3154
    %4423 = vmatprep.subr.bf16.mxu0 %v3163
    %4424 = vmatpush1.bf16.msra.mxu0 %v3162
    %4425 = vmatprep.subr.bf16.mxu0 %v3171
    %4426 = vmatpush1.bf16.msra.mxu0 %v3170
    %4427 = vmatprep.subr.bf16.mxu0 %v3179
    %4428 = vmatpush1.bf16.msra.mxu0 %v3178
    %4429 = vmatprep.subr.bf16.mxu0 %v3187
    %4430 = vmatpush1.bf16.msra.mxu0 %v3186
    %4431 = vmatprep.subr.bf16.mxu0 %v3195
    %4432 = vmatpush1.bf16.msra.mxu0 %v3194
    %4433 = vmatprep.subr.bf16.mxu0 %v3203
    %4434 = vmatpush1.bf16.msra.mxu0 %v3202
    %4435 = vmatprep.subr.bf16.mxu0 %v3211
    %4436 = vmatpush1.bf16.msra.mxu0 %v3210
    %4437 = vmatprep.subr.bf16.mxu0 %v3219
    %4438 = vmatpush1.bf16.msra.mxu0 %v3218
    %4439 = vmatprep.subr.bf16.mxu0 %v3227
    %4440 = vmatpush1.bf16.msra.mxu0 %v3226
    %4441 = vmatprep.subr.bf16.mxu0 %v3235
    %4442 = vmatpush1.bf16.msra.mxu0 %v3234
    %4443 = vmatprep.subr.bf16.mxu0 %v3243
    %4444 = vmatpush1.bf16.msra.mxu0 %v3242
    %4445 = vmatprep.subr.bf16.mxu0 %v3251
    %4446 = vmatpush1.bf16.msra.mxu0 %v3250
    %4447 = vmatprep.subr.bf16.mxu0 %v3259
    %4448 = vmatpush1.bf16.msra.mxu0 %v3258
    %4449 = vmatprep.mubr.bf16.mxu0 %v657
    %4450 = vmatmul.mubr.bf16.gmra.mrb[0].mxu0 %v656
    %v4451 = vpop.f32.mrb[0].mxu0
    %v4452 = vadd.f32 %v4409, %v4451
    %v4453 = vpop.f32.mrb[0].mxu0
    %v4454 = vadd.f32 %v4411, %v4453
    %v4455 = vpop.f32.mrb[0].mxu0
    %v4456 = vadd.f32 %v4413, %v4455
    %v4457 = vpop.f32.mrb[0].mxu0
    %v4458 = vadd.f32 %v4415, %v4457
    %4459 = vdwg.mxu0
    %v4460 = vmax.f32 %v3936, 0.0
    %v4461 = vmax.f32 %v3938, 0.0
    %v4462 = vmax.f32 %v4108, 0.0
    %v4463 = vmax.f32 %v4110, 0.0
    %v4464 = vmax.f32 %v4280, 0.0
    %v4465 = vmax.f32 %v4282, 0.0
    %v4466 = vmax.f32 %v4452, 0.0
    %v4467 = vmax.f32 %v4454, 0.0
    %v4468 = vmax.f32 %v3940, 0.0
    %v4469 = vmax.f32 %v3942, 0.0
    %v4470 = vmax.f32 %v4112, 0.0
    %v4471 = vmax.f32 %v4114, 0.0
    %v4472 = vmax.f32 %v4284, 0.0
    %v4473 = vmax.f32 %v4286, 0.0
    %v4474 = vmax.f32 %v4456, 0.0
    %v4475 = vmax.f32 %v4458, 0.0
    %v4476 = vpack.c.bf16 %v4468, %v4460
    %v4477 = vpack.c.bf16 %v4469, %v4461
    %v4478 = vpack.c.bf16 %v4470, %v4462
    %v4479 = vpack.c.bf16 %v4471, %v4463
    %v4480 = vpack.c.bf16 %v4472, %v4464
    %v4481 = vpack.c.bf16 %v4473, %v4465
    %v4482 = vpack.c.bf16 %v4474, %v4466
    %v4483 = vpack.c.bf16 %v4475, %v4467
    %v4484 = vld [vmem:[%s5] sm:$0xff]
    %v4485 = vld [vmem:[%s5 + $0x8] sm:$0xff]
    %v4486 = vld [vmem:[%s5 + $0x10] sm:$0xff]
    %v4487 = vld [vmem:[%s5 + $0x18] sm:$0xf]
    %v4488 = vld [vmem:[%s5 + $0x1c] sm:$0xff]
    %v4489 = vld [vmem:[%s5 + $0x24] sm:$0xff]
    %v4490 = vld [vmem:[%s5 + $0x2c] sm:$0xff]
    %v4491 = vld [vmem:[%s5 + $0x34] sm:$0xf]
    %v4492 = vld [vmem:[%s5 + $0x38] sm:$0xff]
    %v4493 = vld [vmem:[%s5 + $0x40] sm:$0xff]
    %v4494 = vld [vmem:[%s5 + $0x48] sm:$0xff]
    %v4495 = vld [vmem:[%s5 + $0x50] sm:$0xf]
    %v4496 = vld [vmem:[%s5 + $0x54] sm:$0xff]
    %v4497 = vld [vmem:[%s5 + $0x5c] sm:$0xff]
    %v4498 = vld [vmem:[%s5 + $0x64] sm:$0xff]
    %v4499 = vld [vmem:[%s5 + $0x6c] sm:$0xf]
    %v4500 = vld [vmem:[%s5 + $0x70] sm:$0xff]
    %v4501 = vld [vmem:[%s5 + $0x78] sm:$0xff]
    %v4502 = vld [vmem:[%s5 + $0x80] sm:$0xff]
    %v4503 = vld [vmem:[%s5 + $0x88] sm:$0xf]
    %v4504 = vld [vmem:[%s5 + $0x8c] sm:$0xff]
    %v4505 = vld [vmem:[%s5 + $0x94] sm:$0xff]
    %v4506 = vld [vmem:[%s5 + $0x9c] sm:$0xff]
    %v4507 = vld [vmem:[%s5 + $0xa4] sm:$0xf]
    %v4508 = vld [vmem:[%s5 + $0xa8] sm:$0xff]
    %v4509 = vld [vmem:[%s5 + $0xb0] sm:$0xff]
    %v4510 = vld [vmem:[%s5 + $0xb8] sm:$0xff]
    %v4511 = vld [vmem:[%s5 + $0xc0] sm:$0xf]
    %v4512 = vld [vmem:[%s5 + $0xc4] sm:$0xff]
    %v4513 = vld [vmem:[%s5 + $0xcc] sm:$0xff]
    %v4514 = vld [vmem:[%s5 + $0xd4] sm:$0xff]
    %v4515 = vld [vmem:[%s5 + $0xdc] sm:$0xf]
    %v4516 = vld [vmem:[%s5 + $0xe0] sm:$0xff]
    %v4517 = vld [vmem:[%s5 + $0xe8] sm:$0xff]
    %v4518 = vld [vmem:[%s5 + $0xf0] sm:$0xff]
    %v4519 = vld [vmem:[%s5 + $0xf8] sm:$0xf]
    %v4520 = vld [vmem:[%s5 + $0xfc] sm:$0xff]
    %v4521 = vld [vmem:[%s5 + $0x104] sm:$0xff]
    %v4522 = vld [vmem:[%s5 + $0x10c] sm:$0xff]
    %v4523 = vld [vmem:[%s5 + $0x114] sm:$0xf]
    %v4524 = vld [vmem:[%s5 + $0x118] sm:$0xff]
    %v4525 = vld [vmem:[%s5 + $0x120] sm:$0xff]
    %v4526 = vld [vmem:[%s5 + $0x128] sm:$0xff]
    %v4527 = vld [vmem:[%s5 + $0x130] sm:$0xf]
    %v4528 = vld [vmem:[%s5 + $0x134] sm:$0xff]
    %v4529 = vld [vmem:[%s5 + $0x13c] sm:$0xff]
    %v4530 = vld [vmem:[%s5 + $0x144] sm:$0xff]
    %v4531 = vld [vmem:[%s5 + $0x14c] sm:$0xf]
    %v4532 = vld [vmem:[%s5 + $0x150] sm:$0xff]
    %v4533 = vld [vmem:[%s5 + $0x158] sm:$0xff]
    %v4534 = vld [vmem:[%s5 + $0x160] sm:$0xff]
    %v4535 = vld [vmem:[%s5 + $0x168] sm:$0xf]
    %v4536 = vld [vmem:[%s5 + $0x16c] sm:$0xff]
    %v4537 = vld [vmem:[%s5 + $0x174] sm:$0xff]
    %v4538 = vld [vmem:[%s5 + $0x17c] sm:$0xff]
    %v4539 = vld [vmem:[%s5 + $0x184] sm:$0xf]
    %v4540 = vld [vmem:[%s5 + $0x188] sm:$0xff]
    %v4541 = vld [vmem:[%s5 + $0x190] sm:$0xff]
    %v4542 = vld [vmem:[%s5 + $0x198] sm:$0xff]
    %v4543 = vld [vmem:[%s5 + $0x1a0] sm:$0xf]
    %v4544 = vld [vmem:[%s5 + $0x1a4] sm:$0xff]
    %v4545 = vld [vmem:[%s5 + $0x1ac] sm:$0xff]
    %v4546 = vld [vmem:[%s5 + $0x1b4] sm:$0xff]
    %v4547 = vld [vmem:[%s5 + $0x1bc] sm:$0xf]
    %v4548 = vld [vmem:[%s5 + $0x1c0] sm:$0xff]
    %v4549 = vld [vmem:[%s5 + $0x1c8] sm:$0xff]
    %v4550 = vld [vmem:[%s5 + $0x1d0] sm:$0xff]
    %v4551 = vld [vmem:[%s5 + $0x1d8] sm:$0xf]
    %v4552 = vld [vmem:[%s5 + $0x1dc] sm:$0xff]
    %v4553 = vld [vmem:[%s5 + $0x1e4] sm:$0xff]
    %v4554 = vld [vmem:[%s5 + $0x1ec] sm:$0xff]
    %v4555 = vld [vmem:[%s5 + $0x1f4] sm:$0xf]
    %v4556 = vld [vmem:[%s5 + $0x1f8] sm:$0xff]
    %v4557 = vld [vmem:[%s5 + $0x200] sm:$0xff]
    %v4558 = vld [vmem:[%s5 + $0x208] sm:$0xff]
    %v4559 = vld [vmem:[%s5 + $0x210] sm:$0xf]
    %v4560 = vld [vmem:[%s5 + $0x214] sm:$0xff]
    %v4561 = vld [vmem:[%s5 + $0x21c] sm:$0xff]
    %v4562 = vld [vmem:[%s5 + $0x224] sm:$0xff]
    %v4563 = vld [vmem:[%s5 + $0x22c] sm:$0xf]
    %v4564 = vld [vmem:[%s5 + $0x230] sm:$0xff]
    %v4565 = vld [vmem:[%s5 + $0x238] sm:$0xff]
    %v4566 = vld [vmem:[%s5 + $0x240] sm:$0xff]
    %v4567 = vld [vmem:[%s5 + $0x248] sm:$0xf]
    %v4568 = vld [vmem:[%s5 + $0x24c] sm:$0xff]
    %v4569 = vld [vmem:[%s5 + $0x254] sm:$0xff]
    %v4570 = vld [vmem:[%s5 + $0x25c] sm:$0xff]
    %v4571 = vld [vmem:[%s5 + $0x264] sm:$0xf]
    %v4572 = vld [vmem:[%s5 + $0x268] sm:$0xff]
    %v4573 = vld [vmem:[%s5 + $0x270] sm:$0xff]
    %v4574 = vld [vmem:[%s5 + $0x278] sm:$0xff]
    %v4575 = vld [vmem:[%s5 + $0x280] sm:$0xf]
    %v4576 = vld [vmem:[%s5 + $0x284] sm:$0xff]
    %v4577 = vld [vmem:[%s5 + $0x28c] sm:$0xff]
    %v4578 = vld [vmem:[%s5 + $0x294] sm:$0xff]
    %v4579 = vld [vmem:[%s5 + $0x29c] sm:$0xf]
    %v4580 = vld [vmem:[%s5 + $0x2a0] sm:$0xff]
    %v4581 = vld [vmem:[%s5 + $0x2a8] sm:$0xff]
    %v4582 = vld [vmem:[%s5 + $0x2b0] sm:$0xff]
    %v4583 = vld [vmem:[%s5 + $0x2b8] sm:$0xf]
    %v4584 = vld [vmem:[%s5 + $0x2bc] sm:$0xff]
    %v4585 = vld [vmem:[%s5 + $0x2c4] sm:$0xff]
    %v4586 = vld [vmem:[%s5 + $0x2cc] sm:$0xff]
    %v4587 = vld [vmem:[%s5 + $0x2d4] sm:$0xf]
    %v4588 = vld [vmem:[%s5 + $0x2d8] sm:$0xff]
    %v4589 = vld [vmem:[%s5 + $0x2e0] sm:$0xff]
    %v4590 = vld [vmem:[%s5 + $0x2e8] sm:$0xff]
    %v4591 = vld [vmem:[%s5 + $0x2f0] sm:$0xf]
    %v4592 = vld [vmem:[%s5 + $0x2f4] sm:$0xff]
    %v4593 = vld [vmem:[%s5 + $0x2fc] sm:$0xff]
    %v4594 = vld [vmem:[%s5 + $0x304] sm:$0xff]
    %v4595 = vld [vmem:[%s5 + $0x30c] sm:$0xf]
    %v4596 = vld [vmem:[%s5 + $0x310] sm:$0xff]
    %v4597 = vld [vmem:[%s5 + $0x318] sm:$0xff]
    %v4598 = vld [vmem:[%s5 + $0x320] sm:$0xff]
    %v4599 = vld [vmem:[%s5 + $0x328] sm:$0xf]
    %v4600 = vld [vmem:[%s5 + $0x32c] sm:$0xff]
    %v4601 = vld [vmem:[%s5 + $0x334] sm:$0xff]
    %v4602 = vld [vmem:[%s5 + $0x33c] sm:$0xff]
    %v4603 = vld [vmem:[%s5 + $0x344] sm:$0xf]
    %v4604 = vld [vmem:[%s5 + $0x348] sm:$0xff]
    %v4605 = vld [vmem:[%s5 + $0x350] sm:$0xff]
    %v4606 = vld [vmem:[%s5 + $0x358] sm:$0xff]
    %v4607 = vld [vmem:[%s5 + $0x360] sm:$0xf]
    %v4608 = vld [vmem:[%s5 + $0x364] sm:$0xff]
    %v4609 = vld [vmem:[%s5 + $0x36c] sm:$0xff]
    %v4610 = vld [vmem:[%s5 + $0x374] sm:$0xff]
    %v4611 = vld [vmem:[%s5 + $0x37c] sm:$0xf]
    %v4612 = vld [vmem:[%s5 + $0x380] sm:$0xff]
    %v4613 = vld [vmem:[%s5 + $0x388] sm:$0xff]
    %v4614 = vld [vmem:[%s5 + $0x390] sm:$0xff]
    %v4615 = vld [vmem:[%s5 + $0x398] sm:$0xf]
    %v4616 = vld [vmem:[%s5 + $0x39c] sm:$0xff]
    %v4617 = vld [vmem:[%s5 + $0x3a4] sm:$0xff]
    %v4618 = vld [vmem:[%s5 + $0x3ac] sm:$0xff]
    %v4619 = vld [vmem:[%s5 + $0x3b4] sm:$0xf]
    %v4620 = vld [vmem:[%s5 + $0x3b8] sm:$0xff]
    %v4621 = vld [vmem:[%s5 + $0x3c0] sm:$0xff]
    %v4622 = vld [vmem:[%s5 + $0x3c8] sm:$0xff]
    %v4623 = vld [vmem:[%s5 + $0x3d0] sm:$0xf]
    %v4624 = vld [vmem:[%s5 + $0x3d4] sm:$0xff]
    %v4625 = vld [vmem:[%s5 + $0x3dc] sm:$0xff]
    %v4626 = vld [vmem:[%s5 + $0x3e4] sm:$0xff]
    %v4627 = vld [vmem:[%s5 + $0x3ec] sm:$0xf]
    %v4628 = vld [vmem:[%s5 + $0x3f0] sm:$0xff]
    %v4629 = vld [vmem:[%s5 + $0x3f8] sm:$0xff]
    %v4630 = vld [vmem:[%s5 + $0x400] sm:$0xff]
    %v4631 = vld [vmem:[%s5 + $0x408] sm:$0xf]
    %v4632 = vld [vmem:[%s5 + $0x40c] sm:$0xff]
    %v4633 = vld [vmem:[%s5 + $0x414] sm:$0xff]
    %v4634 = vld [vmem:[%s5 + $0x41c] sm:$0xff]
    %v4635 = vld [vmem:[%s5 + $0x424] sm:$0xf]
    %v4636 = vld [vmem:[%s5 + $0x428] sm:$0xff]
    %v4637 = vld [vmem:[%s5 + $0x430] sm:$0xff]
    %v4638 = vld [vmem:[%s5 + $0x438] sm:$0xff]
    %v4639 = vld [vmem:[%s5 + $0x440] sm:$0xf]
    %v4640 = vld [vmem:[%s5 + $0x444] sm:$0xff]
    %v4641 = vld [vmem:[%s5 + $0x44c] sm:$0xff]
    %v4642 = vld [vmem:[%s5 + $0x454] sm:$0xff]
    %v4643 = vld [vmem:[%s5 + $0x45c] sm:$0xf]
    %v4644 = vld [vmem:[%s5 + $0x460] sm:$0xff]
    %v4645 = vld [vmem:[%s5 + $0x468] sm:$0xff]
    %v4646 = vld [vmem:[%s5 + $0x470] sm:$0xff]
    %v4647 = vld [vmem:[%s5 + $0x478] sm:$0xf]
    %v4648 = vld [vmem:[%s5 + $0x47c] sm:$0xff]
    %v4649 = vld [vmem:[%s5 + $0x484] sm:$0xff]
    %v4650 = vld [vmem:[%s5 + $0x48c] sm:$0xff]
    %v4651 = vld [vmem:[%s5 + $0x494] sm:$0xf]
    %v4652 = vld [vmem:[%s5 + $0x498] sm:$0xff]
    %v4653 = vld [vmem:[%s5 + $0x4a0] sm:$0xff]
    %v4654 = vld [vmem:[%s5 + $0x4a8] sm:$0xff]
    %v4655 = vld [vmem:[%s5 + $0x4b0] sm:$0xf]
    %v4656 = vld [vmem:[%s5 + $0x4b4] sm:$0xff]
    %v4657 = vld [vmem:[%s5 + $0x4bc] sm:$0xff]
    %v4658 = vld [vmem:[%s5 + $0x4c4] sm:$0xff]
    %v4659 = vld [vmem:[%s5 + $0x4cc] sm:$0xf]
    %v4660 = vld [vmem:[%s5 + $0x4d0] sm:$0xff]
    %v4661 = vld [vmem:[%s5 + $0x4d8] sm:$0xff]
    %v4662 = vld [vmem:[%s5 + $0x4e0] sm:$0xff]
    %v4663 = vld [vmem:[%s5 + $0x4e8] sm:$0xf]
    %v4664 = vld [vmem:[%s5 + $0x4ec] sm:$0xff]
    %v4665 = vld [vmem:[%s5 + $0x4f4] sm:$0xff]
    %v4666 = vld [vmem:[%s5 + $0x4fc] sm:$0xff]
    %v4667 = vld [vmem:[%s5 + $0x504] sm:$0xf]
    %v4668 = vld [vmem:[%s5 + $0x508] sm:$0xff]
    %v4669 = vld [vmem:[%s5 + $0x510] sm:$0xff]
    %v4670 = vld [vmem:[%s5 + $0x518] sm:$0xff]
    %v4671 = vld [vmem:[%s5 + $0x520] sm:$0xf]
    %v4672 = vld [vmem:[%s5 + $0x524] sm:$0xff]
    %v4673 = vld [vmem:[%s5 + $0x52c] sm:$0xff]
    %v4674 = vld [vmem:[%s5 + $0x534] sm:$0xff]
    %v4675 = vld [vmem:[%s5 + $0x53c] sm:$0xf]
    %v4676 = vld [vmem:[%s5 + $0x540] sm:$0xff]
    %v4677 = vld [vmem:[%s5 + $0x548] sm:$0xff]
    %v4678 = vld [vmem:[%s5 + $0x550] sm:$0xff]
    %v4679 = vld [vmem:[%s5 + $0x558] sm:$0xf]
    %v4680 = vld [vmem:[%s5 + $0x55c] sm:$0xff]
    %v4681 = vld [vmem:[%s5 + $0x564] sm:$0xff]
    %v4682 = vld [vmem:[%s5 + $0x56c] sm:$0xff]
    %v4683 = vld [vmem:[%s5 + $0x574] sm:$0xf]
    %v4684 = vld [vmem:[%s5 + $0x578] sm:$0xff]
    %v4685 = vld [vmem:[%s5 + $0x580] sm:$0xff]
    %v4686 = vld [vmem:[%s5 + $0x588] sm:$0xff]
    %v4687 = vld [vmem:[%s5 + $0x590] sm:$0xf]
    %v4688 = vld [vmem:[%s5 + $0x594] sm:$0xff]
    %v4689 = vld [vmem:[%s5 + $0x59c] sm:$0xff]
    %v4690 = vld [vmem:[%s5 + $0x5a4] sm:$0xff]
    %v4691 = vld [vmem:[%s5 + $0x5ac] sm:$0xf]
    %v4692 = vld [vmem:[%s5 + $0x5b0] sm:$0xff]
    %v4693 = vld [vmem:[%s5 + $0x5b8] sm:$0xff]
    %v4694 = vld [vmem:[%s5 + $0x5c0] sm:$0xff]
    %v4695 = vld [vmem:[%s5 + $0x5c8] sm:$0xf]
    %v4696 = vld [vmem:[%s5 + $0x5cc] sm:$0xff]
    %v4697 = vld [vmem:[%s5 + $0x5d4] sm:$0xff]
    %v4698 = vld [vmem:[%s5 + $0x5dc] sm:$0xff]
    %v4699 = vld [vmem:[%s5 + $0x5e4] sm:$0xf]
    %v4700 = vld [vmem:[%s5 + $0x5e8] sm:$0xff]
    %v4701 = vld [vmem:[%s5 + $0x5f0] sm:$0xff]
    %v4702 = vld [vmem:[%s5 + $0x5f8] sm:$0xff]
    %v4703 = vld [vmem:[%s5 + $0x600] sm:$0xf]
    %v4704 = vld [vmem:[%s5 + $0x604] sm:$0xff]
    %v4705 = vld [vmem:[%s5 + $0x60c] sm:$0xff]
    %v4706 = vld [vmem:[%s5 + $0x614] sm:$0xff]
    %v4707 = vld [vmem:[%s5 + $0x61c] sm:$0xf]
    %v4708 = vld [vmem:[%s5 + $0x620] sm:$0xff]
    %v4709 = vld [vmem:[%s5 + $0x628] sm:$0xff]
    %v4710 = vld [vmem:[%s5 + $0x630] sm:$0xff]
    %v4711 = vld [vmem:[%s5 + $0x638] sm:$0xf]
    %v4712 = vld [vmem:[%s5 + $0x63c] sm:$0xff]
    %v4713 = vld [vmem:[%s5 + $0x644] sm:$0xff]
    %v4714 = vld [vmem:[%s5 + $0x64c] sm:$0xff]
    %v4715 = vld [vmem:[%s5 + $0x654] sm:$0xf]
    %v4716 = vld [vmem:[%s5 + $0x658] sm:$0xff]
    %v4717 = vld [vmem:[%s5 + $0x660] sm:$0xff]
    %v4718 = vld [vmem:[%s5 + $0x668] sm:$0xff]
    %v4719 = vld [vmem:[%s5 + $0x670] sm:$0xf]
    %v4720 = vld [vmem:[%s5 + $0x674] sm:$0xff]
    %v4721 = vld [vmem:[%s5 + $0x67c] sm:$0xff]
    %v4722 = vld [vmem:[%s5 + $0x684] sm:$0xff]
    %v4723 = vld [vmem:[%s5 + $0x68c] sm:$0xf]
    %v4724 = vld [vmem:[%s5 + $0x690] sm:$0xff]
    %v4725 = vld [vmem:[%s5 + $0x698] sm:$0xff]
    %v4726 = vld [vmem:[%s5 + $0x6a0] sm:$0xff]
    %v4727 = vld [vmem:[%s5 + $0x6a8] sm:$0xf]
    %v4728 = vld [vmem:[%s5 + $0x6ac] sm:$0xff]
    %v4729 = vld [vmem:[%s5 + $0x6b4] sm:$0xff]
    %v4730 = vld [vmem:[%s5 + $0x6bc] sm:$0xff]
    %v4731 = vld [vmem:[%s5 + $0x6c4] sm:$0xf]
    %v4732 = vld [vmem:[%s5 + $0x6c8] sm:$0xff]
    %v4733 = vld [vmem:[%s5 + $0x6d0] sm:$0xff]
    %v4734 = vld [vmem:[%s5 + $0x6d8] sm:$0xff]
    %v4735 = vld [vmem:[%s5 + $0x6e0] sm:$0xf]
    %v4736 = vld [vmem:[%s5 + $0x6e4] sm:$0xff]
    %v4737 = vld [vmem:[%s5 + $0x6ec] sm:$0xff]
    %v4738 = vld [vmem:[%s5 + $0x6f4] sm:$0xff]
    %v4739 = vld [vmem:[%s5 + $0x6fc] sm:$0xf]
    %v4740 = vld [vmem:[%s5 + $0x700] sm:$0xff]
    %v4741 = vld [vmem:[%s5 + $0x708] sm:$0xff]
    %v4742 = vld [vmem:[%s5 + $0x710] sm:$0xff]
    %v4743 = vld [vmem:[%s5 + $0x718] sm:$0xf]
    %v4744 = vld [vmem:[%s5 + $0x71c] sm:$0xff]
    %v4745 = vld [vmem:[%s5 + $0x724] sm:$0xff]
    %v4746 = vld [vmem:[%s5 + $0x72c] sm:$0xff]
    %v4747 = vld [vmem:[%s5 + $0x734] sm:$0xf]
    %v4748 = vld [vmem:[%s5 + $0x738] sm:$0xff]
    %v4749 = vld [vmem:[%s5 + $0x740] sm:$0xff]
    %v4750 = vld [vmem:[%s5 + $0x748] sm:$0xff]
    %v4751 = vld [vmem:[%s5 + $0x750] sm:$0xf]
    %v4752 = vld [vmem:[%s5 + $0x754] sm:$0xff]
    %v4753 = vld [vmem:[%s5 + $0x75c] sm:$0xff]
    %v4754 = vld [vmem:[%s5 + $0x764] sm:$0xff]
    %v4755 = vld [vmem:[%s5 + $0x76c] sm:$0xf]
    %v4756 = vld [vmem:[%s5 + $0x770] sm:$0xff]
    %v4757 = vld [vmem:[%s5 + $0x778] sm:$0xff]
    %v4758 = vld [vmem:[%s5 + $0x780] sm:$0xff]
    %v4759 = vld [vmem:[%s5 + $0x788] sm:$0xf]
    %v4760 = vld [vmem:[%s5 + $0x78c] sm:$0xff]
    %v4761 = vld [vmem:[%s5 + $0x794] sm:$0xff]
    %v4762 = vld [vmem:[%s5 + $0x79c] sm:$0xff]
    %v4763 = vld [vmem:[%s5 + $0x7a4] sm:$0xf]
    %v4764 = vld [vmem:[%s5 + $0x7a8] sm:$0xff]
    %v4765 = vld [vmem:[%s5 + $0x7b0] sm:$0xff]
    %v4766 = vld [vmem:[%s5 + $0x7b8] sm:$0xff]
    %v4767 = vld [vmem:[%s5 + $0x7c0] sm:$0xf]
    %v4768 = vld [vmem:[%s5 + $0x7c4] sm:$0xff]
    %v4769 = vld [vmem:[%s5 + $0x7cc] sm:$0xff]
    %v4770 = vld [vmem:[%s5 + $0x7d4] sm:$0xff]
    %v4771 = vld [vmem:[%s5 + $0x7dc] sm:$0xf]
    %v4772 = vld [vmem:[%s5 + $0x7e0] sm:$0xff]
    %v4773 = vld [vmem:[%s5 + $0x7e8] sm:$0xff]
    %v4774 = vld [vmem:[%s5 + $0x7f0] sm:$0xff]
    %v4775 = vld [vmem:[%s5 + $0x7f8] sm:$0xf]
    %v4776 = vld [vmem:[%s5 + $0x7fc] sm:$0xff]
    %v4777 = vld [vmem:[%s5 + $0x804] sm:$0xff]
    %v4778 = vld [vmem:[%s5 + $0x80c] sm:$0xff]
    %v4779 = vld [vmem:[%s5 + $0x814] sm:$0xf]
    %v4780 = vld [vmem:[%s5 + $0x818] sm:$0xff]
    %v4781 = vld [vmem:[%s5 + $0x820] sm:$0xff]
    %v4782 = vld [vmem:[%s5 + $0x828] sm:$0xff]
    %v4783 = vld [vmem:[%s5 + $0x830] sm:$0xf]
    %v4784 = vld [vmem:[%s5 + $0x834] sm:$0xff]
    %v4785 = vld [vmem:[%s5 + $0x83c] sm:$0xff]
    %v4786 = vld [vmem:[%s5 + $0x844] sm:$0xff]
    %v4787 = vld [vmem:[%s5 + $0x84c] sm:$0xf]
    %v4788 = vld [vmem:[%s5 + $0x850] sm:$0xff]
    %v4789 = vld [vmem:[%s5 + $0x858] sm:$0xff]
    %v4790 = vld [vmem:[%s5 + $0x860] sm:$0xff]
    %v4791 = vld [vmem:[%s5 + $0x868] sm:$0xf]
    %v4792 = vld [vmem:[%s5 + $0x86c] sm:$0xff]
    %v4793 = vld [vmem:[%s5 + $0x874] sm:$0xff]
    %v4794 = vld [vmem:[%s5 + $0x87c] sm:$0xff]
    %v4795 = vld [vmem:[%s5 + $0x884] sm:$0xf]
    %v4796 = vld [vmem:[%s5 + $0x888] sm:$0xff]
    %v4797 = vld [vmem:[%s5 + $0x890] sm:$0xff]
    %v4798 = vld [vmem:[%s5 + $0x898] sm:$0xff]
    %v4799 = vld [vmem:[%s5 + $0x8a0] sm:$0xf]
    %v4800 = vld [vmem:[%s5 + $0x8a4] sm:$0xff]
    %v4801 = vld [vmem:[%s5 + $0x8ac] sm:$0xff]
    %v4802 = vld [vmem:[%s5 + $0x8b4] sm:$0xff]
    %v4803 = vld [vmem:[%s5 + $0x8bc] sm:$0xf]
    %v4804 = vld [vmem:[%s5 + $0x8c0] sm:$0xff]
    %v4805 = vld [vmem:[%s5 + $0x8c8] sm:$0xff]
    %v4806 = vld [vmem:[%s5 + $0x8d0] sm:$0xff]
    %v4807 = vld [vmem:[%s5 + $0x8d8] sm:$0xf]
    %v4808 = vld [vmem:[%s5 + $0x8dc] sm:$0xff]
    %v4809 = vld [vmem:[%s5 + $0x8e4] sm:$0xff]
    %v4810 = vld [vmem:[%s5 + $0x8ec] sm:$0xff]
    %v4811 = vld [vmem:[%s5 + $0x8f4] sm:$0xf]
    %v4812 = vld [vmem:[%s5 + $0x8f8] sm:$0xff]
    %v4813 = vld [vmem:[%s5 + $0x900] sm:$0xff]
    %v4814 = vld [vmem:[%s5 + $0x908] sm:$0xff]
    %v4815 = vld [vmem:[%s5 + $0x910] sm:$0xf]
    %v4816 = vld [vmem:[%s5 + $0x914] sm:$0xff]
    %v4817 = vld [vmem:[%s5 + $0x91c] sm:$0xff]
    %v4818 = vld [vmem:[%s5 + $0x924] sm:$0xff]
    %v4819 = vld [vmem:[%s5 + $0x92c] sm:$0xf]
    %v4820 = vld [vmem:[%s5 + $0x930] sm:$0xff]
    %v4821 = vld [vmem:[%s5 + $0x938] sm:$0xff]
    %v4822 = vld [vmem:[%s5 + $0x940] sm:$0xff]
    %v4823 = vld [vmem:[%s5 + $0x948] sm:$0xf]
    %v4824 = vld [vmem:[%s5 + $0x94c] sm:$0xff]
    %v4825 = vld [vmem:[%s5 + $0x954] sm:$0xff]
    %v4826 = vld [vmem:[%s5 + $0x95c] sm:$0xff]
    %v4827 = vld [vmem:[%s5 + $0x964] sm:$0xf]
    %v4828 = vld [vmem:[%s5 + $0x968] sm:$0xff]
    %v4829 = vld [vmem:[%s5 + $0x970] sm:$0xff]
    %v4830 = vld [vmem:[%s5 + $0x978] sm:$0xff]
    %v4831 = vld [vmem:[%s5 + $0x980] sm:$0xf]
    %v4832 = vld [vmem:[%s5 + $0x984] sm:$0xff]
    %v4833 = vld [vmem:[%s5 + $0x98c] sm:$0xff]
    %v4834 = vld [vmem:[%s5 + $0x994] sm:$0xff]
    %v4835 = vld [vmem:[%s5 + $0x99c] sm:$0xf]
    %v4836 = vld [vmem:[%s5 + $0x9a0] sm:$0xff]
    %v4837 = vld [vmem:[%s5 + $0x9a8] sm:$0xff]
    %v4838 = vld [vmem:[%s5 + $0x9b0] sm:$0xff]
    %v4839 = vld [vmem:[%s5 + $0x9b8] sm:$0xf]
    %v4840 = vld [vmem:[%s5 + $0x9bc] sm:$0xff]
    %v4841 = vld [vmem:[%s5 + $0x9c4] sm:$0xff]
    %v4842 = vld [vmem:[%s5 + $0x9cc] sm:$0xff]
    %v4843 = vld [vmem:[%s5 + $0x9d4] sm:$0xf]
    %v4844 = vld [vmem:[%s5 + $0x9d8] sm:$0xff]
    %v4845 = vld [vmem:[%s5 + $0x9e0] sm:$0xff]
    %v4846 = vld [vmem:[%s5 + $0x9e8] sm:$0xff]
    %v4847 = vld [vmem:[%s5 + $0x9f0] sm:$0xf]
    %v4848 = vld [vmem:[%s5 + $0x9f4] sm:$0xff]
    %v4849 = vld [vmem:[%s5 + $0x9fc] sm:$0xff]
    %v4850 = vld [vmem:[%s5 + $0xa04] sm:$0xff]
    %v4851 = vld [vmem:[%s5 + $0xa0c] sm:$0xf]
    %v4852 = vld [vmem:[%s5 + $0xa10] sm:$0xff]
    %v4853 = vld [vmem:[%s5 + $0xa18] sm:$0xff]
    %v4854 = vld [vmem:[%s5 + $0xa20] sm:$0xff]
    %v4855 = vld [vmem:[%s5 + $0xa28] sm:$0xf]
    %v4856 = vld [vmem:[%s5 + $0xa2c] sm:$0xff]
    %v4857 = vld [vmem:[%s5 + $0xa34] sm:$0xff]
    %v4858 = vld [vmem:[%s5 + $0xa3c] sm:$0xff]
    %v4859 = vld [vmem:[%s5 + $0xa44] sm:$0xf]
    %v4860 = vld [vmem:[%s5 + $0xa48] sm:$0xff]
    %v4861 = vld [vmem:[%s5 + $0xa50] sm:$0xff]
    %v4862 = vld [vmem:[%s5 + $0xa58] sm:$0xff]
    %v4863 = vld [vmem:[%s5 + $0xa60] sm:$0xf]
    %v4864 = vld [vmem:[%s5 + $0xa64] sm:$0xff]
    %v4865 = vld [vmem:[%s5 + $0xa6c] sm:$0xff]
    %v4866 = vld [vmem:[%s5 + $0xa74] sm:$0xff]
    %v4867 = vld [vmem:[%s5 + $0xa7c] sm:$0xf]
    %v4868 = vld [vmem:[%s5 + $0xa80] sm:$0xff]
    %v4869 = vld [vmem:[%s5 + $0xa88] sm:$0xff]
    %v4870 = vld [vmem:[%s5 + $0xa90] sm:$0xff]
    %v4871 = vld [vmem:[%s5 + $0xa98] sm:$0xf]
    %v4872 = vld [vmem:[%s5 + $0xa9c] sm:$0xff]
    %v4873 = vld [vmem:[%s5 + $0xaa4] sm:$0xff]
    %v4874 = vld [vmem:[%s5 + $0xaac] sm:$0xff]
    %v4875 = vld [vmem:[%s5 + $0xab4] sm:$0xf]
    %v4876 = vld [vmem:[%s5 + $0xab8] sm:$0xff]
    %v4877 = vld [vmem:[%s5 + $0xac0] sm:$0xff]
    %v4878 = vld [vmem:[%s5 + $0xac8] sm:$0xff]
    %v4879 = vld [vmem:[%s5 + $0xad0] sm:$0xf]
    %v4880 = vld [vmem:[%s5 + $0xad4] sm:$0xff]
    %v4881 = vld [vmem:[%s5 + $0xadc] sm:$0xff]
    %v4882 = vld [vmem:[%s5 + $0xae4] sm:$0xff]
    %v4883 = vld [vmem:[%s5 + $0xaec] sm:$0xf]
    %v4884 = vld [vmem:[%s5 + $0xaf0] sm:$0xff]
    %v4885 = vld [vmem:[%s5 + $0xaf8] sm:$0xff]
    %v4886 = vld [vmem:[%s5 + $0xb00] sm:$0xff]
    %v4887 = vld [vmem:[%s5 + $0xb08] sm:$0xf]
    %v4888 = vld [vmem:[%s5 + $0xb0c] sm:$0xff]
    %v4889 = vld [vmem:[%s5 + $0xb14] sm:$0xff]
    %v4890 = vld [vmem:[%s5 + $0xb1c] sm:$0xff]
    %v4891 = vld [vmem:[%s5 + $0xb24] sm:$0xf]
    %v4892 = vld [vmem:[%s5 + $0xb28] sm:$0xff]
    %v4893 = vld [vmem:[%s5 + $0xb30] sm:$0xff]
    %v4894 = vld [vmem:[%s5 + $0xb38] sm:$0xff]
    %v4895 = vld [vmem:[%s5 + $0xb40] sm:$0xf]
    %v4896 = vld [vmem:[%s5 + $0xb44] sm:$0xff]
    %v4897 = vld [vmem:[%s5 + $0xb4c] sm:$0xff]
    %v4898 = vld [vmem:[%s5 + $0xb54] sm:$0xff]
    %v4899 = vld [vmem:[%s5 + $0xb5c] sm:$0xf]
    %v4900 = vld [vmem:[%s5 + $0xb60] sm:$0xff]
    %v4901 = vld [vmem:[%s5 + $0xb68] sm:$0xff]
    %v4902 = vld [vmem:[%s5 + $0xb70] sm:$0xff]
    %v4903 = vld [vmem:[%s5 + $0xb78] sm:$0xf]
    %v4904 = vld [vmem:[%s5 + $0xb7c] sm:$0xff]
    %v4905 = vld [vmem:[%s5 + $0xb84] sm:$0xff]
    %v4906 = vld [vmem:[%s5 + $0xb8c] sm:$0xff]
    %v4907 = vld [vmem:[%s5 + $0xb94] sm:$0xf]
    %v4908 = vld [vmem:[%s5 + $0xb98] sm:$0xff]
    %v4909 = vld [vmem:[%s5 + $0xba0] sm:$0xff]
    %v4910 = vld [vmem:[%s5 + $0xba8] sm:$0xff]
    %v4911 = vld [vmem:[%s5 + $0xbb0] sm:$0xf]
    %v4912 = vld [vmem:[%s5 + $0xbb4] sm:$0xff]
    %v4913 = vld [vmem:[%s5 + $0xbbc] sm:$0xff]
    %v4914 = vld [vmem:[%s5 + $0xbc4] sm:$0xff]
    %v4915 = vld [vmem:[%s5 + $0xbcc] sm:$0xf]
    %v4916 = vld [vmem:[%s5 + $0xbd0] sm:$0xff]
    %v4917 = vld [vmem:[%s5 + $0xbd8] sm:$0xff]
    %v4918 = vld [vmem:[%s5 + $0xbe0] sm:$0xff]
    %v4919 = vld [vmem:[%s5 + $0xbe8] sm:$0xf]
    %v4920 = vld [vmem:[%s5 + $0xbec] sm:$0xff]
    %v4921 = vld [vmem:[%s5 + $0xbf4] sm:$0xff]
    %v4922 = vld [vmem:[%s5 + $0xbfc] sm:$0xff]
    %v4923 = vld [vmem:[%s5 + $0xc04] sm:$0xf]
    %v4924 = vld [vmem:[%s5 + $0xc08] sm:$0xff]
    %v4925 = vld [vmem:[%s5 + $0xc10] sm:$0xff]
    %v4926 = vld [vmem:[%s5 + $0xc18] sm:$0xff]
    %v4927 = vld [vmem:[%s5 + $0xc20] sm:$0xf]
    %v4928 = vld [vmem:[%s5 + $0xc24] sm:$0xff]
    %v4929 = vld [vmem:[%s5 + $0xc2c] sm:$0xff]
    %v4930 = vld [vmem:[%s5 + $0xc34] sm:$0xff]
    %v4931 = vld [vmem:[%s5 + $0xc3c] sm:$0xf]
    %v4932 = vld [vmem:[%s5 + $0xc40] sm:$0xff]
    %v4933 = vld [vmem:[%s5 + $0xc48] sm:$0xff]
    %v4934 = vld [vmem:[%s5 + $0xc50] sm:$0xff]
    %v4935 = vld [vmem:[%s5 + $0xc58] sm:$0xf]
    %v4936 = vld [vmem:[%s5 + $0xc5c] sm:$0xff]
    %v4937 = vld [vmem:[%s5 + $0xc64] sm:$0xff]
    %v4938 = vld [vmem:[%s5 + $0xc6c] sm:$0xff]
    %v4939 = vld [vmem:[%s5 + $0xc74] sm:$0xf]
    %v4940 = vld [vmem:[%s5 + $0xc78] sm:$0xff]
    %v4941 = vld [vmem:[%s5 + $0xc80] sm:$0xff]
    %v4942 = vld [vmem:[%s5 + $0xc88] sm:$0xff]
    %v4943 = vld [vmem:[%s5 + $0xc90] sm:$0xf]
    %v4944 = vld [vmem:[%s5 + $0xc94] sm:$0xff]
    %v4945 = vld [vmem:[%s5 + $0xc9c] sm:$0xff]
    %v4946 = vld [vmem:[%s5 + $0xca4] sm:$0xff]
    %v4947 = vld [vmem:[%s5 + $0xcac] sm:$0xf]
    %v4948 = vld [vmem:[%s5 + $0xcb0] sm:$0xff]
    %v4949 = vld [vmem:[%s5 + $0xcb8] sm:$0xff]
    %v4950 = vld [vmem:[%s5 + $0xcc0] sm:$0xff]
    %v4951 = vld [vmem:[%s5 + $0xcc8] sm:$0xf]
    %v4952 = vld [vmem:[%s5 + $0xccc] sm:$0xff]
    %v4953 = vld [vmem:[%s5 + $0xcd4] sm:$0xff]
    %v4954 = vld [vmem:[%s5 + $0xcdc] sm:$0xff]
    %v4955 = vld [vmem:[%s5 + $0xce4] sm:$0xf]
    %v4956 = vld [vmem:[%s5 + $0xce8] sm:$0xff]
    %v4957 = vld [vmem:[%s5 + $0xcf0] sm:$0xff]
    %v4958 = vld [vmem:[%s5 + $0xcf8] sm:$0xff]
    %v4959 = vld [vmem:[%s5 + $0xd00] sm:$0xf]
    %v4960 = vld [vmem:[%s5 + $0xd04] sm:$0xff]
    %v4961 = vld [vmem:[%s5 + $0xd0c] sm:$0xff]
    %v4962 = vld [vmem:[%s5 + $0xd14] sm:$0xff]
    %v4963 = vld [vmem:[%s5 + $0xd1c] sm:$0xf]
    %v4964 = vld [vmem:[%s5 + $0xd20] sm:$0xff]
    %v4965 = vld [vmem:[%s5 + $0xd28] sm:$0xff]
    %v4966 = vld [vmem:[%s5 + $0xd30] sm:$0xff]
    %v4967 = vld [vmem:[%s5 + $0xd38] sm:$0xf]
    %v4968 = vld [vmem:[%s5 + $0xd3c] sm:$0xff]
    %v4969 = vld [vmem:[%s5 + $0xd44] sm:$0xff]
    %v4970 = vld [vmem:[%s5 + $0xd4c] sm:$0xff]
    %v4971 = vld [vmem:[%s5 + $0xd54] sm:$0xf]
    %v4972 = vld [vmem:[%s5 + $0xd58] sm:$0xff]
    %v4973 = vld [vmem:[%s5 + $0xd60] sm:$0xff]
    %v4974 = vld [vmem:[%s5 + $0xd68] sm:$0xff]
    %v4975 = vld [vmem:[%s5 + $0xd70] sm:$0xf]
    %v4976 = vld [vmem:[%s5 + $0xd74] sm:$0xff]
    %v4977 = vld [vmem:[%s5 + $0xd7c] sm:$0xff]
    %v4978 = vld [vmem:[%s5 + $0xd84] sm:$0xff]
    %v4979 = vld [vmem:[%s5 + $0xd8c] sm:$0xf]
    %v4980 = vld [vmem:[%s5 + $0xd90] sm:$0xff]
    %v4981 = vld [vmem:[%s5 + $0xd98] sm:$0xff]
    %v4982 = vld [vmem:[%s5 + $0xda0] sm:$0xff]
    %v4983 = vld [vmem:[%s5 + $0xda8] sm:$0xf]
    %v4984 = vld [vmem:[%s5 + $0xdac] sm:$0xff]
    %v4985 = vld [vmem:[%s5 + $0xdb4] sm:$0xff]
    %v4986 = vld [vmem:[%s5 + $0xdbc] sm:$0xff]
    %v4987 = vld [vmem:[%s5 + $0xdc4] sm:$0xf]
    %v4988 = vld [vmem:[%s5 + $0xdc8] sm:$0xff]
    %v4989 = vld [vmem:[%s5 + $0xdd0] sm:$0xff]
    %v4990 = vld [vmem:[%s5 + $0xdd8] sm:$0xff]
    %v4991 = vld [vmem:[%s5 + $0xde0] sm:$0xf]
    %v4992 = vld [vmem:[%s5 + $0xde4] sm:$0xff]
    %v4993 = vld [vmem:[%s5 + $0xdec] sm:$0xff]
    %v4994 = vld [vmem:[%s5 + $0xdf4] sm:$0xff]
    %v4995 = vld [vmem:[%s5 + $0xdfc] sm:$0xf]
    %v4996 = vld [vmem:[%s6] sm:$0x7f]
    %v4998 = vlaneseq
    %v4999 = vshrl.u32 %v4998, 7
    %v5000 = vsub.s32 0, %v4999
    %v5001 = vrot.slane %v4996, %v5000
    %v5002 = vlaneseq
    %v5003 = vshrl.u32 %v5002, 7
    %v5004 = vsub.s32 1, %v5003
    %v5005 = vrot.slane %v4996, %v5004
    %v5006 = vlaneseq
    %v5007 = vshrl.u32 %v5006, 7
    %v5008 = vsub.s32 2, %v5007
    %v5009 = vrot.slane %v4996, %v5008
    %v5010 = vlaneseq
    %v5011 = vshrl.u32 %v5010, 7
    %v5012 = vsub.s32 3, %v5011
    %v5013 = vrot.slane %v4996, %v5012
    %v5014 = vlaneseq
    %v5015 = vshrl.u32 %v5014, 7
    %v5016 = vsub.s32 4, %v5015
    %v5017 = vrot.slane %v4996, %v5016
    %v5018 = vlaneseq
    %v5019 = vshrl.u32 %v5018, 7
    %v5020 = vsub.s32 5, %v5019
    %v5021 = vrot.slane %v4996, %v5020
    %v5022 = vlaneseq
    %v5023 = vshrl.u32 %v5022, 7
    %v5024 = vsub.s32 6, %v5023
    %v5025 = vrot.slane %v4996, %v5024
    %v5545 = vunpack.c.l.b16 %v4484
    %v5546 = vunpack.c.h.b16 %v4484
    %v5547 = vunpack.c.l.b16 %v4485
    %v5548 = vunpack.c.h.b16 %v4485
    %v5549 = vunpack.c.l.b16 %v4486
    %v5550 = vunpack.c.h.b16 %v4486
    %v5551 = vunpack.c.l.b16 %v4487
    %v5552 = vunpack.c.l.b16 %v4488
    %v5553 = vunpack.c.h.b16 %v4488
    %v5554 = vunpack.c.l.b16 %v4489
    %v5555 = vunpack.c.h.b16 %v4489
    %v5556 = vunpack.c.l.b16 %v4490
    %v5557 = vunpack.c.h.b16 %v4490
    %v5558 = vunpack.c.l.b16 %v4491
    %v5559 = vunpack.c.l.b16 %v4492
    %v5560 = vunpack.c.h.b16 %v4492
    %v5561 = vunpack.c.l.b16 %v4493
    %v5562 = vunpack.c.h.b16 %v4493
    %v5563 = vunpack.c.l.b16 %v4494
    %v5564 = vunpack.c.h.b16 %v4494
    %v5565 = vunpack.c.l.b16 %v4495
    %v5566 = vunpack.c.l.b16 %v4496
    %v5567 = vunpack.c.h.b16 %v4496
    %v5568 = vunpack.c.l.b16 %v4497
    %v5569 = vunpack.c.h.b16 %v4497
    %v5570 = vunpack.c.l.b16 %v4498
    %v5571 = vunpack.c.h.b16 %v4498
    %v5572 = vunpack.c.l.b16 %v4499
    %v5573 = vunpack.c.l.b16 %v4500
    %v5574 = vunpack.c.h.b16 %v4500
    %v5575 = vunpack.c.l.b16 %v4501
    %v5576 = vunpack.c.h.b16 %v4501
    %v5577 = vunpack.c.l.b16 %v4502
    %v5578 = vunpack.c.h.b16 %v4502
    %v5579 = vunpack.c.l.b16 %v4503
    %v5580 = vunpack.c.l.b16 %v4504
    %v5581 = vunpack.c.h.b16 %v4504
    %v5582 = vunpack.c.l.b16 %v4505
    %v5583 = vunpack.c.h.b16 %v4505
    %v5584 = vunpack.c.l.b16 %v4506
    %v5585 = vunpack.c.h.b16 %v4506
    %v5586 = vunpack.c.l.b16 %v4507
    %v5587 = vunpack.c.l.b16 %v4508
    %v5588 = vunpack.c.h.b16 %v4508
    %v5589 = vunpack.c.l.b16 %v4509
    %v5590 = vunpack.c.h.b16 %v4509
    %v5591 = vunpack.c.l.b16 %v4510
    %v5592 = vunpack.c.h.b16 %v4510
    %v5593 = vunpack.c.l.b16 %v4511
    %v5594 = vunpack.c.l.b16 %v4512
    %v5595 = vunpack.c.h.b16 %v4512
    %v5596 = vunpack.c.l.b16 %v4513
    %v5597 = vunpack.c.h.b16 %v4513
    %v5598 = vunpack.c.l.b16 %v4514
    %v5599 = vunpack.c.h.b16 %v4514
    %v5600 = vunpack.c.l.b16 %v4515
    %v5601 = vunpack.c.l.b16 %v4516
    %v5602 = vunpack.c.h.b16 %v4516
    %v5603 = vunpack.c.l.b16 %v4517
    %v5604 = vunpack.c.h.b16 %v4517
    %v5605 = vunpack.c.l.b16 %v4518
    %v5606 = vunpack.c.h.b16 %v4518
    %v5607 = vunpack.c.l.b16 %v4519
    %v5608 = vunpack.c.l.b16 %v4520
    %v5609 = vunpack.c.h.b16 %v4520
    %v5610 = vunpack.c.l.b16 %v4521
    %v5611 = vunpack.c.h.b16 %v4521
    %v5612 = vunpack.c.l.b16 %v4522
    %v5613 = vunpack.c.h.b16 %v4522
    %v5614 = vunpack.c.l.b16 %v4523
    %v5615 = vunpack.c.l.b16 %v4524
    %v5616 = vunpack.c.h.b16 %v4524
    %v5617 = vunpack.c.l.b16 %v4525
    %v5618 = vunpack.c.h.b16 %v4525
    %v5619 = vunpack.c.l.b16 %v4526
    %v5620 = vunpack.c.h.b16 %v4526
    %v5621 = vunpack.c.l.b16 %v4527
    %v5622 = vunpack.c.l.b16 %v4528
    %v5623 = vunpack.c.h.b16 %v4528
    %v5624 = vunpack.c.l.b16 %v4529
    %v5625 = vunpack.c.h.b16 %v4529
    %v5626 = vunpack.c.l.b16 %v4530
    %v5627 = vunpack.c.h.b16 %v4530
    %v5628 = vunpack.c.l.b16 %v4531
    %v5629 = vunpack.c.l.b16 %v4532
    %v5630 = vunpack.c.h.b16 %v4532
    %v5631 = vunpack.c.l.b16 %v4533
    %v5632 = vunpack.c.h.b16 %v4533
    %v5633 = vunpack.c.l.b16 %v4534
    %v5634 = vunpack.c.h.b16 %v4534
    %v5635 = vunpack.c.l.b16 %v4535
    %v5636 = vunpack.c.l.b16 %v4536
    %v5637 = vunpack.c.h.b16 %v4536
    %v5638 = vunpack.c.l.b16 %v4537
    %v5639 = vunpack.c.h.b16 %v4537
    %v5640 = vunpack.c.l.b16 %v4538
    %v5641 = vunpack.c.h.b16 %v4538
    %v5642 = vunpack.c.l.b16 %v4539
    %v5643 = vunpack.c.l.b16 %v4540
    %v5644 = vunpack.c.h.b16 %v4540
    %v5645 = vunpack.c.l.b16 %v4541
    %v5646 = vunpack.c.h.b16 %v4541
    %v5647 = vunpack.c.l.b16 %v4542
    %v5648 = vunpack.c.h.b16 %v4542
    %v5649 = vunpack.c.l.b16 %v4543
    %v5650 = vunpack.c.l.b16 %v4544
    %v5651 = vunpack.c.h.b16 %v4544
    %v5652 = vunpack.c.l.b16 %v4545
    %v5653 = vunpack.c.h.b16 %v4545
    %v5654 = vunpack.c.l.b16 %v4546
    %v5655 = vunpack.c.h.b16 %v4546
    %v5656 = vunpack.c.l.b16 %v4547
    %v5657 = vunpack.c.l.b16 %v4548
    %v5658 = vunpack.c.h.b16 %v4548
    %v5659 = vunpack.c.l.b16 %v4549
    %v5660 = vunpack.c.h.b16 %v4549
    %v5661 = vunpack.c.l.b16 %v4550
    %v5662 = vunpack.c.h.b16 %v4550
    %v5663 = vunpack.c.l.b16 %v4551
    %v5664 = vunpack.c.l.b16 %v4552
    %v5665 = vunpack.c.h.b16 %v4552
    %v5666 = vunpack.c.l.b16 %v4553
    %v5667 = vunpack.c.h.b16 %v4553
    %v5668 = vunpack.c.l.b16 %v4554
    %v5669 = vunpack.c.h.b16 %v4554
    %v5670 = vunpack.c.l.b16 %v4555
    %v5671 = vunpack.c.l.b16 %v4556
    %v5672 = vunpack.c.h.b16 %v4556
    %v5673 = vunpack.c.l.b16 %v4557
    %v5674 = vunpack.c.h.b16 %v4557
    %v5675 = vunpack.c.l.b16 %v4558
    %v5676 = vunpack.c.h.b16 %v4558
    %v5677 = vunpack.c.l.b16 %v4559
    %v5678 = vunpack.c.l.b16 %v4560
    %v5679 = vunpack.c.h.b16 %v4560
    %v5680 = vunpack.c.l.b16 %v4561
    %v5681 = vunpack.c.h.b16 %v4561
    %v5682 = vunpack.c.l.b16 %v4562
    %v5683 = vunpack.c.h.b16 %v4562
    %v5684 = vunpack.c.l.b16 %v4563
    %v5685 = vunpack.c.l.b16 %v4564
    %v5686 = vunpack.c.h.b16 %v4564
    %v5687 = vunpack.c.l.b16 %v4565
    %v5688 = vunpack.c.h.b16 %v4565
    %v5689 = vunpack.c.l.b16 %v4566
    %v5690 = vunpack.c.h.b16 %v4566
    %v5691 = vunpack.c.l.b16 %v4567
    %v5692 = vunpack.c.l.b16 %v4568
    %v5693 = vunpack.c.h.b16 %v4568
    %v5694 = vunpack.c.l.b16 %v4569
    %v5695 = vunpack.c.h.b16 %v4569
    %v5696 = vunpack.c.l.b16 %v4570
    %v5697 = vunpack.c.h.b16 %v4570
    %v5698 = vunpack.c.l.b16 %v4571
    %v5699 = vunpack.c.l.b16 %v4572
    %v5700 = vunpack.c.h.b16 %v4572
    %v5701 = vunpack.c.l.b16 %v4573
    %v5702 = vunpack.c.h.b16 %v4573
    %v5703 = vunpack.c.l.b16 %v4574
    %v5704 = vunpack.c.h.b16 %v4574
    %v5705 = vunpack.c.l.b16 %v4575
    %v5706 = vunpack.c.l.b16 %v4576
    %v5707 = vunpack.c.h.b16 %v4576
    %v5708 = vunpack.c.l.b16 %v4577
    %v5709 = vunpack.c.h.b16 %v4577
    %v5710 = vunpack.c.l.b16 %v4578
    %v5711 = vunpack.c.h.b16 %v4578
    %v5712 = vunpack.c.l.b16 %v4579
    %v5713 = vunpack.c.l.b16 %v4580
    %v5714 = vunpack.c.h.b16 %v4580
    %v5715 = vunpack.c.l.b16 %v4581
    %v5716 = vunpack.c.h.b16 %v4581
    %v5717 = vunpack.c.l.b16 %v4582
    %v5718 = vunpack.c.h.b16 %v4582
    %v5719 = vunpack.c.l.b16 %v4583
    %v5720 = vunpack.c.l.b16 %v4584
    %v5721 = vunpack.c.h.b16 %v4584
    %v5722 = vunpack.c.l.b16 %v4585
    %v5723 = vunpack.c.h.b16 %v4585
    %v5724 = vunpack.c.l.b16 %v4586
    %v5725 = vunpack.c.h.b16 %v4586
    %v5726 = vunpack.c.l.b16 %v4587
    %v5727 = vunpack.c.l.b16 %v4588
    %v5728 = vunpack.c.h.b16 %v4588
    %v5729 = vunpack.c.l.b16 %v4589
    %v5730 = vunpack.c.h.b16 %v4589
    %v5731 = vunpack.c.l.b16 %v4590
    %v5732 = vunpack.c.h.b16 %v4590
    %v5733 = vunpack.c.l.b16 %v4591
    %v5734 = vunpack.c.l.b16 %v4592
    %v5735 = vunpack.c.h.b16 %v4592
    %v5736 = vunpack.c.l.b16 %v4593
    %v5737 = vunpack.c.h.b16 %v4593
    %v5738 = vunpack.c.l.b16 %v4594
    %v5739 = vunpack.c.h.b16 %v4594
    %v5740 = vunpack.c.l.b16 %v4595
    %v5741 = vunpack.c.l.b16 %v4596
    %v5742 = vunpack.c.h.b16 %v4596
    %v5743 = vunpack.c.l.b16 %v4597
    %v5744 = vunpack.c.h.b16 %v4597
    %v5745 = vunpack.c.l.b16 %v4598
    %v5746 = vunpack.c.h.b16 %v4598
    %v5747 = vunpack.c.l.b16 %v4599
    %v5748 = vunpack.c.l.b16 %v4600
    %v5749 = vunpack.c.h.b16 %v4600
    %v5750 = vunpack.c.l.b16 %v4601
    %v5751 = vunpack.c.h.b16 %v4601
    %v5752 = vunpack.c.l.b16 %v4602
    %v5753 = vunpack.c.h.b16 %v4602
    %v5754 = vunpack.c.l.b16 %v4603
    %v5755 = vunpack.c.l.b16 %v4604
    %v5756 = vunpack.c.h.b16 %v4604
    %v5757 = vunpack.c.l.b16 %v4605
    %v5758 = vunpack.c.h.b16 %v4605
    %v5759 = vunpack.c.l.b16 %v4606
    %v5760 = vunpack.c.h.b16 %v4606
    %v5761 = vunpack.c.l.b16 %v4607
    %v5762 = vunpack.c.l.b16 %v4608
    %v5763 = vunpack.c.h.b16 %v4608
    %v5764 = vunpack.c.l.b16 %v4609
    %v5765 = vunpack.c.h.b16 %v4609
    %v5766 = vunpack.c.l.b16 %v4610
    %v5767 = vunpack.c.h.b16 %v4610
    %v5768 = vunpack.c.l.b16 %v4611
    %v5769 = vunpack.c.l.b16 %v4612
    %v5770 = vunpack.c.h.b16 %v4612
    %v5771 = vunpack.c.l.b16 %v4613
    %v5772 = vunpack.c.h.b16 %v4613
    %v5773 = vunpack.c.l.b16 %v4614
    %v5774 = vunpack.c.h.b16 %v4614
    %v5775 = vunpack.c.l.b16 %v4615
    %v5776 = vunpack.c.l.b16 %v4616
    %v5777 = vunpack.c.h.b16 %v4616
    %v5778 = vunpack.c.l.b16 %v4617
    %v5779 = vunpack.c.h.b16 %v4617
    %v5780 = vunpack.c.l.b16 %v4618
    %v5781 = vunpack.c.h.b16 %v4618
    %v5782 = vunpack.c.l.b16 %v4619
    %v5783 = vunpack.c.l.b16 %v4620
    %v5784 = vunpack.c.h.b16 %v4620
    %v5785 = vunpack.c.l.b16 %v4621
    %v5786 = vunpack.c.h.b16 %v4621
    %v5787 = vunpack.c.l.b16 %v4622
    %v5788 = vunpack.c.h.b16 %v4622
    %v5789 = vunpack.c.l.b16 %v4623
    %v5790 = vunpack.c.l.b16 %v4624
    %v5791 = vunpack.c.h.b16 %v4624
    %v5792 = vunpack.c.l.b16 %v4625
    %v5793 = vunpack.c.h.b16 %v4625
    %v5794 = vunpack.c.l.b16 %v4626
    %v5795 = vunpack.c.h.b16 %v4626
    %v5796 = vunpack.c.l.b16 %v4627
    %v5797 = vunpack.c.l.b16 %v4628
    %v5798 = vunpack.c.h.b16 %v4628
    %v5799 = vunpack.c.l.b16 %v4629
    %v5800 = vunpack.c.h.b16 %v4629
    %v5801 = vunpack.c.l.b16 %v4630
    %v5802 = vunpack.c.h.b16 %v4630
    %v5803 = vunpack.c.l.b16 %v4631
    %v5804 = vunpack.c.l.b16 %v4632
    %v5805 = vunpack.c.h.b16 %v4632
    %v5806 = vunpack.c.l.b16 %v4633
    %v5807 = vunpack.c.h.b16 %v4633
    %v5808 = vunpack.c.l.b16 %v4634
    %v5809 = vunpack.c.h.b16 %v4634
    %v5810 = vunpack.c.l.b16 %v4635
    %v5811 = vunpack.c.l.b16 %v4636
    %v5812 = vunpack.c.h.b16 %v4636
    %v5813 = vunpack.c.l.b16 %v4637
    %v5814 = vunpack.c.h.b16 %v4637
    %v5815 = vunpack.c.l.b16 %v4638
    %v5816 = vunpack.c.h.b16 %v4638
    %v5817 = vunpack.c.l.b16 %v4639
    %v5818 = vunpack.c.l.b16 %v4640
    %v5819 = vunpack.c.h.b16 %v4640
    %v5820 = vunpack.c.l.b16 %v4641
    %v5821 = vunpack.c.h.b16 %v4641
    %v5822 = vunpack.c.l.b16 %v4642
    %v5823 = vunpack.c.h.b16 %v4642
    %v5824 = vunpack.c.l.b16 %v4643
    %v5825 = vunpack.c.l.b16 %v4644
    %v5826 = vunpack.c.h.b16 %v4644
    %v5827 = vunpack.c.l.b16 %v4645
    %v5828 = vunpack.c.h.b16 %v4645
    %v5829 = vunpack.c.l.b16 %v4646
    %v5830 = vunpack.c.h.b16 %v4646
    %v5831 = vunpack.c.l.b16 %v4647
    %v5832 = vunpack.c.l.b16 %v4648
    %v5833 = vunpack.c.h.b16 %v4648
    %v5834 = vunpack.c.l.b16 %v4649
    %v5835 = vunpack.c.h.b16 %v4649
    %v5836 = vunpack.c.l.b16 %v4650
    %v5837 = vunpack.c.h.b16 %v4650
    %v5838 = vunpack.c.l.b16 %v4651
    %v5839 = vunpack.c.l.b16 %v4652
    %v5840 = vunpack.c.h.b16 %v4652
    %v5841 = vunpack.c.l.b16 %v4653
    %v5842 = vunpack.c.h.b16 %v4653
    %v5843 = vunpack.c.l.b16 %v4654
    %v5844 = vunpack.c.h.b16 %v4654
    %v5845 = vunpack.c.l.b16 %v4655
    %v5846 = vunpack.c.l.b16 %v4656
    %v5847 = vunpack.c.h.b16 %v4656
    %v5848 = vunpack.c.l.b16 %v4657
    %v5849 = vunpack.c.h.b16 %v4657
    %v5850 = vunpack.c.l.b16 %v4658
    %v5851 = vunpack.c.h.b16 %v4658
    %v5852 = vunpack.c.l.b16 %v4659
    %v5853 = vunpack.c.l.b16 %v4660
    %v5854 = vunpack.c.h.b16 %v4660
    %v5855 = vunpack.c.l.b16 %v4661
    %v5856 = vunpack.c.h.b16 %v4661
    %v5857 = vunpack.c.l.b16 %v4662
    %v5858 = vunpack.c.h.b16 %v4662
    %v5859 = vunpack.c.l.b16 %v4663
    %v5860 = vunpack.c.l.b16 %v4664
    %v5861 = vunpack.c.h.b16 %v4664
    %v5862 = vunpack.c.l.b16 %v4665
    %v5863 = vunpack.c.h.b16 %v4665
    %v5864 = vunpack.c.l.b16 %v4666
    %v5865 = vunpack.c.h.b16 %v4666
    %v5866 = vunpack.c.l.b16 %v4667
    %v5867 = vunpack.c.l.b16 %v4668
    %v5868 = vunpack.c.h.b16 %v4668
    %v5869 = vunpack.c.l.b16 %v4669
    %v5870 = vunpack.c.h.b16 %v4669
    %v5871 = vunpack.c.l.b16 %v4670
    %v5872 = vunpack.c.h.b16 %v4670
    %v5873 = vunpack.c.l.b16 %v4671
    %v5874 = vunpack.c.l.b16 %v4672
    %v5875 = vunpack.c.h.b16 %v4672
    %v5876 = vunpack.c.l.b16 %v4673
    %v5877 = vunpack.c.h.b16 %v4673
    %v5878 = vunpack.c.l.b16 %v4674
    %v5879 = vunpack.c.h.b16 %v4674
    %v5880 = vunpack.c.l.b16 %v4675
    %v5881 = vunpack.c.l.b16 %v4676
    %v5882 = vunpack.c.h.b16 %v4676
    %v5883 = vunpack.c.l.b16 %v4677
    %v5884 = vunpack.c.h.b16 %v4677
    %v5885 = vunpack.c.l.b16 %v4678
    %v5886 = vunpack.c.h.b16 %v4678
    %v5887 = vunpack.c.l.b16 %v4679
    %v5888 = vunpack.c.l.b16 %v4680
    %v5889 = vunpack.c.h.b16 %v4680
    %v5890 = vunpack.c.l.b16 %v4681
    %v5891 = vunpack.c.h.b16 %v4681
    %v5892 = vunpack.c.l.b16 %v4682
    %v5893 = vunpack.c.h.b16 %v4682
    %v5894 = vunpack.c.l.b16 %v4683
    %v5895 = vunpack.c.l.b16 %v4684
    %v5896 = vunpack.c.h.b16 %v4684
    %v5897 = vunpack.c.l.b16 %v4685
    %v5898 = vunpack.c.h.b16 %v4685
    %v5899 = vunpack.c.l.b16 %v4686
    %v5900 = vunpack.c.h.b16 %v4686
    %v5901 = vunpack.c.l.b16 %v4687
    %v5902 = vunpack.c.l.b16 %v4688
    %v5903 = vunpack.c.h.b16 %v4688
    %v5904 = vunpack.c.l.b16 %v4689
    %v5905 = vunpack.c.h.b16 %v4689
    %v5906 = vunpack.c.l.b16 %v4690
    %v5907 = vunpack.c.h.b16 %v4690
    %v5908 = vunpack.c.l.b16 %v4691
    %v5909 = vunpack.c.l.b16 %v4692
    %v5910 = vunpack.c.h.b16 %v4692
    %v5911 = vunpack.c.l.b16 %v4693
    %v5912 = vunpack.c.h.b16 %v4693
    %v5913 = vunpack.c.l.b16 %v4694
    %v5914 = vunpack.c.h.b16 %v4694
    %v5915 = vunpack.c.l.b16 %v4695
    %v5916 = vunpack.c.l.b16 %v4696
    %v5917 = vunpack.c.h.b16 %v4696
    %v5918 = vunpack.c.l.b16 %v4697
    %v5919 = vunpack.c.h.b16 %v4697
    %v5920 = vunpack.c.l.b16 %v4698
    %v5921 = vunpack.c.h.b16 %v4698
    %v5922 = vunpack.c.l.b16 %v4699
    %v5923 = vunpack.c.l.b16 %v4700
    %v5924 = vunpack.c.h.b16 %v4700
    %v5925 = vunpack.c.l.b16 %v4701
    %v5926 = vunpack.c.h.b16 %v4701
    %v5927 = vunpack.c.l.b16 %v4702
    %v5928 = vunpack.c.h.b16 %v4702
    %v5929 = vunpack.c.l.b16 %v4703
    %v5930 = vunpack.c.l.b16 %v4704
    %v5931 = vunpack.c.h.b16 %v4704
    %v5932 = vunpack.c.l.b16 %v4705
    %v5933 = vunpack.c.h.b16 %v4705
    %v5934 = vunpack.c.l.b16 %v4706
    %v5935 = vunpack.c.h.b16 %v4706
    %v5936 = vunpack.c.l.b16 %v4707
    %v5937 = vunpack.c.l.b16 %v4708
    %v5938 = vunpack.c.h.b16 %v4708
    %v5939 = vunpack.c.l.b16 %v4709
    %v5940 = vunpack.c.h.b16 %v4709
    %v5941 = vunpack.c.l.b16 %v4710
    %v5942 = vunpack.c.h.b16 %v4710
    %v5943 = vunpack.c.l.b16 %v4711
    %v5944 = vunpack.c.l.b16 %v4712
    %v5945 = vunpack.c.h.b16 %v4712
    %v5946 = vunpack.c.l.b16 %v4713
    %v5947 = vunpack.c.h.b16 %v4713
    %v5948 = vunpack.c.l.b16 %v4714
    %v5949 = vunpack.c.h.b16 %v4714
    %v5950 = vunpack.c.l.b16 %v4715
    %v5951 = vunpack.c.l.b16 %v4716
    %v5952 = vunpack.c.h.b16 %v4716
    %v5953 = vunpack.c.l.b16 %v4717
    %v5954 = vunpack.c.h.b16 %v4717
    %v5955 = vunpack.c.l.b16 %v4718
    %v5956 = vunpack.c.h.b16 %v4718
    %v5957 = vunpack.c.l.b16 %v4719
    %v5958 = vunpack.c.l.b16 %v4720
    %v5959 = vunpack.c.h.b16 %v4720
    %v5960 = vunpack.c.l.b16 %v4721
    %v5961 = vunpack.c.h.b16 %v4721
    %v5962 = vunpack.c.l.b16 %v4722
    %v5963 = vunpack.c.h.b16 %v4722
    %v5964 = vunpack.c.l.b16 %v4723
    %v5965 = vunpack.c.l.b16 %v4724
    %v5966 = vunpack.c.h.b16 %v4724
    %v5967 = vunpack.c.l.b16 %v4725
    %v5968 = vunpack.c.h.b16 %v4725
    %v5969 = vunpack.c.l.b16 %v4726
    %v5970 = vunpack.c.h.b16 %v4726
    %v5971 = vunpack.c.l.b16 %v4727
    %v5972 = vunpack.c.l.b16 %v4728
    %v5973 = vunpack.c.h.b16 %v4728
    %v5974 = vunpack.c.l.b16 %v4729
    %v5975 = vunpack.c.h.b16 %v4729
    %v5976 = vunpack.c.l.b16 %v4730
    %v5977 = vunpack.c.h.b16 %v4730
    %v5978 = vunpack.c.l.b16 %v4731
    %v5979 = vunpack.c.l.b16 %v4732
    %v5980 = vunpack.c.h.b16 %v4732
    %v5981 = vunpack.c.l.b16 %v4733
    %v5982 = vunpack.c.h.b16 %v4733
    %v5983 = vunpack.c.l.b16 %v4734
    %v5984 = vunpack.c.h.b16 %v4734
    %v5985 = vunpack.c.l.b16 %v4735
    %v5986 = vunpack.c.l.b16 %v4736
    %v5987 = vunpack.c.h.b16 %v4736
    %v5988 = vunpack.c.l.b16 %v4737
    %v5989 = vunpack.c.h.b16 %v4737
    %v5990 = vunpack.c.l.b16 %v4738
    %v5991 = vunpack.c.h.b16 %v4738
    %v5992 = vunpack.c.l.b16 %v4739
    %v5993 = vunpack.c.l.b16 %v4740
    %v5994 = vunpack.c.h.b16 %v4740
    %v5995 = vunpack.c.l.b16 %v4741
    %v5996 = vunpack.c.h.b16 %v4741
    %v5997 = vunpack.c.l.b16 %v4742
    %v5998 = vunpack.c.h.b16 %v4742
    %v5999 = vunpack.c.l.b16 %v4743
    %v6000 = vunpack.c.l.b16 %v4744
    %v6001 = vunpack.c.h.b16 %v4744
    %v6002 = vunpack.c.l.b16 %v4745
    %v6003 = vunpack.c.h.b16 %v4745
    %v6004 = vunpack.c.l.b16 %v4746
    %v6005 = vunpack.c.h.b16 %v4746
    %v6006 = vunpack.c.l.b16 %v4747
    %v6007 = vunpack.c.l.b16 %v4748
    %v6008 = vunpack.c.h.b16 %v4748
    %v6009 = vunpack.c.l.b16 %v4749
    %v6010 = vunpack.c.h.b16 %v4749
    %v6011 = vunpack.c.l.b16 %v4750
    %v6012 = vunpack.c.h.b16 %v4750
    %v6013 = vunpack.c.l.b16 %v4751
    %v6014 = vunpack.c.l.b16 %v4752
    %v6015 = vunpack.c.h.b16 %v4752
    %v6016 = vunpack.c.l.b16 %v4753
    %v6017 = vunpack.c.h.b16 %v4753
    %v6018 = vunpack.c.l.b16 %v4754
    %v6019 = vunpack.c.h.b16 %v4754
    %v6020 = vunpack.c.l.b16 %v4755
    %v6021 = vunpack.c.l.b16 %v4756
    %v6022 = vunpack.c.h.b16 %v4756
    %v6023 = vunpack.c.l.b16 %v4757
    %v6024 = vunpack.c.h.b16 %v4757
    %v6025 = vunpack.c.l.b16 %v4758
    %v6026 = vunpack.c.h.b16 %v4758
    %v6027 = vunpack.c.l.b16 %v4759
    %v6028 = vunpack.c.l.b16 %v4760
    %v6029 = vunpack.c.h.b16 %v4760
    %v6030 = vunpack.c.l.b16 %v4761
    %v6031 = vunpack.c.h.b16 %v4761
    %v6032 = vunpack.c.l.b16 %v4762
    %v6033 = vunpack.c.h.b16 %v4762
    %v6034 = vunpack.c.l.b16 %v4763
    %v6035 = vunpack.c.l.b16 %v4764
    %v6036 = vunpack.c.h.b16 %v4764
    %v6037 = vunpack.c.l.b16 %v4765
    %v6038 = vunpack.c.h.b16 %v4765
    %v6039 = vunpack.c.l.b16 %v4766
    %v6040 = vunpack.c.h.b16 %v4766
    %v6041 = vunpack.c.l.b16 %v4767
    %v6042 = vunpack.c.l.b16 %v4768
    %v6043 = vunpack.c.h.b16 %v4768
    %v6044 = vunpack.c.l.b16 %v4769
    %v6045 = vunpack.c.h.b16 %v4769
    %v6046 = vunpack.c.l.b16 %v4770
    %v6047 = vunpack.c.h.b16 %v4770
    %v6048 = vunpack.c.l.b16 %v4771
    %v6049 = vunpack.c.l.b16 %v4772
    %v6050 = vunpack.c.h.b16 %v4772
    %v6051 = vunpack.c.l.b16 %v4773
    %v6052 = vunpack.c.h.b16 %v4773
    %v6053 = vunpack.c.l.b16 %v4774
    %v6054 = vunpack.c.h.b16 %v4774
    %v6055 = vunpack.c.l.b16 %v4775
    %v6056 = vunpack.c.l.b16 %v4776
    %v6057 = vunpack.c.h.b16 %v4776
    %v6058 = vunpack.c.l.b16 %v4777
    %v6059 = vunpack.c.h.b16 %v4777
    %v6060 = vunpack.c.l.b16 %v4778
    %v6061 = vunpack.c.h.b16 %v4778
    %v6062 = vunpack.c.l.b16 %v4779
    %v6063 = vunpack.c.l.b16 %v4780
    %v6064 = vunpack.c.h.b16 %v4780
    %v6065 = vunpack.c.l.b16 %v4781
    %v6066 = vunpack.c.h.b16 %v4781
    %v6067 = vunpack.c.l.b16 %v4782
    %v6068 = vunpack.c.h.b16 %v4782
    %v6069 = vunpack.c.l.b16 %v4783
    %v6070 = vunpack.c.l.b16 %v4784
    %v6071 = vunpack.c.h.b16 %v4784
    %v6072 = vunpack.c.l.b16 %v4785
    %v6073 = vunpack.c.h.b16 %v4785
    %v6074 = vunpack.c.l.b16 %v4786
    %v6075 = vunpack.c.h.b16 %v4786
    %v6076 = vunpack.c.l.b16 %v4787
    %v6077 = vunpack.c.l.b16 %v4788
    %v6078 = vunpack.c.h.b16 %v4788
    %v6079 = vunpack.c.l.b16 %v4789
    %v6080 = vunpack.c.h.b16 %v4789
    %v6081 = vunpack.c.l.b16 %v4790
    %v6082 = vunpack.c.h.b16 %v4790
    %v6083 = vunpack.c.l.b16 %v4791
    %v6084 = vunpack.c.l.b16 %v4792
    %v6085 = vunpack.c.h.b16 %v4792
    %v6086 = vunpack.c.l.b16 %v4793
    %v6087 = vunpack.c.h.b16 %v4793
    %v6088 = vunpack.c.l.b16 %v4794
    %v6089 = vunpack.c.h.b16 %v4794
    %v6090 = vunpack.c.l.b16 %v4795
    %v6091 = vunpack.c.l.b16 %v4796
    %v6092 = vunpack.c.h.b16 %v4796
    %v6093 = vunpack.c.l.b16 %v4797
    %v6094 = vunpack.c.h.b16 %v4797
    %v6095 = vunpack.c.l.b16 %v4798
    %v6096 = vunpack.c.h.b16 %v4798
    %v6097 = vunpack.c.l.b16 %v4799
    %v6098 = vunpack.c.l.b16 %v4800
    %v6099 = vunpack.c.h.b16 %v4800
    %v6100 = vunpack.c.l.b16 %v4801
    %v6101 = vunpack.c.h.b16 %v4801
    %v6102 = vunpack.c.l.b16 %v4802
    %v6103 = vunpack.c.h.b16 %v4802
    %v6104 = vunpack.c.l.b16 %v4803
    %v6105 = vunpack.c.l.b16 %v4804
    %v6106 = vunpack.c.h.b16 %v4804
    %v6107 = vunpack.c.l.b16 %v4805
    %v6108 = vunpack.c.h.b16 %v4805
    %v6109 = vunpack.c.l.b16 %v4806
    %v6110 = vunpack.c.h.b16 %v4806
    %v6111 = vunpack.c.l.b16 %v4807
    %v6112 = vunpack.c.l.b16 %v4808
    %v6113 = vunpack.c.h.b16 %v4808
    %v6114 = vunpack.c.l.b16 %v4809
    %v6115 = vunpack.c.h.b16 %v4809
    %v6116 = vunpack.c.l.b16 %v4810
    %v6117 = vunpack.c.h.b16 %v4810
    %v6118 = vunpack.c.l.b16 %v4811
    %v6119 = vunpack.c.l.b16 %v4812
    %v6120 = vunpack.c.h.b16 %v4812
    %v6121 = vunpack.c.l.b16 %v4813
    %v6122 = vunpack.c.h.b16 %v4813
    %v6123 = vunpack.c.l.b16 %v4814
    %v6124 = vunpack.c.h.b16 %v4814
    %v6125 = vunpack.c.l.b16 %v4815
    %v6126 = vunpack.c.l.b16 %v4816
    %v6127 = vunpack.c.h.b16 %v4816
    %v6128 = vunpack.c.l.b16 %v4817
    %v6129 = vunpack.c.h.b16 %v4817
    %v6130 = vunpack.c.l.b16 %v4818
    %v6131 = vunpack.c.h.b16 %v4818
    %v6132 = vunpack.c.l.b16 %v4819
    %v6133 = vunpack.c.l.b16 %v4820
    %v6134 = vunpack.c.h.b16 %v4820
    %v6135 = vunpack.c.l.b16 %v4821
    %v6136 = vunpack.c.h.b16 %v4821
    %v6137 = vunpack.c.l.b16 %v4822
    %v6138 = vunpack.c.h.b16 %v4822
    %v6139 = vunpack.c.l.b16 %v4823
    %v6140 = vunpack.c.l.b16 %v4824
    %v6141 = vunpack.c.h.b16 %v4824
    %v6142 = vunpack.c.l.b16 %v4825
    %v6143 = vunpack.c.h.b16 %v4825
    %v6144 = vunpack.c.l.b16 %v4826
    %v6145 = vunpack.c.h.b16 %v4826
    %v6146 = vunpack.c.l.b16 %v4827
    %v6147 = vunpack.c.l.b16 %v4828
    %v6148 = vunpack.c.h.b16 %v4828
    %v6149 = vunpack.c.l.b16 %v4829
    %v6150 = vunpack.c.h.b16 %v4829
    %v6151 = vunpack.c.l.b16 %v4830
    %v6152 = vunpack.c.h.b16 %v4830
    %v6153 = vunpack.c.l.b16 %v4831
    %v6154 = vunpack.c.l.b16 %v4832
    %v6155 = vunpack.c.h.b16 %v4832
    %v6156 = vunpack.c.l.b16 %v4833
    %v6157 = vunpack.c.h.b16 %v4833
    %v6158 = vunpack.c.l.b16 %v4834
    %v6159 = vunpack.c.h.b16 %v4834
    %v6160 = vunpack.c.l.b16 %v4835
    %v6161 = vunpack.c.l.b16 %v4836
    %v6162 = vunpack.c.h.b16 %v4836
    %v6163 = vunpack.c.l.b16 %v4837
    %v6164 = vunpack.c.h.b16 %v4837
    %v6165 = vunpack.c.l.b16 %v4838
    %v6166 = vunpack.c.h.b16 %v4838
    %v6167 = vunpack.c.l.b16 %v4839
    %v6168 = vunpack.c.l.b16 %v4840
    %v6169 = vunpack.c.h.b16 %v4840
    %v6170 = vunpack.c.l.b16 %v4841
    %v6171 = vunpack.c.h.b16 %v4841
    %v6172 = vunpack.c.l.b16 %v4842
    %v6173 = vunpack.c.h.b16 %v4842
    %v6174 = vunpack.c.l.b16 %v4843
    %v6175 = vunpack.c.l.b16 %v4844
    %v6176 = vunpack.c.h.b16 %v4844
    %v6177 = vunpack.c.l.b16 %v4845
    %v6178 = vunpack.c.h.b16 %v4845
    %v6179 = vunpack.c.l.b16 %v4846
    %v6180 = vunpack.c.h.b16 %v4846
    %v6181 = vunpack.c.l.b16 %v4847
    %v6182 = vunpack.c.l.b16 %v4848
    %v6183 = vunpack.c.h.b16 %v4848
    %v6184 = vunpack.c.l.b16 %v4849
    %v6185 = vunpack.c.h.b16 %v4849
    %v6186 = vunpack.c.l.b16 %v4850
    %v6187 = vunpack.c.h.b16 %v4850
    %v6188 = vunpack.c.l.b16 %v4851
    %v6189 = vunpack.c.l.b16 %v4852
    %v6190 = vunpack.c.h.b16 %v4852
    %v6191 = vunpack.c.l.b16 %v4853
    %v6192 = vunpack.c.h.b16 %v4853
    %v6193 = vunpack.c.l.b16 %v4854
    %v6194 = vunpack.c.h.b16 %v4854
    %v6195 = vunpack.c.l.b16 %v4855
    %v6196 = vunpack.c.l.b16 %v4856
    %v6197 = vunpack.c.h.b16 %v4856
    %v6198 = vunpack.c.l.b16 %v4857
    %v6199 = vunpack.c.h.b16 %v4857
    %v6200 = vunpack.c.l.b16 %v4858
    %v6201 = vunpack.c.h.b16 %v4858
    %v6202 = vunpack.c.l.b16 %v4859
    %v6203 = vunpack.c.l.b16 %v4860
    %v6204 = vunpack.c.h.b16 %v4860
    %v6205 = vunpack.c.l.b16 %v4861
    %v6206 = vunpack.c.h.b16 %v4861
    %v6207 = vunpack.c.l.b16 %v4862
    %v6208 = vunpack.c.h.b16 %v4862
    %v6209 = vunpack.c.l.b16 %v4863
    %v6210 = vunpack.c.l.b16 %v4864
    %v6211 = vunpack.c.h.b16 %v4864
    %v6212 = vunpack.c.l.b16 %v4865
    %v6213 = vunpack.c.h.b16 %v4865
    %v6214 = vunpack.c.l.b16 %v4866
    %v6215 = vunpack.c.h.b16 %v4866
    %v6216 = vunpack.c.l.b16 %v4867
    %v6217 = vunpack.c.l.b16 %v4868
    %v6218 = vunpack.c.h.b16 %v4868
    %v6219 = vunpack.c.l.b16 %v4869
    %v6220 = vunpack.c.h.b16 %v4869
    %v6221 = vunpack.c.l.b16 %v4870
    %v6222 = vunpack.c.h.b16 %v4870
    %v6223 = vunpack.c.l.b16 %v4871
    %v6224 = vunpack.c.l.b16 %v4872
    %v6225 = vunpack.c.h.b16 %v4872
    %v6226 = vunpack.c.l.b16 %v4873
    %v6227 = vunpack.c.h.b16 %v4873
    %v6228 = vunpack.c.l.b16 %v4874
    %v6229 = vunpack.c.h.b16 %v4874
    %v6230 = vunpack.c.l.b16 %v4875
    %v6231 = vunpack.c.l.b16 %v4876
    %v6232 = vunpack.c.h.b16 %v4876
    %v6233 = vunpack.c.l.b16 %v4877
    %v6234 = vunpack.c.h.b16 %v4877
    %v6235 = vunpack.c.l.b16 %v4878
    %v6236 = vunpack.c.h.b16 %v4878
    %v6237 = vunpack.c.l.b16 %v4879
    %v6238 = vunpack.c.l.b16 %v4880
    %v6239 = vunpack.c.h.b16 %v4880
    %v6240 = vunpack.c.l.b16 %v4881
    %v6241 = vunpack.c.h.b16 %v4881
    %v6242 = vunpack.c.l.b16 %v4882
    %v6243 = vunpack.c.h.b16 %v4882
    %v6244 = vunpack.c.l.b16 %v4883
    %v6245 = vunpack.c.l.b16 %v4884
    %v6246 = vunpack.c.h.b16 %v4884
    %v6247 = vunpack.c.l.b16 %v4885
    %v6248 = vunpack.c.h.b16 %v4885
    %v6249 = vunpack.c.l.b16 %v4886
    %v6250 = vunpack.c.h.b16 %v4886
    %v6251 = vunpack.c.l.b16 %v4887
    %v6252 = vunpack.c.l.b16 %v4888
    %v6253 = vunpack.c.h.b16 %v4888
    %v6254 = vunpack.c.l.b16 %v4889
    %v6255 = vunpack.c.h.b16 %v4889
    %v6256 = vunpack.c.l.b16 %v4890
    %v6257 = vunpack.c.h.b16 %v4890
    %v6258 = vunpack.c.l.b16 %v4891
    %v6259 = vunpack.c.l.b16 %v4892
    %v6260 = vunpack.c.h.b16 %v4892
    %v6261 = vunpack.c.l.b16 %v4893
    %v6262 = vunpack.c.h.b16 %v4893
    %v6263 = vunpack.c.l.b16 %v4894
    %v6264 = vunpack.c.h.b16 %v4894
    %v6265 = vunpack.c.l.b16 %v4895
    %v6266 = vunpack.c.l.b16 %v4896
    %v6267 = vunpack.c.h.b16 %v4896
    %v6268 = vunpack.c.l.b16 %v4897
    %v6269 = vunpack.c.h.b16 %v4897
    %v6270 = vunpack.c.l.b16 %v4898
    %v6271 = vunpack.c.h.b16 %v4898
    %v6272 = vunpack.c.l.b16 %v4899
    %v6273 = vunpack.c.l.b16 %v4900
    %v6274 = vunpack.c.h.b16 %v4900
    %v6275 = vunpack.c.l.b16 %v4901
    %v6276 = vunpack.c.h.b16 %v4901
    %v6277 = vunpack.c.l.b16 %v4902
    %v6278 = vunpack.c.h.b16 %v4902
    %v6279 = vunpack.c.l.b16 %v4903
    %v6280 = vunpack.c.l.b16 %v4904
    %v6281 = vunpack.c.h.b16 %v4904
    %v6282 = vunpack.c.l.b16 %v4905
    %v6283 = vunpack.c.h.b16 %v4905
    %v6284 = vunpack.c.l.b16 %v4906
    %v6285 = vunpack.c.h.b16 %v4906
    %v6286 = vunpack.c.l.b16 %v4907
    %v6287 = vunpack.c.l.b16 %v4908
    %v6288 = vunpack.c.h.b16 %v4908
    %v6289 = vunpack.c.l.b16 %v4909
    %v6290 = vunpack.c.h.b16 %v4909
    %v6291 = vunpack.c.l.b16 %v4910
    %v6292 = vunpack.c.h.b16 %v4910
    %v6293 = vunpack.c.l.b16 %v4911
    %v6294 = vunpack.c.l.b16 %v4912
    %v6295 = vunpack.c.h.b16 %v4912
    %v6296 = vunpack.c.l.b16 %v4913
    %v6297 = vunpack.c.h.b16 %v4913
    %v6298 = vunpack.c.l.b16 %v4914
    %v6299 = vunpack.c.h.b16 %v4914
    %v6300 = vunpack.c.l.b16 %v4915
    %v6301 = vunpack.c.l.b16 %v4916
    %v6302 = vunpack.c.h.b16 %v4916
    %v6303 = vunpack.c.l.b16 %v4917
    %v6304 = vunpack.c.h.b16 %v4917
    %v6305 = vunpack.c.l.b16 %v4918
    %v6306 = vunpack.c.h.b16 %v4918
    %v6307 = vunpack.c.l.b16 %v4919
    %v6308 = vunpack.c.l.b16 %v4920
    %v6309 = vunpack.c.h.b16 %v4920
    %v6310 = vunpack.c.l.b16 %v4921
    %v6311 = vunpack.c.h.b16 %v4921
    %v6312 = vunpack.c.l.b16 %v4922
    %v6313 = vunpack.c.h.b16 %v4922
    %v6314 = vunpack.c.l.b16 %v4923
    %v6315 = vunpack.c.l.b16 %v4924
    %v6316 = vunpack.c.h.b16 %v4924
    %v6317 = vunpack.c.l.b16 %v4925
    %v6318 = vunpack.c.h.b16 %v4925
    %v6319 = vunpack.c.l.b16 %v4926
    %v6320 = vunpack.c.h.b16 %v4926
    %v6321 = vunpack.c.l.b16 %v4927
    %v6322 = vunpack.c.l.b16 %v4928
    %v6323 = vunpack.c.h.b16 %v4928
    %v6324 = vunpack.c.l.b16 %v4929
    %v6325 = vunpack.c.h.b16 %v4929
    %v6326 = vunpack.c.l.b16 %v4930
    %v6327 = vunpack.c.h.b16 %v4930
    %v6328 = vunpack.c.l.b16 %v4931
    %v6329 = vunpack.c.l.b16 %v4932
    %v6330 = vunpack.c.h.b16 %v4932
    %v6331 = vunpack.c.l.b16 %v4933
    %v6332 = vunpack.c.h.b16 %v4933
    %v6333 = vunpack.c.l.b16 %v4934
    %v6334 = vunpack.c.h.b16 %v4934
    %v6335 = vunpack.c.l.b16 %v4935
    %v6336 = vunpack.c.l.b16 %v4936
    %v6337 = vunpack.c.h.b16 %v4936
    %v6338 = vunpack.c.l.b16 %v4937
    %v6339 = vunpack.c.h.b16 %v4937
    %v6340 = vunpack.c.l.b16 %v4938
    %v6341 = vunpack.c.h.b16 %v4938
    %v6342 = vunpack.c.l.b16 %v4939
    %v6343 = vunpack.c.l.b16 %v4940
    %v6344 = vunpack.c.h.b16 %v4940
    %v6345 = vunpack.c.l.b16 %v4941
    %v6346 = vunpack.c.h.b16 %v4941
    %v6347 = vunpack.c.l.b16 %v4942
    %v6348 = vunpack.c.h.b16 %v4942
    %v6349 = vunpack.c.l.b16 %v4943
    %v6350 = vunpack.c.l.b16 %v4944
    %v6351 = vunpack.c.h.b16 %v4944
    %v6352 = vunpack.c.l.b16 %v4945
    %v6353 = vunpack.c.h.b16 %v4945
    %v6354 = vunpack.c.l.b16 %v4946
    %v6355 = vunpack.c.h.b16 %v4946
    %v6356 = vunpack.c.l.b16 %v4947
    %v6357 = vunpack.c.l.b16 %v4948
    %v6358 = vunpack.c.h.b16 %v4948
    %v6359 = vunpack.c.l.b16 %v4949
    %v6360 = vunpack.c.h.b16 %v4949
    %v6361 = vunpack.c.l.b16 %v4950
    %v6362 = vunpack.c.h.b16 %v4950
    %v6363 = vunpack.c.l.b16 %v4951
    %v6364 = vunpack.c.l.b16 %v4952
    %v6365 = vunpack.c.h.b16 %v4952
    %v6366 = vunpack.c.l.b16 %v4953
    %v6367 = vunpack.c.h.b16 %v4953
    %v6368 = vunpack.c.l.b16 %v4954
    %v6369 = vunpack.c.h.b16 %v4954
    %v6370 = vunpack.c.l.b16 %v4955
    %v6371 = vunpack.c.l.b16 %v4956
    %v6372 = vunpack.c.h.b16 %v4956
    %v6373 = vunpack.c.l.b16 %v4957
    %v6374 = vunpack.c.h.b16 %v4957
    %v6375 = vunpack.c.l.b16 %v4958
    %v6376 = vunpack.c.h.b16 %v4958
    %v6377 = vunpack.c.l.b16 %v4959
    %v6378 = vunpack.c.l.b16 %v4960
    %v6379 = vunpack.c.h.b16 %v4960
    %v6380 = vunpack.c.l.b16 %v4961
    %v6381 = vunpack.c.h.b16 %v4961
    %v6382 = vunpack.c.l.b16 %v4962
    %v6383 = vunpack.c.h.b16 %v4962
    %v6384 = vunpack.c.l.b16 %v4963
    %v6385 = vunpack.c.l.b16 %v4964
    %v6386 = vunpack.c.h.b16 %v4964
    %v6387 = vunpack.c.l.b16 %v4965
    %v6388 = vunpack.c.h.b16 %v4965
    %v6389 = vunpack.c.l.b16 %v4966
    %v6390 = vunpack.c.h.b16 %v4966
    %v6391 = vunpack.c.l.b16 %v4967
    %v6392 = vunpack.c.l.b16 %v4968
    %v6393 = vunpack.c.h.b16 %v4968
    %v6394 = vunpack.c.l.b16 %v4969
    %v6395 = vunpack.c.h.b16 %v4969
    %v6396 = vunpack.c.l.b16 %v4970
    %v6397 = vunpack.c.h.b16 %v4970
    %v6398 = vunpack.c.l.b16 %v4971
    %v6399 = vunpack.c.l.b16 %v4972
    %v6400 = vunpack.c.h.b16 %v4972
    %v6401 = vunpack.c.l.b16 %v4973
    %v6402 = vunpack.c.h.b16 %v4973
    %v6403 = vunpack.c.l.b16 %v4974
    %v6404 = vunpack.c.h.b16 %v4974
    %v6405 = vunpack.c.l.b16 %v4975
    %v6406 = vunpack.c.l.b16 %v4976
    %v6407 = vunpack.c.h.b16 %v4976
    %v6408 = vunpack.c.l.b16 %v4977
    %v6409 = vunpack.c.h.b16 %v4977
    %v6410 = vunpack.c.l.b16 %v4978
    %v6411 = vunpack.c.h.b16 %v4978
    %v6412 = vunpack.c.l.b16 %v4979
    %v6413 = vunpack.c.l.b16 %v4980
    %v6414 = vunpack.c.h.b16 %v4980
    %v6415 = vunpack.c.l.b16 %v4981
    %v6416 = vunpack.c.h.b16 %v4981
    %v6417 = vunpack.c.l.b16 %v4982
    %v6418 = vunpack.c.h.b16 %v4982
    %v6419 = vunpack.c.l.b16 %v4983
    %v6420 = vunpack.c.l.b16 %v4984
    %v6421 = vunpack.c.h.b16 %v4984
    %v6422 = vunpack.c.l.b16 %v4985
    %v6423 = vunpack.c.h.b16 %v4985
    %v6424 = vunpack.c.l.b16 %v4986
    %v6425 = vunpack.c.h.b16 %v4986
    %v6426 = vunpack.c.l.b16 %v4987
    %v6427 = vunpack.c.l.b16 %v4988
    %v6428 = vunpack.c.h.b16 %v4988
    %v6429 = vunpack.c.l.b16 %v4989
    %v6430 = vunpack.c.h.b16 %v4989
    %v6431 = vunpack.c.l.b16 %v4990
    %v6432 = vunpack.c.h.b16 %v4990
    %v6433 = vunpack.c.l.b16 %v4991
    %v6434 = vunpack.c.l.b16 %v4992
    %v6435 = vunpack.c.h.b16 %v4992
    %v6436 = vunpack.c.l.b16 %v4993
    %v6437 = vunpack.c.h.b16 %v4993
    %v6438 = vunpack.c.l.b16 %v4994
    %v6439 = vunpack.c.h.b16 %v4994
    %v6440 = vunpack.c.l.b16 %v4995
    %v6441 = vpack.c.b16 %v5552, %v5545
    %v6442 = vpack.c.b16 %v5553, %v5546
    %v6443 = vpack.c.b16 %v5554, %v5547
    %v6444 = vpack.c.b16 %v5555, %v5548
    %v6445 = vpack.c.b16 %v5556, %v5549
    %v6446 = vpack.c.b16 %v5557, %v5550
    %v6447 = vpack.c.b16 %v5558, %v5551
    %v6448 = vpack.c.b16 %v5566, %v5559
    %v6449 = vpack.c.b16 %v5567, %v5560
    %v6450 = vpack.c.b16 %v5568, %v5561
    %v6451 = vpack.c.b16 %v5569, %v5562
    %v6452 = vpack.c.b16 %v5570, %v5563
    %v6453 = vpack.c.b16 %v5571, %v5564
    %v6454 = vpack.c.b16 %v5572, %v5565
    %v6455 = vpack.c.b16 %v5580, %v5573
    %v6456 = vpack.c.b16 %v5581, %v5574
    %v6457 = vpack.c.b16 %v5582, %v5575
    %v6458 = vpack.c.b16 %v5583, %v5576
    %v6459 = vpack.c.b16 %v5584, %v5577
    %v6460 = vpack.c.b16 %v5585, %v5578
    %v6461 = vpack.c.b16 %v5586, %v5579
    %v6462 = vpack.c.b16 %v5594, %v5587
    %v6463 = vpack.c.b16 %v5595, %v5588
    %v6464 = vpack.c.b16 %v5596, %v5589
    %v6465 = vpack.c.b16 %v5597, %v5590
    %v6466 = vpack.c.b16 %v5598, %v5591
    %v6467 = vpack.c.b16 %v5599, %v5592
    %v6468 = vpack.c.b16 %v5600, %v5593
    %v6469 = vpack.c.b16 %v5608, %v5601
    %v6470 = vpack.c.b16 %v5609, %v5602
    %v6471 = vpack.c.b16 %v5610, %v5603
    %v6472 = vpack.c.b16 %v5611, %v5604
    %v6473 = vpack.c.b16 %v5612, %v5605
    %v6474 = vpack.c.b16 %v5613, %v5606
    %v6475 = vpack.c.b16 %v5614, %v5607
    %v6476 = vpack.c.b16 %v5622, %v5615
    %v6477 = vpack.c.b16 %v5623, %v5616
    %v6478 = vpack.c.b16 %v5624, %v5617
    %v6479 = vpack.c.b16 %v5625, %v5618
    %v6480 = vpack.c.b16 %v5626, %v5619
    %v6481 = vpack.c.b16 %v5627, %v5620
    %v6482 = vpack.c.b16 %v5628, %v5621
    %v6483 = vpack.c.b16 %v5636, %v5629
    %v6484 = vpack.c.b16 %v5637, %v5630
    %v6485 = vpack.c.b16 %v5638, %v5631
    %v6486 = vpack.c.b16 %v5639, %v5632
    %v6487 = vpack.c.b16 %v5640, %v5633
    %v6488 = vpack.c.b16 %v5641, %v5634
    %v6489 = vpack.c.b16 %v5642, %v5635
    %v6490 = vpack.c.b16 %v5650, %v5643
    %v6491 = vpack.c.b16 %v5651, %v5644
    %v6492 = vpack.c.b16 %v5652, %v5645
    %v6493 = vpack.c.b16 %v5653, %v5646
    %v6494 = vpack.c.b16 %v5654, %v5647
    %v6495 = vpack.c.b16 %v5655, %v5648
    %v6496 = vpack.c.b16 %v5656, %v5649
    %v6497 = vpack.c.b16 %v5664, %v5657
    %v6498 = vpack.c.b16 %v5665, %v5658
    %v6499 = vpack.c.b16 %v5666, %v5659
    %v6500 = vpack.c.b16 %v5667, %v5660
    %v6501 = vpack.c.b16 %v5668, %v5661
    %v6502 = vpack.c.b16 %v5669, %v5662
    %v6503 = vpack.c.b16 %v5670, %v5663
    %v6504 = vpack.c.b16 %v5678, %v5671
    %v6505 = vpack.c.b16 %v5679, %v5672
    %v6506 = vpack.c.b16 %v5680, %v5673
    %v6507 = vpack.c.b16 %v5681, %v5674
    %v6508 = vpack.c.b16 %v5682, %v5675
    %v6509 = vpack.c.b16 %v5683, %v5676
    %v6510 = vpack.c.b16 %v5684, %v5677
    %v6511 = vpack.c.b16 %v5692, %v5685
    %v6512 = vpack.c.b16 %v5693, %v5686
    %v6513 = vpack.c.b16 %v5694, %v5687
    %v6514 = vpack.c.b16 %v5695, %v5688
    %v6515 = vpack.c.b16 %v5696, %v5689
    %v6516 = vpack.c.b16 %v5697, %v5690
    %v6517 = vpack.c.b16 %v5698, %v5691
    %v6518 = vpack.c.b16 %v5706, %v5699
    %v6519 = vpack.c.b16 %v5707, %v5700
    %v6520 = vpack.c.b16 %v5708, %v5701
    %v6521 = vpack.c.b16 %v5709, %v5702
    %v6522 = vpack.c.b16 %v5710, %v5703
    %v6523 = vpack.c.b16 %v5711, %v5704
    %v6524 = vpack.c.b16 %v5712, %v5705
    %v6525 = vpack.c.b16 %v5720, %v5713
    %v6526 = vpack.c.b16 %v5721, %v5714
    %v6527 = vpack.c.b16 %v5722, %v5715
    %v6528 = vpack.c.b16 %v5723, %v5716
    %v6529 = vpack.c.b16 %v5724, %v5717
    %v6530 = vpack.c.b16 %v5725, %v5718
    %v6531 = vpack.c.b16 %v5726, %v5719
    %v6532 = vpack.c.b16 %v5734, %v5727
    %v6533 = vpack.c.b16 %v5735, %v5728
    %v6534 = vpack.c.b16 %v5736, %v5729
    %v6535 = vpack.c.b16 %v5737, %v5730
    %v6536 = vpack.c.b16 %v5738, %v5731
    %v6537 = vpack.c.b16 %v5739, %v5732
    %v6538 = vpack.c.b16 %v5740, %v5733
    %v6539 = vpack.c.b16 %v5748, %v5741
    %v6540 = vpack.c.b16 %v5749, %v5742
    %v6541 = vpack.c.b16 %v5750, %v5743
    %v6542 = vpack.c.b16 %v5751, %v5744
    %v6543 = vpack.c.b16 %v5752, %v5745
    %v6544 = vpack.c.b16 %v5753, %v5746
    %v6545 = vpack.c.b16 %v5754, %v5747
    %v6546 = vpack.c.b16 %v5762, %v5755
    %v6547 = vpack.c.b16 %v5763, %v5756
    %v6548 = vpack.c.b16 %v5764, %v5757
    %v6549 = vpack.c.b16 %v5765, %v5758
    %v6550 = vpack.c.b16 %v5766, %v5759
    %v6551 = vpack.c.b16 %v5767, %v5760
    %v6552 = vpack.c.b16 %v5768, %v5761
    %v6553 = vpack.c.b16 %v5776, %v5769
    %v6554 = vpack.c.b16 %v5777, %v5770
    %v6555 = vpack.c.b16 %v5778, %v5771
    %v6556 = vpack.c.b16 %v5779, %v5772
    %v6557 = vpack.c.b16 %v5780, %v5773
    %v6558 = vpack.c.b16 %v5781, %v5774
    %v6559 = vpack.c.b16 %v5782, %v5775
    %v6560 = vpack.c.b16 %v5790, %v5783
    %v6561 = vpack.c.b16 %v5791, %v5784
    %v6562 = vpack.c.b16 %v5792, %v5785
    %v6563 = vpack.c.b16 %v5793, %v5786
    %v6564 = vpack.c.b16 %v5794, %v5787
    %v6565 = vpack.c.b16 %v5795, %v5788
    %v6566 = vpack.c.b16 %v5796, %v5789
    %v6567 = vpack.c.b16 %v5804, %v5797
    %v6568 = vpack.c.b16 %v5805, %v5798
    %v6569 = vpack.c.b16 %v5806, %v5799
    %v6570 = vpack.c.b16 %v5807, %v5800
    %v6571 = vpack.c.b16 %v5808, %v5801
    %v6572 = vpack.c.b16 %v5809, %v5802
    %v6573 = vpack.c.b16 %v5810, %v5803
    %v6574 = vpack.c.b16 %v5818, %v5811
    %v6575 = vpack.c.b16 %v5819, %v5812
    %v6576 = vpack.c.b16 %v5820, %v5813
    %v6577 = vpack.c.b16 %v5821, %v5814
    %v6578 = vpack.c.b16 %v5822, %v5815
    %v6579 = vpack.c.b16 %v5823, %v5816
    %v6580 = vpack.c.b16 %v5824, %v5817
    %v6581 = vpack.c.b16 %v5832, %v5825
    %v6582 = vpack.c.b16 %v5833, %v5826
    %v6583 = vpack.c.b16 %v5834, %v5827
    %v6584 = vpack.c.b16 %v5835, %v5828
    %v6585 = vpack.c.b16 %v5836, %v5829
    %v6586 = vpack.c.b16 %v5837, %v5830
    %v6587 = vpack.c.b16 %v5838, %v5831
    %v6588 = vpack.c.b16 %v5846, %v5839
    %v6589 = vpack.c.b16 %v5847, %v5840
    %v6590 = vpack.c.b16 %v5848, %v5841
    %v6591 = vpack.c.b16 %v5849, %v5842
    %v6592 = vpack.c.b16 %v5850, %v5843
    %v6593 = vpack.c.b16 %v5851, %v5844
    %v6594 = vpack.c.b16 %v5852, %v5845
    %v6595 = vpack.c.b16 %v5860, %v5853
    %v6596 = vpack.c.b16 %v5861, %v5854
    %v6597 = vpack.c.b16 %v5862, %v5855
    %v6598 = vpack.c.b16 %v5863, %v5856
    %v6599 = vpack.c.b16 %v5864, %v5857
    %v6600 = vpack.c.b16 %v5865, %v5858
    %v6601 = vpack.c.b16 %v5866, %v5859
    %v6602 = vpack.c.b16 %v5874, %v5867
    %v6603 = vpack.c.b16 %v5875, %v5868
    %v6604 = vpack.c.b16 %v5876, %v5869
    %v6605 = vpack.c.b16 %v5877, %v5870
    %v6606 = vpack.c.b16 %v5878, %v5871
    %v6607 = vpack.c.b16 %v5879, %v5872
    %v6608 = vpack.c.b16 %v5880, %v5873
    %v6609 = vpack.c.b16 %v5888, %v5881
    %v6610 = vpack.c.b16 %v5889, %v5882
    %v6611 = vpack.c.b16 %v5890, %v5883
    %v6612 = vpack.c.b16 %v5891, %v5884
    %v6613 = vpack.c.b16 %v5892, %v5885
    %v6614 = vpack.c.b16 %v5893, %v5886
    %v6615 = vpack.c.b16 %v5894, %v5887
    %v6616 = vpack.c.b16 %v5902, %v5895
    %v6617 = vpack.c.b16 %v5903, %v5896
    %v6618 = vpack.c.b16 %v5904, %v5897
    %v6619 = vpack.c.b16 %v5905, %v5898
    %v6620 = vpack.c.b16 %v5906, %v5899
    %v6621 = vpack.c.b16 %v5907, %v5900
    %v6622 = vpack.c.b16 %v5908, %v5901
    %v6623 = vpack.c.b16 %v5916, %v5909
    %v6624 = vpack.c.b16 %v5917, %v5910
    %v6625 = vpack.c.b16 %v5918, %v5911
    %v6626 = vpack.c.b16 %v5919, %v5912
    %v6627 = vpack.c.b16 %v5920, %v5913
    %v6628 = vpack.c.b16 %v5921, %v5914
    %v6629 = vpack.c.b16 %v5922, %v5915
    %v6630 = vpack.c.b16 %v5930, %v5923
    %v6631 = vpack.c.b16 %v5931, %v5924
    %v6632 = vpack.c.b16 %v5932, %v5925
    %v6633 = vpack.c.b16 %v5933, %v5926
    %v6634 = vpack.c.b16 %v5934, %v5927
    %v6635 = vpack.c.b16 %v5935, %v5928
    %v6636 = vpack.c.b16 %v5936, %v5929
    %v6637 = vpack.c.b16 %v5944, %v5937
    %v6638 = vpack.c.b16 %v5945, %v5938
    %v6639 = vpack.c.b16 %v5946, %v5939
    %v6640 = vpack.c.b16 %v5947, %v5940
    %v6641 = vpack.c.b16 %v5948, %v5941
    %v6642 = vpack.c.b16 %v5949, %v5942
    %v6643 = vpack.c.b16 %v5950, %v5943
    %v6644 = vpack.c.b16 %v5958, %v5951
    %v6645 = vpack.c.b16 %v5959, %v5952
    %v6646 = vpack.c.b16 %v5960, %v5953
    %v6647 = vpack.c.b16 %v5961, %v5954
    %v6648 = vpack.c.b16 %v5962, %v5955
    %v6649 = vpack.c.b16 %v5963, %v5956
    %v6650 = vpack.c.b16 %v5964, %v5957
    %v6651 = vpack.c.b16 %v5972, %v5965
    %v6652 = vpack.c.b16 %v5973, %v5966
    %v6653 = vpack.c.b16 %v5974, %v5967
    %v6654 = vpack.c.b16 %v5975, %v5968
    %v6655 = vpack.c.b16 %v5976, %v5969
    %v6656 = vpack.c.b16 %v5977, %v5970
    %v6657 = vpack.c.b16 %v5978, %v5971
    %v6658 = vpack.c.b16 %v5986, %v5979
    %v6659 = vpack.c.b16 %v5987, %v5980
    %v6660 = vpack.c.b16 %v5988, %v5981
    %v6661 = vpack.c.b16 %v5989, %v5982
    %v6662 = vpack.c.b16 %v5990, %v5983
    %v6663 = vpack.c.b16 %v5991, %v5984
    %v6664 = vpack.c.b16 %v5992, %v5985
    %v6665 = vpack.c.b16 %v6000, %v5993
    %v6666 = vpack.c.b16 %v6001, %v5994
    %v6667 = vpack.c.b16 %v6002, %v5995
    %v6668 = vpack.c.b16 %v6003, %v5996
    %v6669 = vpack.c.b16 %v6004, %v5997
    %v6670 = vpack.c.b16 %v6005, %v5998
    %v6671 = vpack.c.b16 %v6006, %v5999
    %v6672 = vpack.c.b16 %v6014, %v6007
    %v6673 = vpack.c.b16 %v6015, %v6008
    %v6674 = vpack.c.b16 %v6016, %v6009
    %v6675 = vpack.c.b16 %v6017, %v6010
    %v6676 = vpack.c.b16 %v6018, %v6011
    %v6677 = vpack.c.b16 %v6019, %v6012
    %v6678 = vpack.c.b16 %v6020, %v6013
    %v6679 = vpack.c.b16 %v6028, %v6021
    %v6680 = vpack.c.b16 %v6029, %v6022
    %v6681 = vpack.c.b16 %v6030, %v6023
    %v6682 = vpack.c.b16 %v6031, %v6024
    %v6683 = vpack.c.b16 %v6032, %v6025
    %v6684 = vpack.c.b16 %v6033, %v6026
    %v6685 = vpack.c.b16 %v6034, %v6027
    %v6686 = vpack.c.b16 %v6042, %v6035
    %v6687 = vpack.c.b16 %v6043, %v6036
    %v6688 = vpack.c.b16 %v6044, %v6037
    %v6689 = vpack.c.b16 %v6045, %v6038
    %v6690 = vpack.c.b16 %v6046, %v6039
    %v6691 = vpack.c.b16 %v6047, %v6040
    %v6692 = vpack.c.b16 %v6048, %v6041
    %v6693 = vpack.c.b16 %v6056, %v6049
    %v6694 = vpack.c.b16 %v6057, %v6050
    %v6695 = vpack.c.b16 %v6058, %v6051
    %v6696 = vpack.c.b16 %v6059, %v6052
    %v6697 = vpack.c.b16 %v6060, %v6053
    %v6698 = vpack.c.b16 %v6061, %v6054
    %v6699 = vpack.c.b16 %v6062, %v6055
    %v6700 = vpack.c.b16 %v6070, %v6063
    %v6701 = vpack.c.b16 %v6071, %v6064
    %v6702 = vpack.c.b16 %v6072, %v6065
    %v6703 = vpack.c.b16 %v6073, %v6066
    %v6704 = vpack.c.b16 %v6074, %v6067
    %v6705 = vpack.c.b16 %v6075, %v6068
    %v6706 = vpack.c.b16 %v6076, %v6069
    %v6707 = vpack.c.b16 %v6084, %v6077
    %v6708 = vpack.c.b16 %v6085, %v6078
    %v6709 = vpack.c.b16 %v6086, %v6079
    %v6710 = vpack.c.b16 %v6087, %v6080
    %v6711 = vpack.c.b16 %v6088, %v6081
    %v6712 = vpack.c.b16 %v6089, %v6082
    %v6713 = vpack.c.b16 %v6090, %v6083
    %v6714 = vpack.c.b16 %v6098, %v6091
    %v6715 = vpack.c.b16 %v6099, %v6092
    %v6716 = vpack.c.b16 %v6100, %v6093
    %v6717 = vpack.c.b16 %v6101, %v6094
    %v6718 = vpack.c.b16 %v6102, %v6095
    %v6719 = vpack.c.b16 %v6103, %v6096
    %v6720 = vpack.c.b16 %v6104, %v6097
    %v6721 = vpack.c.b16 %v6112, %v6105
    %v6722 = vpack.c.b16 %v6113, %v6106
    %v6723 = vpack.c.b16 %v6114, %v6107
    %v6724 = vpack.c.b16 %v6115, %v6108
    %v6725 = vpack.c.b16 %v6116, %v6109
    %v6726 = vpack.c.b16 %v6117, %v6110
    %v6727 = vpack.c.b16 %v6118, %v6111
    %v6728 = vpack.c.b16 %v6126, %v6119
    %v6729 = vpack.c.b16 %v6127, %v6120
    %v6730 = vpack.c.b16 %v6128, %v6121
    %v6731 = vpack.c.b16 %v6129, %v6122
    %v6732 = vpack.c.b16 %v6130, %v6123
    %v6733 = vpack.c.b16 %v6131, %v6124
    %v6734 = vpack.c.b16 %v6132, %v6125
    %v6735 = vpack.c.b16 %v6140, %v6133
    %v6736 = vpack.c.b16 %v6141, %v6134
    %v6737 = vpack.c.b16 %v6142, %v6135
    %v6738 = vpack.c.b16 %v6143, %v6136
    %v6739 = vpack.c.b16 %v6144, %v6137
    %v6740 = vpack.c.b16 %v6145, %v6138
    %v6741 = vpack.c.b16 %v6146, %v6139
    %v6742 = vpack.c.b16 %v6154, %v6147
    %v6743 = vpack.c.b16 %v6155, %v6148
    %v6744 = vpack.c.b16 %v6156, %v6149
    %v6745 = vpack.c.b16 %v6157, %v6150
    %v6746 = vpack.c.b16 %v6158, %v6151
    %v6747 = vpack.c.b16 %v6159, %v6152
    %v6748 = vpack.c.b16 %v6160, %v6153
    %v6749 = vpack.c.b16 %v6168, %v6161
    %v6750 = vpack.c.b16 %v6169, %v6162
    %v6751 = vpack.c.b16 %v6170, %v6163
    %v6752 = vpack.c.b16 %v6171, %v6164
    %v6753 = vpack.c.b16 %v6172, %v6165
    %v6754 = vpack.c.b16 %v6173, %v6166
    %v6755 = vpack.c.b16 %v6174, %v6167
    %v6756 = vpack.c.b16 %v6182, %v6175
    %v6757 = vpack.c.b16 %v6183, %v6176
    %v6758 = vpack.c.b16 %v6184, %v6177
    %v6759 = vpack.c.b16 %v6185, %v6178
    %v6760 = vpack.c.b16 %v6186, %v6179
    %v6761 = vpack.c.b16 %v6187, %v6180
    %v6762 = vpack.c.b16 %v6188, %v6181
    %v6763 = vpack.c.b16 %v6196, %v6189
    %v6764 = vpack.c.b16 %v6197, %v6190
    %v6765 = vpack.c.b16 %v6198, %v6191
    %v6766 = vpack.c.b16 %v6199, %v6192
    %v6767 = vpack.c.b16 %v6200, %v6193
    %v6768 = vpack.c.b16 %v6201, %v6194
    %v6769 = vpack.c.b16 %v6202, %v6195
    %v6770 = vpack.c.b16 %v6210, %v6203
    %v6771 = vpack.c.b16 %v6211, %v6204
    %v6772 = vpack.c.b16 %v6212, %v6205
    %v6773 = vpack.c.b16 %v6213, %v6206
    %v6774 = vpack.c.b16 %v6214, %v6207
    %v6775 = vpack.c.b16 %v6215, %v6208
    %v6776 = vpack.c.b16 %v6216, %v6209
    %v6777 = vpack.c.b16 %v6224, %v6217
    %v6778 = vpack.c.b16 %v6225, %v6218
    %v6779 = vpack.c.b16 %v6226, %v6219
    %v6780 = vpack.c.b16 %v6227, %v6220
    %v6781 = vpack.c.b16 %v6228, %v6221
    %v6782 = vpack.c.b16 %v6229, %v6222
    %v6783 = vpack.c.b16 %v6230, %v6223
    %v6784 = vpack.c.b16 %v6238, %v6231
    %v6785 = vpack.c.b16 %v6239, %v6232
    %v6786 = vpack.c.b16 %v6240, %v6233
    %v6787 = vpack.c.b16 %v6241, %v6234
    %v6788 = vpack.c.b16 %v6242, %v6235
    %v6789 = vpack.c.b16 %v6243, %v6236
    %v6790 = vpack.c.b16 %v6244, %v6237
    %v6791 = vpack.c.b16 %v6252, %v6245
    %v6792 = vpack.c.b16 %v6253, %v6246
    %v6793 = vpack.c.b16 %v6254, %v6247
    %v6794 = vpack.c.b16 %v6255, %v6248
    %v6795 = vpack.c.b16 %v6256, %v6249
    %v6796 = vpack.c.b16 %v6257, %v6250
    %v6797 = vpack.c.b16 %v6258, %v6251
    %v6798 = vpack.c.b16 %v6266, %v6259
    %v6799 = vpack.c.b16 %v6267, %v6260
    %v6800 = vpack.c.b16 %v6268, %v6261
    %v6801 = vpack.c.b16 %v6269, %v6262
    %v6802 = vpack.c.b16 %v6270, %v6263
    %v6803 = vpack.c.b16 %v6271, %v6264
    %v6804 = vpack.c.b16 %v6272, %v6265
    %v6805 = vpack.c.b16 %v6280, %v6273
    %v6806 = vpack.c.b16 %v6281, %v6274
    %v6807 = vpack.c.b16 %v6282, %v6275
    %v6808 = vpack.c.b16 %v6283, %v6276
    %v6809 = vpack.c.b16 %v6284, %v6277
    %v6810 = vpack.c.b16 %v6285, %v6278
    %v6811 = vpack.c.b16 %v6286, %v6279
    %v6812 = vpack.c.b16 %v6294, %v6287
    %v6813 = vpack.c.b16 %v6295, %v6288
    %v6814 = vpack.c.b16 %v6296, %v6289
    %v6815 = vpack.c.b16 %v6297, %v6290
    %v6816 = vpack.c.b16 %v6298, %v6291
    %v6817 = vpack.c.b16 %v6299, %v6292
    %v6818 = vpack.c.b16 %v6300, %v6293
    %v6819 = vpack.c.b16 %v6308, %v6301
    %v6820 = vpack.c.b16 %v6309, %v6302
    %v6821 = vpack.c.b16 %v6310, %v6303
    %v6822 = vpack.c.b16 %v6311, %v6304
    %v6823 = vpack.c.b16 %v6312, %v6305
    %v6824 = vpack.c.b16 %v6313, %v6306
    %v6825 = vpack.c.b16 %v6314, %v6307
    %v6826 = vpack.c.b16 %v6322, %v6315
    %v6827 = vpack.c.b16 %v6323, %v6316
    %v6828 = vpack.c.b16 %v6324, %v6317
    %v6829 = vpack.c.b16 %v6325, %v6318
    %v6830 = vpack.c.b16 %v6326, %v6319
    %v6831 = vpack.c.b16 %v6327, %v6320
    %v6832 = vpack.c.b16 %v6328, %v6321
    %v6833 = vpack.c.b16 %v6336, %v6329
    %v6834 = vpack.c.b16 %v6337, %v6330
    %v6835 = vpack.c.b16 %v6338, %v6331
    %v6836 = vpack.c.b16 %v6339, %v6332
    %v6837 = vpack.c.b16 %v6340, %v6333
    %v6838 = vpack.c.b16 %v6341, %v6334
    %v6839 = vpack.c.b16 %v6342, %v6335
    %v6840 = vpack.c.b16 %v6350, %v6343
    %v6841 = vpack.c.b16 %v6351, %v6344
    %v6842 = vpack.c.b16 %v6352, %v6345
    %v6843 = vpack.c.b16 %v6353, %v6346
    %v6844 = vpack.c.b16 %v6354, %v6347
    %v6845 = vpack.c.b16 %v6355, %v6348
    %v6846 = vpack.c.b16 %v6356, %v6349
    %v6847 = vpack.c.b16 %v6364, %v6357
    %v6848 = vpack.c.b16 %v6365, %v6358
    %v6849 = vpack.c.b16 %v6366, %v6359
    %v6850 = vpack.c.b16 %v6367, %v6360
    %v6851 = vpack.c.b16 %v6368, %v6361
    %v6852 = vpack.c.b16 %v6369, %v6362
    %v6853 = vpack.c.b16 %v6370, %v6363
    %v6854 = vpack.c.b16 %v6378, %v6371
    %v6855 = vpack.c.b16 %v6379, %v6372
    %v6856 = vpack.c.b16 %v6380, %v6373
    %v6857 = vpack.c.b16 %v6381, %v6374
    %v6858 = vpack.c.b16 %v6382, %v6375
    %v6859 = vpack.c.b16 %v6383, %v6376
    %v6860 = vpack.c.b16 %v6384, %v6377
    %v6861 = vpack.c.b16 %v6392, %v6385
    %v6862 = vpack.c.b16 %v6393, %v6386
    %v6863 = vpack.c.b16 %v6394, %v6387
    %v6864 = vpack.c.b16 %v6395, %v6388
    %v6865 = vpack.c.b16 %v6396, %v6389
    %v6866 = vpack.c.b16 %v6397, %v6390
    %v6867 = vpack.c.b16 %v6398, %v6391
    %v6868 = vpack.c.b16 %v6406, %v6399
    %v6869 = vpack.c.b16 %v6407, %v6400
    %v6870 = vpack.c.b16 %v6408, %v6401
    %v6871 = vpack.c.b16 %v6409, %v6402
    %v6872 = vpack.c.b16 %v6410, %v6403
    %v6873 = vpack.c.b16 %v6411, %v6404
    %v6874 = vpack.c.b16 %v6412, %v6405
    %v6875 = vpack.c.b16 %v6420, %v6413
    %v6876 = vpack.c.b16 %v6421, %v6414
    %v6877 = vpack.c.b16 %v6422, %v6415
    %v6878 = vpack.c.b16 %v6423, %v6416
    %v6879 = vpack.c.b16 %v6424, %v6417
    %v6880 = vpack.c.b16 %v6425, %v6418
    %v6881 = vpack.c.b16 %v6426, %v6419
    %v6882 = vpack.c.b16 %v6434, %v6427
    %v6883 = vpack.c.b16 %v6435, %v6428
    %v6884 = vpack.c.b16 %v6436, %v6429
    %v6885 = vpack.c.b16 %v6437, %v6430
    %v6886 = vpack.c.b16 %v6438, %v6431
    %v6887 = vpack.c.b16 %v6439, %v6432
    %v6888 = vpack.c.b16 %v6440, %v6433
    %7337 = vmatprep.subr.bf16.mxu0 %v6442
    %7338 = vmatpush1.bf16.msra.mxu0 %v6441
    %7339 = vmatprep.subr.bf16.mxu0 %v6449
    %7340 = vmatpush1.bf16.msra.mxu0 %v6448
    %7341 = vmatprep.subr.bf16.mxu0 %v6456
    %7342 = vmatpush1.bf16.msra.mxu0 %v6455
    %7343 = vmatprep.subr.bf16.mxu0 %v6463
    %7344 = vmatpush1.bf16.msra.mxu0 %v6462
    %7345 = vmatprep.subr.bf16.mxu0 %v6470
    %7346 = vmatpush1.bf16.msra.mxu0 %v6469
    %7347 = vmatprep.subr.bf16.mxu0 %v6477
    %7348 = vmatpush1.bf16.msra.mxu0 %v6476
    %7349 = vmatprep.subr.bf16.mxu0 %v6484
    %7350 = vmatpush1.bf16.msra.mxu0 %v6483
    %7351 = vmatprep.subr.bf16.mxu0 %v6491
    %7352 = vmatpush1.bf16.msra.mxu0 %v6490
    %7353 = vmatprep.subr.bf16.mxu0 %v6498
    %7354 = vmatpush1.bf16.msra.mxu0 %v6497
    %7355 = vmatprep.subr.bf16.mxu0 %v6505
    %7356 = vmatpush1.bf16.msra.mxu0 %v6504
    %7357 = vmatprep.subr.bf16.mxu0 %v6512
    %7358 = vmatpush1.bf16.msra.mxu0 %v6511
    %7359 = vmatprep.subr.bf16.mxu0 %v6519
    %7360 = vmatpush1.bf16.msra.mxu0 %v6518
    %7361 = vmatprep.subr.bf16.mxu0 %v6526
    %7362 = vmatpush1.bf16.msra.mxu0 %v6525
    %7363 = vmatprep.subr.bf16.mxu0 %v6533
    %7364 = vmatpush1.bf16.msra.mxu0 %v6532
    %7365 = vmatprep.subr.bf16.mxu0 %v6540
    %7366 = vmatpush1.bf16.msra.mxu0 %v6539
    %7367 = vmatprep.subr.bf16.mxu0 %v6547
    %7368 = vmatpush1.bf16.msra.mxu0 %v6546
    %7369 = vmatprep.mubr.bf16.mxu0 %v4477
    %7370 = vmatmul.mubr.bf16.gmra.mrb[0].mxu0 %v4476
    %v7371 = vpop.f32.mrb[0].mxu0
    %v7372 = vadd.f32 %v5001, %v7371
    %v7373 = vpop.f32.mrb[0].mxu0
    %v7374 = vadd.f32 %v5005, %v7373
    %v7375 = vpop.f32.mrb[0].mxu0
    %v7376 = vadd.f32 %v5001, %v7375
    %v7377 = vpop.f32.mrb[0].mxu0
    %v7378 = vadd.f32 %v5005, %v7377
    %7379 = vdwg.mxu0
    %7380 = vmatprep.subr.bf16.mxu0 %v6554
    %7381 = vmatpush1.bf16.msra.mxu0 %v6553
    %7382 = vmatprep.subr.bf16.mxu0 %v6561
    %7383 = vmatpush1.bf16.msra.mxu0 %v6560
    %7384 = vmatprep.subr.bf16.mxu0 %v6568
    %7385 = vmatpush1.bf16.msra.mxu0 %v6567
    %7386 = vmatprep.subr.bf16.mxu0 %v6575
    %7387 = vmatpush1.bf16.msra.mxu0 %v6574
    %7388 = vmatprep.subr.bf16.mxu0 %v6582
    %7389 = vmatpush1.bf16.msra.mxu0 %v6581
    %7390 = vmatprep.subr.bf16.mxu0 %v6589
    %7391 = vmatpush1.bf16.msra.mxu0 %v6588
    %7392 = vmatprep.subr.bf16.mxu0 %v6596
    %7393 = vmatpush1.bf16.msra.mxu0 %v6595
    %7394 = vmatprep.subr.bf16.mxu0 %v6603
    %7395 = vmatpush1.bf16.msra.mxu0 %v6602
    %7396 = vmatprep.subr.bf16.mxu0 %v6610
    %7397 = vmatpush1.bf16.msra.mxu0 %v6609
    %7398 = vmatprep.subr.bf16.mxu0 %v6617
    %7399 = vmatpush1.bf16.msra.mxu0 %v6616
    %7400 = vmatprep.subr.bf16.mxu0 %v6624
    %7401 = vmatpush1.bf16.msra.mxu0 %v6623
    %7402 = vmatprep.subr.bf16.mxu0 %v6631
    %7403 = vmatpush1.bf16.msra.mxu0 %v6630
    %7404 = vmatprep.subr.bf16.mxu0 %v6638
    %7405 = vmatpush1.bf16.msra.mxu0 %v6637
    %7406 = vmatprep.subr.bf16.mxu0 %v6645
    %7407 = vmatpush1.bf16.msra.mxu0 %v6644
    %7408 = vmatprep.subr.bf16.mxu0 %v6652
    %7409 = vmatpush1.bf16.msra.mxu0 %v6651
    %7410 = vmatprep.subr.bf16.mxu0 %v6659
    %7411 = vmatpush1.bf16.msra.mxu0 %v6658
    %7412 = vmatprep.mubr.bf16.mxu0 %v4479
    %7413 = vmatmul.mubr.bf16.gmra.mrb[0].mxu0 %v4478
    %v7414 = vpop.f32.mrb[0].mxu0
    %v7415 = vadd.f32 %v7372, %v7414
    %v7416 = vpop.f32.mrb[0].mxu0
    %v7417 = vadd.f32 %v7374, %v7416
    %v7418 = vpop.f32.mrb[0].mxu0
    %v7419 = vadd.f32 %v7376, %v7418
    %v7420 = vpop.f32.mrb[0].mxu0
    %v7421 = vadd.f32 %v7378, %v7420
    %7422 = vdwg.mxu0
    %7423 = vmatprep.subr.bf16.mxu0 %v6666
    %7424 = vmatpush1.bf16.msra.mxu0 %v6665
    %7425 = vmatprep.subr.bf16.mxu0 %v6673
    %7426 = vmatpush1.bf16.msra.mxu0 %v6672
    %7427 = vmatprep.subr.bf16.mxu0 %v6680
    %7428 = vmatpush1.bf16.msra.mxu0 %v6679
    %7429 = vmatprep.subr.bf16.mxu0 %v6687
    %7430 = vmatpush1.bf16.msra.mxu0 %v6686
    %7431 = vmatprep.subr.bf16.mxu0 %v6694
    %7432 = vmatpush1.bf16.msra.mxu0 %v6693
    %7433 = vmatprep.subr.bf16.mxu0 %v6701
    %7434 = vmatpush1.bf16.msra.mxu0 %v6700
    %7435 = vmatprep.subr.bf16.mxu0 %v6708
    %7436 = vmatpush1.bf16.msra.mxu0 %v6707
    %7437 = vmatprep.subr.bf16.mxu0 %v6715
    %7438 = vmatpush1.bf16.msra.mxu0 %v6714
    %7439 = vmatprep.subr.bf16.mxu0 %v6722
    %7440 = vmatpush1.bf16.msra.mxu0 %v6721
    %7441 = vmatprep.subr.bf16.mxu0 %v6729
    %7442 = vmatpush1.bf16.msra.mxu0 %v6728
    %7443 = vmatprep.subr.bf16.mxu0 %v6736
    %7444 = vmatpush1.bf16.msra.mxu0 %v6735
    %7445 = vmatprep.subr.bf16.mxu0 %v6743
    %7446 = vmatpush1.bf16.msra.mxu0 %v6742
    %7447 = vmatprep.subr.bf16.mxu0 %v6750
    %7448 = vmatpush1.bf16.msra.mxu0 %v6749
    %7449 = vmatprep.subr.bf16.mxu0 %v6757
    %7450 = vmatpush1.bf16.msra.mxu0 %v6756
    %7451 = vmatprep.subr.bf16.mxu0 %v6764
    %7452 = vmatpush1.bf16.msra.mxu0 %v6763
    %7453 = vmatprep.subr.bf16.mxu0 %v6771
    %7454 = vmatpush1.bf16.msra.mxu0 %v6770
    %7455 = vmatprep.mubr.bf16.mxu0 %v4481
    %7456 = vmatmul.mubr.bf16.gmra.mrb[0].mxu0 %v4480
    %v7457 = vpop.f32.mrb[0].mxu0
    %v7458 = vadd.f32 %v7415, %v7457
    %v7459 = vpop.f32.mrb[0].mxu0
    %v7460 = vadd.f32 %v7417, %v7459
    %v7461 = vpop.f32.mrb[0].mxu0
    %v7462 = vadd.f32 %v7419, %v7461
    %v7463 = vpop.f32.mrb[0].mxu0
    %v7464 = vadd.f32 %v7421, %v7463
    %7465 = vdwg.mxu0
    %7466 = vmatprep.subr.bf16.mxu0 %v6778
    %7467 = vmatpush1.bf16.msra.mxu0 %v6777
    %7468 = vmatprep.subr.bf16.mxu0 %v6785
    %7469 = vmatpush1.bf16.msra.mxu0 %v6784
    %7470 = vmatprep.subr.bf16.mxu0 %v6792
    %7471 = vmatpush1.bf16.msra.mxu0 %v6791
    %7472 = vmatprep.subr.bf16.mxu0 %v6799
    %7473 = vmatpush1.bf16.msra.mxu0 %v6798
    %7474 = vmatprep.subr.bf16.mxu0 %v6806
    %7475 = vmatpush1.bf16.msra.mxu0 %v6805
    %7476 = vmatprep.subr.bf16.mxu0 %v6813
    %7477 = vmatpush1.bf16.msra.mxu0 %v6812
    %7478 = vmatprep.subr.bf16.mxu0 %v6820
    %7479 = vmatpush1.bf16.msra.mxu0 %v6819
    %7480 = vmatprep.subr.bf16.mxu0 %v6827
    %7481 = vmatpush1.bf16.msra.mxu0 %v6826
    %7482 = vmatprep.subr.bf16.mxu0 %v6834
    %7483 = vmatpush1.bf16.msra.mxu0 %v6833
    %7484 = vmatprep.subr.bf16.mxu0 %v6841
    %7485 = vmatpush1.bf16.msra.mxu0 %v6840
    %7486 = vmatprep.subr.bf16.mxu0 %v6848
    %7487 = vmatpush1.bf16.msra.mxu0 %v6847
    %7488 = vmatprep.subr.bf16.mxu0 %v6855
    %7489 = vmatpush1.bf16.msra.mxu0 %v6854
    %7490 = vmatprep.subr.bf16.mxu0 %v6862
    %7491 = vmatpush1.bf16.msra.mxu0 %v6861
    %7492 = vmatprep.subr.bf16.mxu0 %v6869
    %7493 = vmatpush1.bf16.msra.mxu0 %v6868
    %7494 = vmatprep.subr.bf16.mxu0 %v6876
    %7495 = vmatpush1.bf16.msra.mxu0 %v6875
    %7496 = vmatprep.subr.bf16.mxu0 %v6883
    %7497 = vmatpush1.bf16.msra.mxu0 %v6882
    %7498 = vmatprep.mubr.bf16.mxu0 %v4483
    %7499 = vmatmul.mubr.bf16.gmra.mrb[0].mxu0 %v4482
    %v7500 = vpop.f32.mrb[0].mxu0
    %v7501 = vadd.f32 %v7458, %v7500
    %v7502 = vpop.f32.mrb[0].mxu0
    %v7503 = vadd.f32 %v7460, %v7502
    %v7504 = vpop.f32.mrb[0].mxu0
    %v7505 = vadd.f32 %v7462, %v7504
    %v7506 = vpop.f32.mrb[0].mxu0
    %v7507 = vadd.f32 %v7464, %v7506
    %7508 = vdwg.mxu0
    %7509 = vmatprep.subr.bf16.mxu0 %v6444
    %7510 = vmatpush1.bf16.msra.mxu0 %v6443
    %7511 = vmatprep.subr.bf16.mxu0 %v6451
    %7512 = vmatpush1.bf16.msra.mxu0 %v6450
    %7513 = vmatprep.subr.bf16.mxu0 %v6458
    %7514 = vmatpush1.bf16.msra.mxu0 %v6457
    %7515 = vmatprep.subr.bf16.mxu0 %v6465
    %7516 = vmatpush1.bf16.msra.mxu0 %v6464
    %7517 = vmatprep.subr.bf16.mxu0 %v6472
    %7518 = vmatpush1.bf16.msra.mxu0 %v6471
    %7519 = vmatprep.subr.bf16.mxu0 %v6479
    %7520 = vmatpush1.bf16.msra.mxu0 %v6478
    %7521 = vmatprep.subr.bf16.mxu0 %v6486
    %7522 = vmatpush1.bf16.msra.mxu0 %v6485
    %7523 = vmatprep.subr.bf16.mxu0 %v6493
    %7524 = vmatpush1.bf16.msra.mxu0 %v6492
    %7525 = vmatprep.subr.bf16.mxu0 %v6500
    %7526 = vmatpush1.bf16.msra.mxu0 %v6499
    %7527 = vmatprep.subr.bf16.mxu0 %v6507
    %7528 = vmatpush1.bf16.msra.mxu0 %v6506
    %7529 = vmatprep.subr.bf16.mxu0 %v6514
    %7530 = vmatpush1.bf16.msra.mxu0 %v6513
    %7531 = vmatprep.subr.bf16.mxu0 %v6521
    %7532 = vmatpush1.bf16.msra.mxu0 %v6520
    %7533 = vmatprep.subr.bf16.mxu0 %v6528
    %7534 = vmatpush1.bf16.msra.mxu0 %v6527
    %7535 = vmatprep.subr.bf16.mxu0 %v6535
    %7536 = vmatpush1.bf16.msra.mxu0 %v6534
    %7537 = vmatprep.subr.bf16.mxu0 %v6542
    %7538 = vmatpush1.bf16.msra.mxu0 %v6541
    %7539 = vmatprep.subr.bf16.mxu0 %v6549
    %7540 = vmatpush1.bf16.msra.mxu0 %v6548
    %7541 = vmatprep.mubr.bf16.mxu0 %v4477
    %7542 = vmatmul.mubr.bf16.gmra.mrb[0].mxu0 %v4476
    %v7543 = vpop.f32.mrb[0].mxu0
    %v7544 = vadd.f32 %v5009, %v7543
    %v7545 = vpop.f32.mrb[0].mxu0
    %v7546 = vadd.f32 %v5013, %v7545
    %v7547 = vpop.f32.mrb[0].mxu0
    %v7548 = vadd.f32 %v5009, %v7547
    %v7549 = vpop.f32.mrb[0].mxu0
    %v7550 = vadd.f32 %v5013, %v7549
    %7551 = vdwg.mxu0
    %7552 = vmatprep.subr.bf16.mxu0 %v6556
    %7553 = vmatpush1.bf16.msra.mxu0 %v6555
    %7554 = vmatprep.subr.bf16.mxu0 %v6563
    %7555 = vmatpush1.bf16.msra.mxu0 %v6562
    %7556 = vmatprep.subr.bf16.mxu0 %v6570
    %7557 = vmatpush1.bf16.msra.mxu0 %v6569
    %7558 = vmatprep.subr.bf16.mxu0 %v6577
    %7559 = vmatpush1.bf16.msra.mxu0 %v6576
    %7560 = vmatprep.subr.bf16.mxu0 %v6584
    %7561 = vmatpush1.bf16.msra.mxu0 %v6583
    %7562 = vmatprep.subr.bf16.mxu0 %v6591
    %7563 = vmatpush1.bf16.msra.mxu0 %v6590
    %7564 = vmatprep.subr.bf16.mxu0 %v6598
    %7565 = vmatpush1.bf16.msra.mxu0 %v6597
    %7566 = vmatprep.subr.bf16.mxu0 %v6605
    %7567 = vmatpush1.bf16.msra.mxu0 %v6604
    %7568 = vmatprep.subr.bf16.mxu0 %v6612
    %7569 = vmatpush1.bf16.msra.mxu0 %v6611
    %7570 = vmatprep.subr.bf16.mxu0 %v6619
    %7571 = vmatpush1.bf16.msra.mxu0 %v6618
    %7572 = vmatprep.subr.bf16.mxu0 %v6626
    %7573 = vmatpush1.bf16.msra.mxu0 %v6625
    %7574 = vmatprep.subr.bf16.mxu0 %v6633
    %7575 = vmatpush1.bf16.msra.mxu0 %v6632
    %7576 = vmatprep.subr.bf16.mxu0 %v6640
    %7577 = vmatpush1.bf16.msra.mxu0 %v6639
    %7578 = vmatprep.subr.bf16.mxu0 %v6647
    %7579 = vmatpush1.bf16.msra.mxu0 %v6646
    %7580 = vmatprep.subr.bf16.mxu0 %v6654
    %7581 = vmatpush1.bf16.msra.mxu0 %v6653
    %7582 = vmatprep.subr.bf16.mxu0 %v6661
    %7583 = vmatpush1.bf16.msra.mxu0 %v6660
    %7584 = vmatprep.mubr.bf16.mxu0 %v4479
    %7585 = vmatmul.mubr.bf16.gmra.mrb[0].mxu0 %v4478
    %v7586 = vpop.f32.mrb[0].mxu0
    %v7587 = vadd.f32 %v7544, %v7586
    %v7588 = vpop.f32.mrb[0].mxu0
    %v7589 = vadd.f32 %v7546, %v7588
    %v7590 = vpop.f32.mrb[0].mxu0
    %v7591 = vadd.f32 %v7548, %v7590
    %v7592 = vpop.f32.mrb[0].mxu0
    %v7593 = vadd.f32 %v7550, %v7592
    %7594 = vdwg.mxu0
    %7595 = vmatprep.subr.bf16.mxu0 %v6668
    %7596 = vmatpush1.bf16.msra.mxu0 %v6667
    %7597 = vmatprep.subr.bf16.mxu0 %v6675
    %7598 = vmatpush1.bf16.msra.mxu0 %v6674
    %7599 = vmatprep.subr.bf16.mxu0 %v6682
    %7600 = vmatpush1.bf16.msra.mxu0 %v6681
    %7601 = vmatprep.subr.bf16.mxu0 %v6689
    %7602 = vmatpush1.bf16.msra.mxu0 %v6688
    %7603 = vmatprep.subr.bf16.mxu0 %v6696
    %7604 = vmatpush1.bf16.msra.mxu0 %v6695
    %7605 = vmatprep.subr.bf16.mxu0 %v6703
    %7606 = vmatpush1.bf16.msra.mxu0 %v6702
    %7607 = vmatprep.subr.bf16.mxu0 %v6710
    %7608 = vmatpush1.bf16.msra.mxu0 %v6709
    %7609 = vmatprep.subr.bf16.mxu0 %v6717
    %7610 = vmatpush1.bf16.msra.mxu0 %v6716
    %7611 = vmatprep.subr.bf16.mxu0 %v6724
    %7612 = vmatpush1.bf16.msra.mxu0 %v6723
    %7613 = vmatprep.subr.bf16.mxu0 %v6731
    %7614 = vmatpush1.bf16.msra.mxu0 %v6730
    %7615 = vmatprep.subr.bf16.mxu0 %v6738
    %7616 = vmatpush1.bf16.msra.mxu0 %v6737
    %7617 = vmatprep.subr.bf16.mxu0 %v6745
    %7618 = vmatpush1.bf16.msra.mxu0 %v6744
    %7619 = vmatprep.subr.bf16.mxu0 %v6752
    %7620 = vmatpush1.bf16.msra.mxu0 %v6751
    %7621 = vmatprep.subr.bf16.mxu0 %v6759
    %7622 = vmatpush1.bf16.msra.mxu0 %v6758
    %7623 = vmatprep.subr.bf16.mxu0 %v6766
    %7624 = vmatpush1.bf16.msra.mxu0 %v6765
    %7625 = vmatprep.subr.bf16.mxu0 %v6773
    %7626 = vmatpush1.bf16.msra.mxu0 %v6772
    %7627 = vmatprep.mubr.bf16.mxu0 %v4481
    %7628 = vmatmul.mubr.bf16.gmra.mrb[0].mxu0 %v4480
    %v7629 = vpop.f32.mrb[0].mxu0
    %v7630 = vadd.f32 %v7587, %v7629
    %v7631 = vpop.f32.mrb[0].mxu0
    %v7632 = vadd.f32 %v7589, %v7631
    %v7633 = vpop.f32.mrb[0].mxu0
    %v7634 = vadd.f32 %v7591, %v7633
    %v7635 = vpop.f32.mrb[0].mxu0
    %v7636 = vadd.f32 %v7593, %v7635
    %7637 = vdwg.mxu0
    %7638 = vmatprep.subr.bf16.mxu0 %v6780
    %7639 = vmatpush1.bf16.msra.mxu0 %v6779
    %7640 = vmatprep.subr.bf16.mxu0 %v6787
    %7641 = vmatpush1.bf16.msra.mxu0 %v6786
    %7642 = vmatprep.subr.bf16.mxu0 %v6794
    %7643 = vmatpush1.bf16.msra.mxu0 %v6793
    %7644 = vmatprep.subr.bf16.mxu0 %v6801
    %7645 = vmatpush1.bf16.msra.mxu0 %v6800
    %7646 = vmatprep.subr.bf16.mxu0 %v6808
    %7647 = vmatpush1.bf16.msra.mxu0 %v6807
    %7648 = vmatprep.subr.bf16.mxu0 %v6815
    %7649 = vmatpush1.bf16.msra.mxu0 %v6814
    %7650 = vmatprep.subr.bf16.mxu0 %v6822
    %7651 = vmatpush1.bf16.msra.mxu0 %v6821
    %7652 = vmatprep.subr.bf16.mxu0 %v6829
    %7653 = vmatpush1.bf16.msra.mxu0 %v6828
    %7654 = vmatprep.subr.bf16.mxu0 %v6836
    %7655 = vmatpush1.bf16.msra.mxu0 %v6835
    %7656 = vmatprep.subr.bf16.mxu0 %v6843
    %7657 = vmatpush1.bf16.msra.mxu0 %v6842
    %7658 = vmatprep.subr.bf16.mxu0 %v6850
    %7659 = vmatpush1.bf16.msra.mxu0 %v6849
    %7660 = vmatprep.subr.bf16.mxu0 %v6857
    %7661 = vmatpush1.bf16.msra.mxu0 %v6856
    %7662 = vmatprep.subr.bf16.mxu0 %v6864
    %7663 = vmatpush1.bf16.msra.mxu0 %v6863
    %7664 = vmatprep.subr.bf16.mxu0 %v6871
    %7665 = vmatpush1.bf16.msra.mxu0 %v6870
    %7666 = vmatprep.subr.bf16.mxu0 %v6878
    %7667 = vmatpush1.bf16.msra.mxu0 %v6877
    %7668 = vmatprep.subr.bf16.mxu0 %v6885
    %7669 = vmatpush1.bf16.msra.mxu0 %v6884
    %7670 = vmatprep.mubr.bf16.mxu0 %v4483
    %7671 = vmatmul.mubr.bf16.gmra.mrb[0].mxu0 %v4482
    %v7672 = vpop.f32.mrb[0].mxu0
    %v7673 = vadd.f32 %v7630, %v7672
    %v7674 = vpop.f32.mrb[0].mxu0
    %v7675 = vadd.f32 %v7632, %v7674
    %v7676 = vpop.f32.mrb[0].mxu0
    %v7677 = vadd.f32 %v7634, %v7676
    %v7678 = vpop.f32.mrb[0].mxu0
    %v7679 = vadd.f32 %v7636, %v7678
    %7680 = vdwg.mxu0
    %7681 = vmatprep.subr.bf16.mxu0 %v6446
    %7682 = vmatpush1.bf16.msra.mxu0 %v6445
    %7683 = vmatprep.subr.bf16.mxu0 %v6453
    %7684 = vmatpush1.bf16.msra.mxu0 %v6452
    %7685 = vmatprep.subr.bf16.mxu0 %v6460
    %7686 = vmatpush1.bf16.msra.mxu0 %v6459
    %7687 = vmatprep.subr.bf16.mxu0 %v6467
    %7688 = vmatpush1.bf16.msra.mxu0 %v6466
    %7689 = vmatprep.subr.bf16.mxu0 %v6474
    %7690 = vmatpush1.bf16.msra.mxu0 %v6473
    %7691 = vmatprep.subr.bf16.mxu0 %v6481
    %7692 = vmatpush1.bf16.msra.mxu0 %v6480
    %7693 = vmatprep.subr.bf16.mxu0 %v6488
    %7694 = vmatpush1.bf16.msra.mxu0 %v6487
    %7695 = vmatprep.subr.bf16.mxu0 %v6495
    %7696 = vmatpush1.bf16.msra.mxu0 %v6494
    %7697 = vmatprep.subr.bf16.mxu0 %v6502
    %7698 = vmatpush1.bf16.msra.mxu0 %v6501
    %7699 = vmatprep.subr.bf16.mxu0 %v6509
    %7700 = vmatpush1.bf16.msra.mxu0 %v6508
    %7701 = vmatprep.subr.bf16.mxu0 %v6516
    %7702 = vmatpush1.bf16.msra.mxu0 %v6515
    %7703 = vmatprep.subr.bf16.mxu0 %v6523
    %7704 = vmatpush1.bf16.msra.mxu0 %v6522
    %7705 = vmatprep.subr.bf16.mxu0 %v6530
    %7706 = vmatpush1.bf16.msra.mxu0 %v6529
    %7707 = vmatprep.subr.bf16.mxu0 %v6537
    %7708 = vmatpush1.bf16.msra.mxu0 %v6536
    %7709 = vmatprep.subr.bf16.mxu0 %v6544
    %7710 = vmatpush1.bf16.msra.mxu0 %v6543
    %7711 = vmatprep.subr.bf16.mxu0 %v6551
    %7712 = vmatpush1.bf16.msra.mxu0 %v6550
    %7713 = vmatprep.mubr.bf16.mxu0 %v4477
    %7714 = vmatmul.mubr.bf16.gmra.mrb[0].mxu0 %v4476
    %v7715 = vpop.f32.mrb[0].mxu0
    %v7716 = vadd.f32 %v5017, %v7715
    %v7717 = vpop.f32.mrb[0].mxu0
    %v7718 = vadd.f32 %v5021, %v7717
    %v7719 = vpop.f32.mrb[0].mxu0
    %v7720 = vadd.f32 %v5017, %v7719
    %v7721 = vpop.f32.mrb[0].mxu0
    %v7722 = vadd.f32 %v5021, %v7721
    %7723 = vdwg.mxu0
    %7724 = vmatprep.subr.bf16.mxu0 %v6558
    %7725 = vmatpush1.bf16.msra.mxu0 %v6557
    %7726 = vmatprep.subr.bf16.mxu0 %v6565
    %7727 = vmatpush1.bf16.msra.mxu0 %v6564
    %7728 = vmatprep.subr.bf16.mxu0 %v6572
    %7729 = vmatpush1.bf16.msra.mxu0 %v6571
    %7730 = vmatprep.subr.bf16.mxu0 %v6579
    %7731 = vmatpush1.bf16.msra.mxu0 %v6578
    %7732 = vmatprep.subr.bf16.mxu0 %v6586
    %7733 = vmatpush1.bf16.msra.mxu0 %v6585
    %7734 = vmatprep.subr.bf16.mxu0 %v6593
    %7735 = vmatpush1.bf16.msra.mxu0 %v6592
    %7736 = vmatprep.subr.bf16.mxu0 %v6600
    %7737 = vmatpush1.bf16.msra.mxu0 %v6599
    %7738 = vmatprep.subr.bf16.mxu0 %v6607
    %7739 = vmatpush1.bf16.msra.mxu0 %v6606
    %7740 = vmatprep.subr.bf16.mxu0 %v6614
    %7741 = vmatpush1.bf16.msra.mxu0 %v6613
    %7742 = vmatprep.subr.bf16.mxu0 %v6621
    %7743 = vmatpush1.bf16.msra.mxu0 %v6620
    %7744 = vmatprep.subr.bf16.mxu0 %v6628
    %7745 = vmatpush1.bf16.msra.mxu0 %v6627
    %7746 = vmatprep.subr.bf16.mxu0 %v6635
    %7747 = vmatpush1.bf16.msra.mxu0 %v6634
    %7748 = vmatprep.subr.bf16.mxu0 %v6642
    %7749 = vmatpush1.bf16.msra.mxu0 %v6641
    %7750 = vmatprep.subr.bf16.mxu0 %v6649
    %7751 = vmatpush1.bf16.msra.mxu0 %v6648
    %7752 = vmatprep.subr.bf16.mxu0 %v6656
    %7753 = vmatpush1.bf16.msra.mxu0 %v6655
    %7754 = vmatprep.subr.bf16.mxu0 %v6663
    %7755 = vmatpush1.bf16.msra.mxu0 %v6662
    %7756 = vmatprep.mubr.bf16.mxu0 %v4479
    %7757 = vmatmul.mubr.bf16.gmra.mrb[0].mxu0 %v4478
    %v7758 = vpop.f32.mrb[0].mxu0
    %v7759 = vadd.f32 %v7716, %v7758
    %v7760 = vpop.f32.mrb[0].mxu0
    %v7761 = vadd.f32 %v7718, %v7760
    %v7762 = vpop.f32.mrb[0].mxu0
    %v7763 = vadd.f32 %v7720, %v7762
    %v7764 = vpop.f32.mrb[0].mxu0
    %v7765 = vadd.f32 %v7722, %v7764
    %7766 = vdwg.mxu0
    %7767 = vmatprep.subr.bf16.mxu0 %v6670
    %7768 = vmatpush1.bf16.msra.mxu0 %v6669
    %7769 = vmatprep.subr.bf16.mxu0 %v6677
    %7770 = vmatpush1.bf16.msra.mxu0 %v6676
    %7771 = vmatprep.subr.bf16.mxu0 %v6684
    %7772 = vmatpush1.bf16.msra.mxu0 %v6683
    %7773 = vmatprep.subr.bf16.mxu0 %v6691
    %7774 = vmatpush1.bf16.msra.mxu0 %v6690
    %7775 = vmatprep.subr.bf16.mxu0 %v6698
    %7776 = vmatpush1.bf16.msra.mxu0 %v6697
    %7777 = vmatprep.subr.bf16.mxu0 %v6705
    %7778 = vmatpush1.bf16.msra.mxu0 %v6704
    %7779 = vmatprep.subr.bf16.mxu0 %v6712
    %7780 = vmatpush1.bf16.msra.mxu0 %v6711
    %7781 = vmatprep.subr.bf16.mxu0 %v6719
    %7782 = vmatpush1.bf16.msra.mxu0 %v6718
    %7783 = vmatprep.subr.bf16.mxu0 %v6726
    %7784 = vmatpush1.bf16.msra.mxu0 %v6725
    %7785 = vmatprep.subr.bf16.mxu0 %v6733
    %7786 = vmatpush1.bf16.msra.mxu0 %v6732
    %7787 = vmatprep.subr.bf16.mxu0 %v6740
    %7788 = vmatpush1.bf16.msra.mxu0 %v6739
    %7789 = vmatprep.subr.bf16.mxu0 %v6747
    %7790 = vmatpush1.bf16.msra.mxu0 %v6746
    %7791 = vmatprep.subr.bf16.mxu0 %v6754
    %7792 = vmatpush1.bf16.msra.mxu0 %v6753
    %7793 = vmatprep.subr.bf16.mxu0 %v6761
    %7794 = vmatpush1.bf16.msra.mxu0 %v6760
    %7795 = vmatprep.subr.bf16.mxu0 %v6768
    %7796 = vmatpush1.bf16.msra.mxu0 %v6767
    %7797 = vmatprep.subr.bf16.mxu0 %v6775
    %7798 = vmatpush1.bf16.msra.mxu0 %v6774
    %7799 = vmatprep.mubr.bf16.mxu0 %v4481
    %7800 = vmatmul.mubr.bf16.gmra.mrb[0].mxu0 %v4480
    %v7801 = vpop.f32.mrb[0].mxu0
    %v7802 = vadd.f32 %v7759, %v7801
    %v7803 = vpop.f32.mrb[0].mxu0
    %v7804 = vadd.f32 %v7761, %v7803
    %v7805 = vpop.f32.mrb[0].mxu0
    %v7806 = vadd.f32 %v7763, %v7805
    %v7807 = vpop.f32.mrb[0].mxu0
    %v7808 = vadd.f32 %v7765, %v7807
    %7809 = vdwg.mxu0
    %7810 = vmatprep.subr.bf16.mxu0 %v6782
    %7811 = vmatpush1.bf16.msra.mxu0 %v6781
    %7812 = vmatprep.subr.bf16.mxu0 %v6789
    %7813 = vmatpush1.bf16.msra.mxu0 %v6788
    %7814 = vmatprep.subr.bf16.mxu0 %v6796
    %7815 = vmatpush1.bf16.msra.mxu0 %v6795
    %7816 = vmatprep.subr.bf16.mxu0 %v6803
    %7817 = vmatpush1.bf16.msra.mxu0 %v6802
    %7818 = vmatprep.subr.bf16.mxu0 %v6810
    %7819 = vmatpush1.bf16.msra.mxu0 %v6809
    %7820 = vmatprep.subr.bf16.mxu0 %v6817
    %7821 = vmatpush1.bf16.msra.mxu0 %v6816
    %7822 = vmatprep.subr.bf16.mxu0 %v6824
    %7823 = vmatpush1.bf16.msra.mxu0 %v6823
    %7824 = vmatprep.subr.bf16.mxu0 %v6831
    %7825 = vmatpush1.bf16.msra.mxu0 %v6830
    %7826 = vmatprep.subr.bf16.mxu0 %v6838
    %7827 = vmatpush1.bf16.msra.mxu0 %v6837
    %7828 = vmatprep.subr.bf16.mxu0 %v6845
    %7829 = vmatpush1.bf16.msra.mxu0 %v6844
    %7830 = vmatprep.subr.bf16.mxu0 %v6852
    %7831 = vmatpush1.bf16.msra.mxu0 %v6851
    %7832 = vmatprep.subr.bf16.mxu0 %v6859
    %7833 = vmatpush1.bf16.msra.mxu0 %v6858
    %7834 = vmatprep.subr.bf16.mxu0 %v6866
    %7835 = vmatpush1.bf16.msra.mxu0 %v6865
    %7836 = vmatprep.subr.bf16.mxu0 %v6873
    %7837 = vmatpush1.bf16.msra.mxu0 %v6872
    %7838 = vmatprep.subr.bf16.mxu0 %v6880
    %7839 = vmatpush1.bf16.msra.mxu0 %v6879
    %7840 = vmatprep.subr.bf16.mxu0 %v6887
    %7841 = vmatpush1.bf16.msra.mxu0 %v6886
    %7842 = vmatprep.mubr.bf16.mxu0 %v4483
    %7843 = vmatmul.mubr.bf16.gmra.mrb[0].mxu0 %v4482
    %v7844 = vpop.f32.mrb[0].mxu0
    %v7845 = vadd.f32 %v7802, %v7844
    %v7846 = vpop.f32.mrb[0].mxu0
    %v7847 = vadd.f32 %v7804, %v7846
    %v7848 = vpop.f32.mrb[0].mxu0
    %v7849 = vadd.f32 %v7806, %v7848
    %v7850 = vpop.f32.mrb[0].mxu0
    %v7851 = vadd.f32 %v7808, %v7850
    %7852 = vdwg.mxu0
    %7853 = vmatprep.subr.bf16.mxu0 0
    %7854 = vmatpush1.bf16.msra.mxu0 %v6447
    %7855 = vmatprep.subr.bf16.mxu0 0
    %7856 = vmatpush1.bf16.msra.mxu0 %v6454
    %7857 = vmatprep.subr.bf16.mxu0 0
    %7858 = vmatpush1.bf16.msra.mxu0 %v6461
    %7859 = vmatprep.subr.bf16.mxu0 0
    %7860 = vmatpush1.bf16.msra.mxu0 %v6468
    %7861 = vmatprep.subr.bf16.mxu0 0
    %7862 = vmatpush1.bf16.msra.mxu0 %v6475
    %7863 = vmatprep.subr.bf16.mxu0 0
    %7864 = vmatpush1.bf16.msra.mxu0 %v6482
    %7865 = vmatprep.subr.bf16.mxu0 0
    %7866 = vmatpush1.bf16.msra.mxu0 %v6489
    %7867 = vmatprep.subr.bf16.mxu0 0
    %7868 = vmatpush1.bf16.msra.mxu0 %v6496
    %7869 = vmatprep.subr.bf16.mxu0 0
    %7870 = vmatpush1.bf16.msra.mxu0 %v6503
    %7871 = vmatprep.subr.bf16.mxu0 0
    %7872 = vmatpush1.bf16.msra.mxu0 %v6510
    %7873 = vmatprep.subr.bf16.mxu0 0
    %7874 = vmatpush1.bf16.msra.mxu0 %v6517
    %7875 = vmatprep.subr.bf16.mxu0 0
    %7876 = vmatpush1.bf16.msra.mxu0 %v6524
    %7877 = vmatprep.subr.bf16.mxu0 0
    %7878 = vmatpush1.bf16.msra.mxu0 %v6531
    %7879 = vmatprep.subr.bf16.mxu0 0
    %7880 = vmatpush1.bf16.msra.mxu0 %v6538
    %7881 = vmatprep.subr.bf16.mxu0 0
    %7882 = vmatpush1.bf16.msra.mxu0 %v6545
    %7883 = vmatprep.subr.bf16.mxu0 0
    %7884 = vmatpush1.bf16.msra.mxu0 %v6552
    %7885 = vmatprep.mubr.bf16.mxu0 %v4477
    %7886 = vmatmul.mubr.bf16.gmra.mrb[0].mxu0 %v4476
    %v7887 = vpop.f32.mrb[0].mxu0
    %v7888 = vadd.f32 %v5025, %v7887
    %v7889 = vpop.f32.mrb[0].mxu0
    %v7890 = vpop.f32.mrb[0].mxu0
    %v7891 = vadd.f32 %v5025, %v7890
    %v7892 = vpop.f32.mrb[0].mxu0
    %7893 = vdwg.mxu0
    %7894 = vmatprep.subr.bf16.mxu0 0
    %7895 = vmatpush1.bf16.msra.mxu0 %v6559
    %7896 = vmatprep.subr.bf16.mxu0 0
    %7897 = vmatpush1.bf16.msra.mxu0 %v6566
    %7898 = vmatprep.subr.bf16.mxu0 0
    %7899 = vmatpush1.bf16.msra.mxu0 %v6573
    %7900 = vmatprep.subr.bf16.mxu0 0
    %7901 = vmatpush1.bf16.msra.mxu0 %v6580
    %7902 = vmatprep.subr.bf16.mxu0 0
    %7903 = vmatpush1.bf16.msra.mxu0 %v6587
    %7904 = vmatprep.subr.bf16.mxu0 0
    %7905 = vmatpush1.bf16.msra.mxu0 %v6594
    %7906 = vmatprep.subr.bf16.mxu0 0
    %7907 = vmatpush1.bf16.msra.mxu0 %v6601
    %7908 = vmatprep.subr.bf16.mxu0 0
    %7909 = vmatpush1.bf16.msra.mxu0 %v6608
    %7910 = vmatprep.subr.bf16.mxu0 0
    %7911 = vmatpush1.bf16.msra.mxu0 %v6615
    %7912 = vmatprep.subr.bf16.mxu0 0
    %7913 = vmatpush1.bf16.msra.mxu0 %v6622
    %7914 = vmatprep.subr.bf16.mxu0 0
    %7915 = vmatpush1.bf16.msra.mxu0 %v6629
    %7916 = vmatprep.subr.bf16.mxu0 0
    %7917 = vmatpush1.bf16.msra.mxu0 %v6636
    %7918 = vmatprep.subr.bf16.mxu0 0
    %7919 = vmatpush1.bf16.msra.mxu0 %v6643
    %7920 = vmatprep.subr.bf16.mxu0 0
    %7921 = vmatpush1.bf16.msra.mxu0 %v6650
    %7922 = vmatprep.subr.bf16.mxu0 0
    %7923 = vmatpush1.bf16.msra.mxu0 %v6657
    %7924 = vmatprep.subr.bf16.mxu0 0
    %7925 = vmatpush1.bf16.msra.mxu0 %v6664
    %7926 = vmatprep.mubr.bf16.mxu0 %v4479
    %7927 = vmatmul.mubr.bf16.gmra.mrb[0].mxu0 %v4478
    %v7928 = vpop.f32.mrb[0].mxu0
    %v7929 = vadd.f32 %v7888, %v7928
    %v7930 = vpop.f32.mrb[0].mxu0
    %v7931 = vpop.f32.mrb[0].mxu0
    %v7932 = vadd.f32 %v7891, %v7931
    %v7933 = vpop.f32.mrb[0].mxu0
    %7934 = vdwg.mxu0
    %7935 = vmatprep.subr.bf16.mxu0 0
    %7936 = vmatpush1.bf16.msra.mxu0 %v6671
    %7937 = vmatprep.subr.bf16.mxu0 0
    %7938 = vmatpush1.bf16.msra.mxu0 %v6678
    %7939 = vmatprep.subr.bf16.mxu0 0
    %7940 = vmatpush1.bf16.msra.mxu0 %v6685
    %7941 = vmatprep.subr.bf16.mxu0 0
    %7942 = vmatpush1.bf16.msra.mxu0 %v6692
    %7943 = vmatprep.subr.bf16.mxu0 0
    %7944 = vmatpush1.bf16.msra.mxu0 %v6699
    %7945 = vmatprep.subr.bf16.mxu0 0
    %7946 = vmatpush1.bf16.msra.mxu0 %v6706
    %7947 = vmatprep.subr.bf16.mxu0 0
    %7948 = vmatpush1.bf16.msra.mxu0 %v6713
    %7949 = vmatprep.subr.bf16.mxu0 0
    %7950 = vmatpush1.bf16.msra.mxu0 %v6720
    %7951 = vmatprep.subr.bf16.mxu0 0
    %7952 = vmatpush1.bf16.msra.mxu0 %v6727
    %7953 = vmatprep.subr.bf16.mxu0 0
    %7954 = vmatpush1.bf16.msra.mxu0 %v6734
    %7955 = vmatprep.subr.bf16.mxu0 0
    %7956 = vmatpush1.bf16.msra.mxu0 %v6741
    %7957 = vmatprep.subr.bf16.mxu0 0
    %7958 = vmatpush1.bf16.msra.mxu0 %v6748
    %7959 = vmatprep.subr.bf16.mxu0 0
    %7960 = vmatpush1.bf16.msra.mxu0 %v6755
    %7961 = vmatprep.subr.bf16.mxu0 0
    %7962 = vmatpush1.bf16.msra.mxu0 %v6762
    %7963 = vmatprep.subr.bf16.mxu0 0
    %7964 = vmatpush1.bf16.msra.mxu0 %v6769
    %7965 = vmatprep.subr.bf16.mxu0 0
    %7966 = vmatpush1.bf16.msra.mxu0 %v6776
    %7967 = vmatprep.mubr.bf16.mxu0 %v4481
    %7968 = vmatmul.mubr.bf16.gmra.mrb[0].mxu0 %v4480
    %v7969 = vpop.f32.mrb[0].mxu0
    %v7970 = vadd.f32 %v7929, %v7969
    %v7971 = vpop.f32.mrb[0].mxu0
    %v7972 = vpop.f32.mrb[0].mxu0
    %v7973 = vadd.f32 %v7932, %v7972
    %v7974 = vpop.f32.mrb[0].mxu0
    %7975 = vdwg.mxu0
    %7976 = vmatprep.subr.bf16.mxu0 0
    %7977 = vmatpush1.bf16.msra.mxu0 %v6783
    %7978 = vmatprep.subr.bf16.mxu0 0
    %7979 = vmatpush1.bf16.msra.mxu0 %v6790
    %7980 = vmatprep.subr.bf16.mxu0 0
    %7981 = vmatpush1.bf16.msra.mxu0 %v6797
    %7982 = vmatprep.subr.bf16.mxu0 0
    %7983 = vmatpush1.bf16.msra.mxu0 %v6804
    %7984 = vmatprep.subr.bf16.mxu0 0
    %7985 = vmatpush1.bf16.msra.mxu0 %v6811
    %7986 = vmatprep.subr.bf16.mxu0 0
    %7987 = vmatpush1.bf16.msra.mxu0 %v6818
    %7988 = vmatprep.subr.bf16.mxu0 0
    %7989 = vmatpush1.bf16.msra.mxu0 %v6825
    %7990 = vmatprep.subr.bf16.mxu0 0
    %7991 = vmatpush1.bf16.msra.mxu0 %v6832
    %7992 = vmatprep.subr.bf16.mxu0 0
    %7993 = vmatpush1.bf16.msra.mxu0 %v6839
    %7994 = vmatprep.subr.bf16.mxu0 0
    %7995 = vmatpush1.bf16.msra.mxu0 %v6846
    %7996 = vmatprep.subr.bf16.mxu0 0
    %7997 = vmatpush1.bf16.msra.mxu0 %v6853
    %7998 = vmatprep.subr.bf16.mxu0 0
    %7999 = vmatpush1.bf16.msra.mxu0 %v6860
    %8000 = vmatprep.subr.bf16.mxu0 0
    %8001 = vmatpush1.bf16.msra.mxu0 %v6867
    %8002 = vmatprep.subr.bf16.mxu0 0
    %8003 = vmatpush1.bf16.msra.mxu0 %v6874
    %8004 = vmatprep.subr.bf16.mxu0 0
    %8005 = vmatpush1.bf16.msra.mxu0 %v6881
    %8006 = vmatprep.subr.bf16.mxu0 0
    %8007 = vmatpush1.bf16.msra.mxu0 %v6888
    %8008 = vmatprep.mubr.bf16.mxu0 %v4483
    %8009 = vmatmul.mubr.bf16.gmra.mrb[0].mxu0 %v4482
    %v8010 = vpop.f32.mrb[0].mxu0
    %v8011 = vadd.f32 %v7970, %v8010
    %v8012 = vpop.f32.mrb[0].mxu0
    %v8013 = vpop.f32.mrb[0].mxu0
    %v8014 = vadd.f32 %v7973, %v8013
    %v8015 = vpop.f32.mrb[0].mxu0
    %8016 = vdwg.mxu0
    %v8017 = vtanh.pop %v7501
    %v8018 = vtanh.pop %v7503
    %v8019 = vtanh.pop %v7673
    %v8020 = vtanh.pop %v7675
    %v8021 = vtanh.pop %v7845
    %v8022 = vtanh.pop %v7847
    %v8023 = vtanh.pop %v8011
    %v8024 = vtanh.pop %v7505
    %v8025 = vtanh.pop %v7507
    %v8026 = vtanh.pop %v7677
    %v8027 = vtanh.pop %v7679
    %v8028 = vtanh.pop %v7849
    %v8029 = vtanh.pop %v7851
    %v8030 = vtanh.pop %v8014
    %8031 = vst [vmem:[#allocation2] sm:$0xff] %v8017
    %8032 = vst [vmem:[#allocation2 + $0x8] sm:$0xff] %v8018
    %8033 = vst [vmem:[#allocation2 + $0x10] sm:$0xff] %v8019
    %8034 = vst [vmem:[#allocation2 + $0x18] sm:$0xff] %v8020
    %8035 = vst [vmem:[#allocation2 + $0x20] sm:$0xff] %v8021
    %8036 = vst [vmem:[#allocation2 + $0x28] sm:$0xff] %v8022
    %vm8037 = vcmask 130048
    %8038 = vst.msk [vmem:[#allocation2 + $0x30] sm:$0xff] %vm8037, %v8023
    %8039 = vst [vmem:[#allocation2 + $0x38] sm:$0xff] %v8024
    %8040 = vst [vmem:[#allocation2 + $0x40] sm:$0xff] %v8025
    %8041 = vst [vmem:[#allocation2 + $0x48] sm:$0xff] %v8026
    %8042 = vst [vmem:[#allocation2 + $0x50] sm:$0xff] %v8027
    %8043 = vst [vmem:[#allocation2 + $0x58] sm:$0xff] %v8028
    %8044 = vst [vmem:[#allocation2 + $0x60] sm:$0xff] %v8029
    %8045 = vst.msk [vmem:[#allocation2 + $0x68] sm:$0xff] %vm8037, %v8030
    // Predicated region
    $region30: #{tpu_custom_call.1} parent=1 // pred_check
      _
    $region31: #{tpu_custom_call.1} parent=1 // pred_check_branch
      %8047 = sbr.rel (0) target = $region33
    $region32: #{tpu_custom_call.1} parent=1 // pred_region
      %s8049 = ssub.s32 1792, 1792
      %8050 = vsyncadd [#allocation3], %s8049
      %s8051 = sshll.u32 [#allocation2], 4
      %s8052 = int_to_ptr.vmem [resolvable:$true] %s8051
      %8057 = dma.vmem_to_hbm [thread:$0]  %s8052, 1792, %s7, [#allocation3], 896, 896, 56
    $region33: #{tpu_custom_call.1} parent=1 // pred_fallthru
      _
    // Predicated region
    $region34: #{tpu_custom_call.1} parent=1 // pred_check
      _
    $region35: #{tpu_custom_call.1} parent=1 // pred_check_branch
      %8059 = sbr.rel (0) target = $region37
    $region36: #{tpu_custom_call.1} parent=1 // pred_region
      %8060 = dma.done [#allocation3], 1792
    $region37: #{tpu_custom_call.1} parent=1 // pred_fallthru
      _
    %8061 = vsyncpa [#allocation3], 1

</llo_original>
